<compile_context>
chip_gen: v6e
topology: v6e:2x2x1
jax: 0.10.0
libtpu: 0.0.40
codegen_flags: <defaults>
</compile_context>

<pallas_src>
import functools

import jax
import jax.numpy as jnp
from jax import lax
from jax.experimental import pallas as pl
from jax.experimental.pallas import tpu as pltpu


_CHANNELS = (3, 16, 32, 64)
_TAPS = tuple((di, dj) for di in range(3) for dj in range(3))


# ----------------------------------------------------------------------------
# Static geometry helpers (all plain Python ints, resolved at trace time).
# ----------------------------------------------------------------------------
def _chunks(total, step):
    """Static (start, length) chunks covering [0, total)."""
    return tuple((s, min(step, total - s)) for s in range(0, total, step))


def _hmax_chunks(flat_len, row_stride, target_rows=128):
    """Whole-conv-row chunks of the flat conv plane for the in-place h-max."""
    rows_per = max(1, target_rows // row_stride)
    step = rows_per * row_stride
    chunks = []
    s = 0
    while s < flat_len:
        ln = min(step, flat_len - s)
        if ln < 2 and chunks:                      # merge a 1-row tail
            ps, pln = chunks.pop()
            chunks.append((ps, pln + ln))
        else:
            chunks.append((s, ln))
        s += ln
    return tuple(chunks)


def _derive_geometry(h, w):
    """Static sizes for the fused (conv3x3 valid -> maxpool2 floor) x 3 pipe."""
    cin1, ch1, ch2, _ = _CHANNELS

    # Stage 1: conv plane comes from a true im2col (flat row stride == Wo1).
    ho1, wo1 = h - 2, w - 2
    hp1, wp1 = ho1 // 2, wo1 // 2
    g1 = dict(wo=wo1, hp=hp1, wp=wp1, l=ho1 * wo1, cin=cin1,
              m_chunks=_chunks(ho1 * wo1, 128),
              hmax_chunks=_hmax_chunks(ho1 * wo1, wo1))

    # Stage 2: conv plane is flat with the pooled width wp1 as row stride;
    # columns j >= Wo2 of non-final rows are garbage and never consumed.
    ho2, wo2 = hp1 - 2, wp1 - 2
    hp2, wp2 = ho2 // 2, wo2 // 2
    l2 = (ho2 - 1) * wp1 + wo2
    g2 = dict(w=wp1, hp=hp2, wp=wp2, l=l2, cin=ch1,
              hmax_chunks=_hmax_chunks(l2, wp1))

    # Stage 3.
    ho3, wo3 = hp2 - 2, wp2 - 2
    hp3, wp3 = ho3 // 2, wo3 // 2
    l3 = (ho3 - 1) * wp2 + wo3
    g3 = dict(w=wp2, hp=hp3, wp=wp3, l=l3, cin=ch2,
              hmax_chunks=_hmax_chunks(l3, wp2))
    return g1, g2, g3


def _pick_block_batch(n):
    """Images per grid step; keep the grid length >= 2 (v7x has 2 TCs)."""
    for b in (8, 4, 2):
        if n % b == 0 and n // b >= 2:
            return b
    return 1


# ----------------------------------------------------------------------------
# Kernel
# ----------------------------------------------------------------------------
def _rover_kernel(bsz, g1, g2, g3,
                  x_ref, w1_ref, b1_ref, w2_ref, b2_ref, w3_ref, b3_ref,
                  o_ref, a1_ref, p1_ref, s2_ref, a2_ref, p2_ref, s3_ref,
                  a3_ref):
    """Fused conv1->pool->conv2->pool->conv3->pool for `bsz` images."""

    def maxpool2(conv_ref, rs, hp, wp, chunks, write_row):
        # (a) horizontal max in place: hmax[r] = max(conv[r], conv[r+1]).
        #     Two overlapping CONTIGUOUS reads per chunk (sublane shift), no
        #     strided loads.  The last row of each chunk (column rs-1, which
        #     the pool never samples) keeps its original value.
        for s, ln in chunks:
            lo = conv_ref[pl.ds(s, ln - 1), :]
            hi = conv_ref[pl.ds(s + 1, ln - 1), :]
            conv_ref[pl.ds(s, ln - 1), :] = jnp.maximum(lo, hi)
        # (b) per pooled row: vertical max of two stride-2 subsampled reads
        #     (down from four strided reads per pooled row).
        for po in range(hp):
            r0 = 2 * po * rs
            write_row(po, jnp.maximum(
                conv_ref[pl.ds(r0, wp, stride=2), :],
                conv_ref[pl.ds(r0 + rs, wp, stride=2), :]))

    def im2col_matmul(src_ref, slab_ref, w_ref, b_ref, dst_ref, width, l, cin):
        # 9 contiguous (l, cin) copies -> (l, 9*cin) slab -> one MXU matmul.
        for t, (di, dj) in enumerate(_TAPS):
            slab_ref[:, t * cin:(t + 1) * cin] = (
                src_ref[pl.ds(di * width + dj, l), :])
        dst_ref[...] = (
            jnp.dot(slab_ref[...], w_ref[...],
                    preferred_element_type=jnp.float32) + b_ref[...])

    for b in range(bsz):
        # ---- stage 1: patches were im2col'ed in the wrapper; single K=27
        #      matmul, M-chunked so partials stay register resident. ----
        for m0, ml in g1["m_chunks"]:
            a1_ref[pl.ds(m0, ml), :] = (
                jnp.dot(x_ref[b, pl.ds(m0, ml), :], w1_ref[...],
                        preferred_element_type=jnp.float32) + b1_ref[...])

        def write_p1(po, m):
            p1_ref[pl.ds(po * g1["wp"], g1["wp"]), :] = m
        maxpool2(a1_ref, g1["wo"], g1["hp"], g1["wp"], g1["hmax_chunks"],
                 write_p1)

        # ---- stage 2: in-kernel im2col, one K=144 matmul ----
        im2col_matmul(p1_ref, s2_ref, w2_ref, b2_ref, a2_ref,
                      g2["w"], g2["l"], g2["cin"])

        def write_p2(po, m):
            p2_ref[pl.ds(po * g2["wp"], g2["wp"]), :] = m
        maxpool2(a2_ref, g2["w"], g2["hp"], g2["wp"], g2["hmax_chunks"],
                 write_p2)

        # ---- stage 3: in-kernel im2col, one K=288 matmul ----
        im2col_matmul(p2_ref, s3_ref, w3_ref, b3_ref, a3_ref,
                      g3["w"], g3["l"], g3["cin"])

        def write_out(po, m):
            o_ref[b, pl.ds(po * g3["wp"], g3["wp"]), :] = m.astype(o_ref.dtype)
        maxpool2(a3_ref, g3["w"], g3["hp"], g3["wp"], g3["hmax_chunks"],
                 write_out)


# ----------------------------------------------------------------------------
# Parameters (deterministic synthetic init, PyTorch-like uniform(-1/sqrt(fan))).
# Weight layout: (kh, kw, Cin, Cout).
# ----------------------------------------------------------------------------
def init_params(key):
    def conv_init(k, cin, cout):
        k1, k2 = jax.random.split(k)
        bound = 1.0 / (cin * 9) ** 0.5
        w = jax.random.uniform(k1, (3, 3, cin, cout), jnp.float32, -bound, bound)
        b = jax.random.uniform(k2, (cout,), jnp.float32, -bound, bound)
        return w, b

    k1, k2, k3 = jax.random.split(key, 3)
    return {
        "conv1": conv_init(k1, 3, 16),
        "conv2": conv_init(k2, 16, 32),
        "conv3": conv_init(k3, 32, 64),
    }


# ----------------------------------------------------------------------------
# Wrapper
# ----------------------------------------------------------------------------
@jax.jit
def rover_cnn_forward(x_nchw, params):
    n, cin, h, w = x_nchw.shape
    cin1, ch1, ch2, ch3 = _CHANNELS
    assert cin == cin1, (cin, cin1)
    g1, g2, g3 = _derive_geometry(h, w)
    out_rows = g3["hp"] * g3["wp"]
    bsz = _pick_block_batch(n)

    (w1, b1) = params["conv1"]
    (w2, b2) = params["conv2"]
    (w3, b3) = params["conv3"]

    # Stage-1 im2col in the wrapper (tiny input): (N, Ho1*Wo1, 9*Cin).
    x_nhwc = jnp.transpose(x_nchw, (0, 2, 3, 1))
    ho1, wo1 = h - 2, w - 2
    patches = jnp.concatenate(
        [x_nhwc[:, di:di + ho1, dj:dj + wo1, :] for (di, dj) in _TAPS],
        axis=-1).reshape(n, ho1 * wo1, 9 * cin1)

    # Weights reshaped to (9*Cin, Cout) so every stage is a single matmul.
    w1r = w1.reshape(9 * cin1, ch1)
    w2r = w2.reshape(9 * ch1, ch2)
    w3r = w3.reshape(9 * ch2, ch3)

    out_flat = pl.pallas_call(
        functools.partial(_rover_kernel, bsz, g1, g2, g3),
        out_shape=jax.ShapeDtypeStruct((n, out_rows, ch3), x_nchw.dtype),
        grid=(n // bsz,),
        in_specs=[
            pl.BlockSpec((bsz, g1["l"], 9 * cin1), lambda i: (i, 0, 0)),
            pl.BlockSpec((9 * cin1, ch1), lambda i: (0, 0)),
            pl.BlockSpec((1, ch1), lambda i: (0, 0)),
            pl.BlockSpec((9 * ch1, ch2), lambda i: (0, 0)),
            pl.BlockSpec((1, ch2), lambda i: (0, 0)),
            pl.BlockSpec((9 * ch2, ch3), lambda i: (0, 0)),
            pl.BlockSpec((1, ch3), lambda i: (0, 0)),
        ],
        out_specs=pl.BlockSpec((bsz, out_rows, ch3), lambda i: (i, 0, 0)),
        scratch_shapes=[
            pltpu.VMEM((g1["l"], ch1), jnp.float32),              # conv1 plane
            pltpu.VMEM((g1["hp"] * g1["wp"], ch1), jnp.float32),  # pool1 plane
            pltpu.VMEM((g2["l"], 9 * ch1), jnp.float32),          # im2col slab 2
            pltpu.VMEM((g2["l"], ch2), jnp.float32),              # conv2 plane
            pltpu.VMEM((g2["hp"] * g2["wp"], ch2), jnp.float32),  # pool2 plane
            pltpu.VMEM((g3["l"], 9 * ch2), jnp.float32),          # im2col slab 3
            pltpu.VMEM((g3["l"], ch3), jnp.float32),              # conv3 plane
        ],
        compiler_params=pltpu.CompilerParams(
            dimension_semantics=("parallel",)),
    )(patches, w1r, b1.reshape(1, ch1), w2r, b2.reshape(1, ch2),
      w3r, b3.reshape(1, ch3))

    # flat (N, Hp3*Wp3, 64) -> NCHW (N, 64, Hp3, Wp3)
    return jnp.transpose(
        out_flat.reshape(n, g3["hp"], g3["wp"], ch3), (0, 3, 1, 2))


# ----------------------------------------------------------------------------
# Pure-JAX reference for verification.
# ----------------------------------------------------------------------------
def reference_forward(x_nchw, params):
    x = x_nchw
    for name in ("conv1", "conv2", "conv3"):
        w, b = params[name]
        w_oihw = jnp.transpose(w, (3, 2, 0, 1))
        x = lax.conv_general_dilated(
            x, w_oihw, (1, 1), "VALID",
            dimension_numbers=("NCHW", "OIHW", "NCHW"),
            precision=lax.Precision.HIGHEST)
        x = x + b.reshape(1, -1, 1, 1)
        x = lax.reduce_window(
            x, jnp.array(-jnp.inf, x.dtype), lax.max,
            (1, 1, 2, 2), (1, 1, 2, 2), "VALID",
        )
    return x


if __name__ == "__main__":
    key = jax.random.PRNGKey(0)
    kx, kp = jax.random.split(key)
    # NCHW input like PyTorch: batch=2, channels=3, spatial=32
    x = jax.random.normal(kx, (2, 3, 32, 32), jnp.float32)
    params = init_params(kp)

    out = jax.block_until_ready(rover_cnn_forward(x, params))
    assert out.shape == (2, 64, 2, 2), out.shape

    ref = reference_forward(x, params)
    max_err = float(jnp.max(jnp.abs(out - ref)))
    assert max_err < 1e-3, f"max abs err too large: {max_err}"
    print("KERNEL_OK")
</pallas_src>

<mosaic_0001>
module attributes {stable_mosaic.version = 11 : i64} {
  func.func @_rover_kernel(%arg0: i32, %arg1: memref<1x900x27xf32, #tpu.memory_space<vmem>>, %arg2: memref<27x16xf32, #tpu.memory_space<vmem>>, %arg3: memref<1x16xf32, #tpu.memory_space<vmem>>, %arg4: memref<144x32xf32, #tpu.memory_space<vmem>>, %arg5: memref<1x32xf32, #tpu.memory_space<vmem>>, %arg6: memref<288x64xf32, #tpu.memory_space<vmem>>, %arg7: memref<1x64xf32, #tpu.memory_space<vmem>>, %arg8: memref<1x4x64xf32, #tpu.memory_space<vmem>>, %arg9: memref<900x16xf32, #tpu.memory_space<vmem>>, %arg10: memref<225x16xf32, #tpu.memory_space<vmem>>, %arg11: memref<193x144xf32, #tpu.memory_space<vmem>>, %arg12: memref<193x32xf32, #tpu.memory_space<vmem>>, %arg13: memref<36x32xf32, #tpu.memory_space<vmem>>, %arg14: memref<22x288xf32, #tpu.memory_space<vmem>>, %arg15: memref<22x64xf32, #tpu.memory_space<vmem>>) attributes {dimension_semantics = [#tpu.dimension_semantics<parallel>], iteration_bounds = array<i64: 2>, scalar_prefetch = 0 : i64, scratch_operands = 7 : i64, tpu.core_type = #tpu.core_type<tc>, window_params = [{transform_indices = @transform_0, window_bounds = array<i64: 1, 900, 27>}, {pipeline_mode = #tpu.pipeline_mode<synchronous>, transform_indices = @transform_1, window_bounds = array<i64: 27, 16>}, {pipeline_mode = #tpu.pipeline_mode<synchronous>, transform_indices = @transform_2, window_bounds = array<i64: 1, 16>}, {pipeline_mode = #tpu.pipeline_mode<synchronous>, transform_indices = @transform_3, window_bounds = array<i64: 144, 32>}, {pipeline_mode = #tpu.pipeline_mode<synchronous>, transform_indices = @transform_4, window_bounds = array<i64: 1, 32>}, {pipeline_mode = #tpu.pipeline_mode<synchronous>, transform_indices = @transform_5, window_bounds = array<i64: 288, 64>}, {pipeline_mode = #tpu.pipeline_mode<synchronous>, transform_indices = @transform_6, window_bounds = array<i64: 1, 64>}, {transform_indices = @transform_7, window_bounds = array<i64: 1, 4, 64>}]} {
    %c0 = arith.constant 0 : index
    %c0_0 = arith.constant 0 : index
    %c0_1 = arith.constant 0 : index
    %0 = vector.load %arg1[%c0, %c0_0, %c0_1] : memref<1x900x27xf32, #tpu.memory_space<vmem>>, vector<1x128x27xf32>
    %1 = vector.shape_cast %0 : vector<1x128x27xf32> to vector<128x27xf32>
    %c0_2 = arith.constant 0 : index
    %c0_3 = arith.constant 0 : index
    %2 = vector.load %arg2[%c0_2, %c0_3] : memref<27x16xf32, #tpu.memory_space<vmem>>, vector<27x16xf32>
    %cst = arith.constant dense<0.000000e+00> : vector<128x16xf32>
    %3 = tpu.matmul %1, %2, %cst {dimension_numbers = #tpu.dot_dimension_numbers<[1], [0], [0], [1], [0, 0, 1, 1], [], []>} : vector<128x27xf32>, vector<27x16xf32>, vector<128x16xf32> -> vector<128x16xf32>
    %c0_4 = arith.constant 0 : index
    %c0_5 = arith.constant 0 : index
    %4 = vector.load %arg3[%c0_4, %c0_5] : memref<1x16xf32, #tpu.memory_space<vmem>>, vector<1x16xf32>
    %5 = vector.broadcast %4 : vector<1x16xf32> to vector<128x16xf32>
    %6 = arith.addf %3, %5 : vector<128x16xf32>
    %c0_6 = arith.constant 0 : index
    %c0_7 = arith.constant 0 : index
    %7 = vector.load %arg9[%c0_6, %c0_7] : memref<900x16xf32, #tpu.memory_space<vmem>>, vector<128x16xf32>
    tpu.vector_store %arg9[%c0_6, %c0_7], %6 {strides = array<i32>} : memref<900x16xf32, #tpu.memory_space<vmem>>, vector<128x16xf32>,
    %c0_8 = arith.constant 0 : index
    %c128 = arith.constant 128 : index
    %c0_9 = arith.constant 0 : index
    %8 = vector.load %arg1[%c0_8, %c128, %c0_9] : memref<1x900x27xf32, #tpu.memory_space<vmem>>, vector<1x128x27xf32>
    %9 = vector.shape_cast %8 : vector<1x128x27xf32> to vector<128x27xf32>
    %c0_10 = arith.constant 0 : index
    %c0_11 = arith.constant 0 : index
    %10 = vector.load %arg2[%c0_10, %c0_11] : memref<27x16xf32, #tpu.memory_space<vmem>>, vector<27x16xf32>
    %cst_12 = arith.constant dense<0.000000e+00> : vector<128x16xf32>
    %11 = tpu.matmul %9, %10, %cst_12 {dimension_numbers = #tpu.dot_dimension_numbers<[1], [0], [0], [1], [0, 0, 1, 1], [], []>} : vector<128x27xf32>, vector<27x16xf32>, vector<128x16xf32> -> vector<128x16xf32>
    %c0_13 = arith.constant 0 : index
    %c0_14 = arith.constant 0 : index
    %12 = vector.load %arg3[%c0_13, %c0_14] : memref<1x16xf32, #tpu.memory_space<vmem>>, vector<1x16xf32>
    %13 = vector.broadcast %12 : vector<1x16xf32> to vector<128x16xf32>
    %14 = arith.addf %11, %13 : vector<128x16xf32>
    %c128_15 = arith.constant 128 : index
    %c0_16 = arith.constant 0 : index
    %15 = vector.load %arg9[%c128_15, %c0_16] : memref<900x16xf32, #tpu.memory_space<vmem>>, vector<128x16xf32>
    tpu.vector_store %arg9[%c128_15, %c0_16], %14 {strides = array<i32>} : memref<900x16xf32, #tpu.memory_space<vmem>>, vector<128x16xf32>,
    %c0_17 = arith.constant 0 : index
    %c256 = arith.constant 256 : index
    %c0_18 = arith.constant 0 : index
    %16 = vector.load %arg1[%c0_17, %c256, %c0_18] : memref<1x900x27xf32, #tpu.memory_space<vmem>>, vector<1x128x27xf32>
    %17 = vector.shape_cast %16 : vector<1x128x27xf32> to vector<128x27xf32>
    %c0_19 = arith.constant 0 : index
    %c0_20 = arith.constant 0 : index
    %18 = vector.load %arg2[%c0_19, %c0_20] : memref<27x16xf32, #tpu.memory_space<vmem>>, vector<27x16xf32>
    %cst_21 = arith.constant dense<0.000000e+00> : vector<128x16xf32>
    %19 = tpu.matmul %17, %18, %cst_21 {dimension_numbers = #tpu.dot_dimension_numbers<[1], [0], [0], [1], [0, 0, 1, 1], [], []>} : vector<128x27xf32>, vector<27x16xf32>, vector<128x16xf32> -> vector<128x16xf32>
    %c0_22 = arith.constant 0 : index
    %c0_23 = arith.constant 0 : index
    %20 = vector.load %arg3[%c0_22, %c0_23] : memref<1x16xf32, #tpu.memory_space<vmem>>, vector<1x16xf32>
    %21 = vector.broadcast %20 : vector<1x16xf32> to vector<128x16xf32>
    %22 = arith.addf %19, %21 : vector<128x16xf32>
    %c256_24 = arith.constant 256 : index
    %c0_25 = arith.constant 0 : index
    %23 = vector.load %arg9[%c256_24, %c0_25] : memref<900x16xf32, #tpu.memory_space<vmem>>, vector<128x16xf32>
    tpu.vector_store %arg9[%c256_24, %c0_25], %22 {strides = array<i32>} : memref<900x16xf32, #tpu.memory_space<vmem>>, vector<128x16xf32>,
    %c0_26 = arith.constant 0 : index
    %c384 = arith.constant 384 : index
    %c0_27 = arith.constant 0 : index
    %24 = vector.load %arg1[%c0_26, %c384, %c0_27] : memref<1x900x27xf32, #tpu.memory_space<vmem>>, vector<1x128x27xf32>
    %25 = vector.shape_cast %24 : vector<1x128x27xf32> to vector<128x27xf32>
    %c0_28 = arith.constant 0 : index
    %c0_29 = arith.constant 0 : index
    %26 = vector.load %arg2[%c0_28, %c0_29] : memref<27x16xf32, #tpu.memory_space<vmem>>, vector<27x16xf32>
    %cst_30 = arith.constant dense<0.000000e+00> : vector<128x16xf32>
    %27 = tpu.matmul %25, %26, %cst_30 {dimension_numbers = #tpu.dot_dimension_numbers<[1], [0], [0], [1], [0, 0, 1, 1], [], []>} : vector<128x27xf32>, vector<27x16xf32>, vector<128x16xf32> -> vector<128x16xf32>
    %c0_31 = arith.constant 0 : index
    %c0_32 = arith.constant 0 : index
    %28 = vector.load %arg3[%c0_31, %c0_32] : memref<1x16xf32, #tpu.memory_space<vmem>>, vector<1x16xf32>
    %29 = vector.broadcast %28 : vector<1x16xf32> to vector<128x16xf32>
    %30 = arith.addf %27, %29 : vector<128x16xf32>
    %c384_33 = arith.constant 384 : index
    %c0_34 = arith.constant 0 : index
    %31 = vector.load %arg9[%c384_33, %c0_34] : memref<900x16xf32, #tpu.memory_space<vmem>>, vector<128x16xf32>
    tpu.vector_store %arg9[%c384_33, %c0_34], %30 {strides = array<i32>} : memref<900x16xf32, #tpu.memory_space<vmem>>, vector<128x16xf32>,
    %c0_35 = arith.constant 0 : index
    %c512 = arith.constant 512 : index
    %c0_36 = arith.constant 0 : index
    %32 = vector.load %arg1[%c0_35, %c512, %c0_36] : memref<1x900x27xf32, #tpu.memory_space<vmem>>, vector<1x128x27xf32>
    %33 = vector.shape_cast %32 : vector<1x128x27xf32> to vector<128x27xf32>
    %c0_37 = arith.constant 0 : index
    %c0_38 = arith.constant 0 : index
    %34 = vector.load %arg2[%c0_37, %c0_38] : memref<27x16xf32, #tpu.memory_space<vmem>>, vector<27x16xf32>
    %cst_39 = arith.constant dense<0.000000e+00> : vector<128x16xf32>
    %35 = tpu.matmul %33, %34, %cst_39 {dimension_numbers = #tpu.dot_dimension_numbers<[1], [0], [0], [1], [0, 0, 1, 1], [], []>} : vector<128x27xf32>, vector<27x16xf32>, vector<128x16xf32> -> vector<128x16xf32>
    %c0_40 = arith.constant 0 : index
    %c0_41 = arith.constant 0 : index
    %36 = vector.load %arg3[%c0_40, %c0_41] : memref<1x16xf32, #tpu.memory_space<vmem>>, vector<1x16xf32>
    %37 = vector.broadcast %36 : vector<1x16xf32> to vector<128x16xf32>
    %38 = arith.addf %35, %37 : vector<128x16xf32>
    %c512_42 = arith.constant 512 : index
    %c0_43 = arith.constant 0 : index
    %39 = vector.load %arg9[%c512_42, %c0_43] : memref<900x16xf32, #tpu.memory_space<vmem>>, vector<128x16xf32>
    tpu.vector_store %arg9[%c512_42, %c0_43], %38 {strides = array<i32>} : memref<900x16xf32, #tpu.memory_space<vmem>>, vector<128x16xf32>,
    %c0_44 = arith.constant 0 : index
    %c640 = arith.constant 640 : index
    %c0_45 = arith.constant 0 : index
    %40 = vector.load %arg1[%c0_44, %c640, %c0_45] : memref<1x900x27xf32, #tpu.memory_space<vmem>>, vector<1x128x27xf32>
    %41 = vector.shape_cast %40 : vector<1x128x27xf32> to vector<128x27xf32>
    %c0_46 = arith.constant 0 : index
    %c0_47 = arith.constant 0 : index
    %42 = vector.load %arg2[%c0_46, %c0_47] : memref<27x16xf32, #tpu.memory_space<vmem>>, vector<27x16xf32>
    %cst_48 = arith.constant dense<0.000000e+00> : vector<128x16xf32>
    %43 = tpu.matmul %41, %42, %cst_48 {dimension_numbers = #tpu.dot_dimension_numbers<[1], [0], [0], [1], [0, 0, 1, 1], [], []>} : vector<128x27xf32>, vector<27x16xf32>, vector<128x16xf32> -> vector<128x16xf32>
    %c0_49 = arith.constant 0 : index
    %c0_50 = arith.constant 0 : index
    %44 = vector.load %arg3[%c0_49, %c0_50] : memref<1x16xf32, #tpu.memory_space<vmem>>, vector<1x16xf32>
    %45 = vector.broadcast %44 : vector<1x16xf32> to vector<128x16xf32>
    %46 = arith.addf %43, %45 : vector<128x16xf32>
    %c640_51 = arith.constant 640 : index
    %c0_52 = arith.constant 0 : index
    %47 = vector.load %arg9[%c640_51, %c0_52] : memref<900x16xf32, #tpu.memory_space<vmem>>, vector<128x16xf32>
    tpu.vector_store %arg9[%c640_51, %c0_52], %46 {strides = array<i32>} : memref<900x16xf32, #tpu.memory_space<vmem>>, vector<128x16xf32>,
    %c0_53 = arith.constant 0 : index
    %c768 = arith.constant 768 : index
    %c0_54 = arith.constant 0 : index
    %48 = vector.load %arg1[%c0_53, %c768, %c0_54] : memref<1x900x27xf32, #tpu.memory_space<vmem>>, vector<1x128x27xf32>
    %49 = vector.shape_cast %48 : vector<1x128x27xf32> to vector<128x27xf32>
    %c0_55 = arith.constant 0 : index
    %c0_56 = arith.constant 0 : index
    %50 = vector.load %arg2[%c0_55, %c0_56] : memref<27x16xf32, #tpu.memory_space<vmem>>, vector<27x16xf32>
    %cst_57 = arith.constant dense<0.000000e+00> : vector<128x16xf32>
    %51 = tpu.matmul %49, %50, %cst_57 {dimension_numbers = #tpu.dot_dimension_numbers<[1], [0], [0], [1], [0, 0, 1, 1], [], []>} : vector<128x27xf32>, vector<27x16xf32>, vector<128x16xf32> -> vector<128x16xf32>
    %c0_58 = arith.constant 0 : index
    %c0_59 = arith.constant 0 : index
    %52 = vector.load %arg3[%c0_58, %c0_59] : memref<1x16xf32, #tpu.memory_space<vmem>>, vector<1x16xf32>
    %53 = vector.broadcast %52 : vector<1x16xf32> to vector<128x16xf32>
    %54 = arith.addf %51, %53 : vector<128x16xf32>
    %c768_60 = arith.constant 768 : index
    %c0_61 = arith.constant 0 : index
    %55 = vector.load %arg9[%c768_60, %c0_61] : memref<900x16xf32, #tpu.memory_space<vmem>>, vector<128x16xf32>
    tpu.vector_store %arg9[%c768_60, %c0_61], %54 {strides = array<i32>} : memref<900x16xf32, #tpu.memory_space<vmem>>, vector<128x16xf32>,
    %c0_62 = arith.constant 0 : index
    %c896 = arith.constant 896 : index
    %c0_63 = arith.constant 0 : index
    %56 = vector.load %arg1[%c0_62, %c896, %c0_63] : memref<1x900x27xf32, #tpu.memory_space<vmem>>, vector<1x4x27xf32>
    %57 = vector.shape_cast %56 : vector<1x4x27xf32> to vector<4x27xf32>
    %c0_64 = arith.constant 0 : index
    %c0_65 = arith.constant 0 : index
    %58 = vector.load %arg2[%c0_64, %c0_65] : memref<27x16xf32, #tpu.memory_space<vmem>>, vector<27x16xf32>
    %cst_66 = arith.constant dense<0.000000e+00> : vector<4x16xf32>
    %59 = tpu.matmul %57, %58, %cst_66 {dimension_numbers = #tpu.dot_dimension_numbers<[1], [0], [0], [1], [0, 0, 1, 1], [], []>} : vector<4x27xf32>, vector<27x16xf32>, vector<4x16xf32> -> vector<4x16xf32>
    %c0_67 = arith.constant 0 : index
    %c0_68 = arith.constant 0 : index
    %60 = vector.load %arg3[%c0_67, %c0_68] : memref<1x16xf32, #tpu.memory_space<vmem>>, vector<1x16xf32>
    %61 = vector.broadcast %60 : vector<1x16xf32> to vector<4x16xf32>
    %62 = arith.addf %59, %61 : vector<4x16xf32>
    %c896_69 = arith.constant 896 : index
    %c0_70 = arith.constant 0 : index
    %63 = vector.load %arg9[%c896_69, %c0_70] : memref<900x16xf32, #tpu.memory_space<vmem>>, vector<4x16xf32>
    tpu.vector_store %arg9[%c896_69, %c0_70], %62 {strides = array<i32>} : memref<900x16xf32, #tpu.memory_space<vmem>>, vector<4x16xf32>,
    %c0_71 = arith.constant 0 : index
    %c0_72 = arith.constant 0 : index
    %64 = vector.load %arg9[%c0_71, %c0_72] : memref<900x16xf32, #tpu.memory_space<vmem>>, vector<119x16xf32>
    %c1 = arith.constant 1 : index
    %c0_73 = arith.constant 0 : index
    %65 = vector.load %arg9[%c1, %c0_73] : memref<900x16xf32, #tpu.memory_space<vmem>>, vector<119x16xf32>
    %66 = arith.maximumf %64, %65 : vector<119x16xf32>
    %c0_74 = arith.constant 0 : index
    %c0_75 = arith.constant 0 : index
    %67 = vector.load %arg9[%c0_74, %c0_75] : memref<900x16xf32, #tpu.memory_space<vmem>>, vector<119x16xf32>
    tpu.vector_store %arg9[%c0_74, %c0_75], %66 {strides = array<i32>} : memref<900x16xf32, #tpu.memory_space<vmem>>, vector<119x16xf32>,
    %c120 = arith.constant 120 : index
    %c0_76 = arith.constant 0 : index
    %68 = vector.load %arg9[%c120, %c0_76] : memref<900x16xf32, #tpu.memory_space<vmem>>, vector<119x16xf32>
    %c121 = arith.constant 121 : index
    %c0_77 = arith.constant 0 : index
    %69 = vector.load %arg9[%c121, %c0_77] : memref<900x16xf32, #tpu.memory_space<vmem>>, vector<119x16xf32>
    %70 = arith.maximumf %68, %69 : vector<119x16xf32>
    %c120_78 = arith.constant 120 : index
    %c0_79 = arith.constant 0 : index
    %71 = vector.load %arg9[%c120_78, %c0_79] : memref<900x16xf32, #tpu.memory_space<vmem>>, vector<119x16xf32>
    tpu.vector_store %arg9[%c120_78, %c0_79], %70 {strides = array<i32>} : memref<900x16xf32, #tpu.memory_space<vmem>>, vector<119x16xf32>,
    %c240 = arith.constant 240 : index
    %c0_80 = arith.constant 0 : index
    %72 = vector.load %arg9[%c240, %c0_80] : memref<900x16xf32, #tpu.memory_space<vmem>>, vector<119x16xf32>
    %c241 = arith.constant 241 : index
    %c0_81 = arith.constant 0 : index
    %73 = vector.load %arg9[%c241, %c0_81] : memref<900x16xf32, #tpu.memory_space<vmem>>, vector<119x16xf32>
    %74 = arith.maximumf %72, %73 : vector<119x16xf32>
    %c240_82 = arith.constant 240 : index
    %c0_83 = arith.constant 0 : index
    %75 = vector.load %arg9[%c240_82, %c0_83] : memref<900x16xf32, #tpu.memory_space<vmem>>, vector<119x16xf32>
    tpu.vector_store %arg9[%c240_82, %c0_83], %74 {strides = array<i32>} : memref<900x16xf32, #tpu.memory_space<vmem>>, vector<119x16xf32>,
    %c360 = arith.constant 360 : index
    %c0_84 = arith.constant 0 : index
    %76 = vector.load %arg9[%c360, %c0_84] : memref<900x16xf32, #tpu.memory_space<vmem>>, vector<119x16xf32>
    %c361 = arith.constant 361 : index
    %c0_85 = arith.constant 0 : index
    %77 = vector.load %arg9[%c361, %c0_85] : memref<900x16xf32, #tpu.memory_space<vmem>>, vector<119x16xf32>
    %78 = arith.maximumf %76, %77 : vector<119x16xf32>
    %c360_86 = arith.constant 360 : index
    %c0_87 = arith.constant 0 : index
    %79 = vector.load %arg9[%c360_86, %c0_87] : memref<900x16xf32, #tpu.memory_space<vmem>>, vector<119x16xf32>
    tpu.vector_store %arg9[%c360_86, %c0_87], %78 {strides = array<i32>} : memref<900x16xf32, #tpu.memory_space<vmem>>, vector<119x16xf32>,
    %c480 = arith.constant 480 : index
    %c0_88 = arith.constant 0 : index
    %80 = vector.load %arg9[%c480, %c0_88] : memref<900x16xf32, #tpu.memory_space<vmem>>, vector<119x16xf32>
    %c481 = arith.constant 481 : index
    %c0_89 = arith.constant 0 : index
    %81 = vector.load %arg9[%c481, %c0_89] : memref<900x16xf32, #tpu.memory_space<vmem>>, vector<119x16xf32>
    %82 = arith.maximumf %80, %81 : vector<119x16xf32>
    %c480_90 = arith.constant 480 : index
    %c0_91 = arith.constant 0 : index
    %83 = vector.load %arg9[%c480_90, %c0_91] : memref<900x16xf32, #tpu.memory_space<vmem>>, vector<119x16xf32>
    tpu.vector_store %arg9[%c480_90, %c0_91], %82 {strides = array<i32>} : memref<900x16xf32, #tpu.memory_space<vmem>>, vector<119x16xf32>,
    %c600 = arith.constant 600 : index
    %c0_92 = arith.constant 0 : index
    %84 = vector.load %arg9[%c600, %c0_92] : memref<900x16xf32, #tpu.memory_space<vmem>>, vector<119x16xf32>
    %c601 = arith.constant 601 : index
    %c0_93 = arith.constant 0 : index
    %85 = vector.load %arg9[%c601, %c0_93] : memref<900x16xf32, #tpu.memory_space<vmem>>, vector<119x16xf32>
    %86 = arith.maximumf %84, %85 : vector<119x16xf32>
    %c600_94 = arith.constant 600 : index
    %c0_95 = arith.constant 0 : index
    %87 = vector.load %arg9[%c600_94, %c0_95] : memref<900x16xf32, #tpu.memory_space<vmem>>, vector<119x16xf32>
    tpu.vector_store %arg9[%c600_94, %c0_95], %86 {strides = array<i32>} : memref<900x16xf32, #tpu.memory_space<vmem>>, vector<119x16xf32>,
    %c720 = arith.constant 720 : index
    %c0_96 = arith.constant 0 : index
    %88 = vector.load %arg9[%c720, %c0_96] : memref<900x16xf32, #tpu.memory_space<vmem>>, vector<119x16xf32>
    %c721 = arith.constant 721 : index
    %c0_97 = arith.constant 0 : index
    %89 = vector.load %arg9[%c721, %c0_97] : memref<900x16xf32, #tpu.memory_space<vmem>>, vector<119x16xf32>
    %90 = arith.maximumf %88, %89 : vector<119x16xf32>
    %c720_98 = arith.constant 720 : index
    %c0_99 = arith.constant 0 : index
    %91 = vector.load %arg9[%c720_98, %c0_99] : memref<900x16xf32, #tpu.memory_space<vmem>>, vector<119x16xf32>
    tpu.vector_store %arg9[%c720_98, %c0_99], %90 {strides = array<i32>} : memref<900x16xf32, #tpu.memory_space<vmem>>, vector<119x16xf32>,
    %c840 = arith.constant 840 : index
    %c0_100 = arith.constant 0 : index
    %92 = vector.load %arg9[%c840, %c0_100] : memref<900x16xf32, #tpu.memory_space<vmem>>, vector<59x16xf32>
    %c841 = arith.constant 841 : index
    %c0_101 = arith.constant 0 : index
    %93 = vector.load %arg9[%c841, %c0_101] : memref<900x16xf32, #tpu.memory_space<vmem>>, vector<59x16xf32>
    %94 = arith.maximumf %92, %93 : vector<59x16xf32>
    %c840_102 = arith.constant 840 : index
    %c0_103 = arith.constant 0 : index
    %95 = vector.load %arg9[%c840_102, %c0_103] : memref<900x16xf32, #tpu.memory_space<vmem>>, vector<59x16xf32>
    tpu.vector_store %arg9[%c840_102, %c0_103], %94 {strides = array<i32>} : memref<900x16xf32, #tpu.memory_space<vmem>>, vector<59x16xf32>,
    %c0_104 = arith.constant 0 : index
    %c0_105 = arith.constant 0 : index
    %96 = tpu.strided_load %arg9[%c0_104, %c0_105] {strides = array<i32: 2, 1>} : memref<900x16xf32, #tpu.memory_space<vmem>>, vector<15x16xf32>
    %c30 = arith.constant 30 : index
    %c0_106 = arith.constant 0 : index
    %97 = tpu.strided_load %arg9[%c30, %c0_106] {strides = array<i32: 2, 1>} : memref<900x16xf32, #tpu.memory_space<vmem>>, vector<15x16xf32>
    %98 = arith.maximumf %96, %97 : vector<15x16xf32>
    %c0_107 = arith.constant 0 : index
    %c0_108 = arith.constant 0 : index
    %99 = vector.load %arg10[%c0_107, %c0_108] : memref<225x16xf32, #tpu.memory_space<vmem>>, vector<15x16xf32>
    tpu.vector_store %arg10[%c0_107, %c0_108], %98 {strides = array<i32>} : memref<225x16xf32, #tpu.memory_space<vmem>>, vector<15x16xf32>,
    %c60 = arith.constant 60 : index
    %c0_109 = arith.constant 0 : index
    %100 = tpu.strided_load %arg9[%c60, %c0_109] {strides = array<i32: 2, 1>} : memref<900x16xf32, #tpu.memory_space<vmem>>, vector<15x16xf32>
    %c90 = arith.constant 90 : index
    %c0_110 = arith.constant 0 : index
    %101 = tpu.strided_load %arg9[%c90, %c0_110] {strides = array<i32: 2, 1>} : memref<900x16xf32, #tpu.memory_space<vmem>>, vector<15x16xf32>
    %102 = arith.maximumf %100, %101 : vector<15x16xf32>
    %c15 = arith.constant 15 : index
    %c0_111 = arith.constant 0 : index
    %103 = vector.load %arg10[%c15, %c0_111] : memref<225x16xf32, #tpu.memory_space<vmem>>, vector<15x16xf32>
    tpu.vector_store %arg10[%c15, %c0_111], %102 {strides = array<i32>} : memref<225x16xf32, #tpu.memory_space<vmem>>, vector<15x16xf32>,
    %c120_112 = arith.constant 120 : index
    %c0_113 = arith.constant 0 : index
    %104 = tpu.strided_load %arg9[%c120_112, %c0_113] {strides = array<i32: 2, 1>} : memref<900x16xf32, #tpu.memory_space<vmem>>, vector<15x16xf32>
    %c150 = arith.constant 150 : index
    %c0_114 = arith.constant 0 : index
    %105 = tpu.strided_load %arg9[%c150, %c0_114] {strides = array<i32: 2, 1>} : memref<900x16xf32, #tpu.memory_space<vmem>>, vector<15x16xf32>
    %106 = arith.maximumf %104, %105 : vector<15x16xf32>
    %c30_115 = arith.constant 30 : index
    %c0_116 = arith.constant 0 : index
    %107 = vector.load %arg10[%c30_115, %c0_116] : memref<225x16xf32, #tpu.memory_space<vmem>>, vector<15x16xf32>
    tpu.vector_store %arg10[%c30_115, %c0_116], %106 {strides = array<i32>} : memref<225x16xf32, #tpu.memory_space<vmem>>, vector<15x16xf32>,
    %c180 = arith.constant 180 : index
    %c0_117 = arith.constant 0 : index
    %108 = tpu.strided_load %arg9[%c180, %c0_117] {strides = array<i32: 2, 1>} : memref<900x16xf32, #tpu.memory_space<vmem>>, vector<15x16xf32>
    %c210 = arith.constant 210 : index
    %c0_118 = arith.constant 0 : index
    %109 = tpu.strided_load %arg9[%c210, %c0_118] {strides = array<i32: 2, 1>} : memref<900x16xf32, #tpu.memory_space<vmem>>, vector<15x16xf32>
    %110 = arith.maximumf %108, %109 : vector<15x16xf32>
    %c45 = arith.constant 45 : index
    %c0_119 = arith.constant 0 : index
    %111 = vector.load %arg10[%c45, %c0_119] : memref<225x16xf32, #tpu.memory_space<vmem>>, vector<15x16xf32>
    tpu.vector_store %arg10[%c45, %c0_119], %110 {strides = array<i32>} : memref<225x16xf32, #tpu.memory_space<vmem>>, vector<15x16xf32>,
    %c240_120 = arith.constant 240 : index
    %c0_121 = arith.constant 0 : index
    %112 = tpu.strided_load %arg9[%c240_120, %c0_121] {strides = array<i32: 2, 1>} : memref<900x16xf32, #tpu.memory_space<vmem>>, vector<15x16xf32>
    %c270 = arith.constant 270 : index
    %c0_122 = arith.constant 0 : index
    %113 = tpu.strided_load %arg9[%c270, %c0_122] {strides = array<i32: 2, 1>} : memref<900x16xf32, #tpu.memory_space<vmem>>, vector<15x16xf32>
    %114 = arith.maximumf %112, %113 : vector<15x16xf32>
    %c60_123 = arith.constant 60 : index
    %c0_124 = arith.constant 0 : index
    %115 = vector.load %arg10[%c60_123, %c0_124] : memref<225x16xf32, #tpu.memory_space<vmem>>, vector<15x16xf32>
    tpu.vector_store %arg10[%c60_123, %c0_124], %114 {strides = array<i32>} : memref<225x16xf32, #tpu.memory_space<vmem>>, vector<15x16xf32>,
    %c300 = arith.constant 300 : index
    %c0_125 = arith.constant 0 : index
    %116 = tpu.strided_load %arg9[%c300, %c0_125] {strides = array<i32: 2, 1>} : memref<900x16xf32, #tpu.memory_space<vmem>>, vector<15x16xf32>
    %c330 = arith.constant 330 : index
    %c0_126 = arith.constant 0 : index
    %117 = tpu.strided_load %arg9[%c330, %c0_126] {strides = array<i32: 2, 1>} : memref<900x16xf32, #tpu.memory_space<vmem>>, vector<15x16xf32>
    %118 = arith.maximumf %116, %117 : vector<15x16xf32>
    %c75 = arith.constant 75 : index
    %c0_127 = arith.constant 0 : index
    %119 = vector.load %arg10[%c75, %c0_127] : memref<225x16xf32, #tpu.memory_space<vmem>>, vector<15x16xf32>
    tpu.vector_store %arg10[%c75, %c0_127], %118 {strides = array<i32>} : memref<225x16xf32, #tpu.memory_space<vmem>>, vector<15x16xf32>,
    %c360_128 = arith.constant 360 : index
    %c0_129 = arith.constant 0 : index
    %120 = tpu.strided_load %arg9[%c360_128, %c0_129] {strides = array<i32: 2, 1>} : memref<900x16xf32, #tpu.memory_space<vmem>>, vector<15x16xf32>
    %c390 = arith.constant 390 : index
    %c0_130 = arith.constant 0 : index
    %121 = tpu.strided_load %arg9[%c390, %c0_130] {strides = array<i32: 2, 1>} : memref<900x16xf32, #tpu.memory_space<vmem>>, vector<15x16xf32>
    %122 = arith.maximumf %120, %121 : vector<15x16xf32>
    %c90_131 = arith.constant 90 : index
    %c0_132 = arith.constant 0 : index
    %123 = vector.load %arg10[%c90_131, %c0_132] : memref<225x16xf32, #tpu.memory_space<vmem>>, vector<15x16xf32>
    tpu.vector_store %arg10[%c90_131, %c0_132], %122 {strides = array<i32>} : memref<225x16xf32, #tpu.memory_space<vmem>>, vector<15x16xf32>,
    %c420 = arith.constant 420 : index
    %c0_133 = arith.constant 0 : index
    %124 = tpu.strided_load %arg9[%c420, %c0_133] {strides = array<i32: 2, 1>} : memref<900x16xf32, #tpu.memory_space<vmem>>, vector<15x16xf32>
    %c450 = arith.constant 450 : index
    %c0_134 = arith.constant 0 : index
    %125 = tpu.strided_load %arg9[%c450, %c0_134] {strides = array<i32: 2, 1>} : memref<900x16xf32, #tpu.memory_space<vmem>>, vector<15x16xf32>
    %126 = arith.maximumf %124, %125 : vector<15x16xf32>
    %c105 = arith.constant 105 : index
    %c0_135 = arith.constant 0 : index
    %127 = vector.load %arg10[%c105, %c0_135] : memref<225x16xf32, #tpu.memory_space<vmem>>, vector<15x16xf32>
    tpu.vector_store %arg10[%c105, %c0_135], %126 {strides = array<i32>} : memref<225x16xf32, #tpu.memory_space<vmem>>, vector<15x16xf32>,
    %c480_136 = arith.constant 480 : index
    %c0_137 = arith.constant 0 : index
    %128 = tpu.strided_load %arg9[%c480_136, %c0_137] {strides = array<i32: 2, 1>} : memref<900x16xf32, #tpu.memory_space<vmem>>, vector<15x16xf32>
    %c510 = arith.constant 510 : index
    %c0_138 = arith.constant 0 : index
    %129 = tpu.strided_load %arg9[%c510, %c0_138] {strides = array<i32: 2, 1>} : memref<900x16xf32, #tpu.memory_space<vmem>>, vector<15x16xf32>
    %130 = arith.maximumf %128, %129 : vector<15x16xf32>
    %c120_139 = arith.constant 120 : index
    %c0_140 = arith.constant 0 : index
    %131 = vector.load %arg10[%c120_139, %c0_140] : memref<225x16xf32, #tpu.memory_space<vmem>>, vector<15x16xf32>
    tpu.vector_store %arg10[%c120_139, %c0_140], %130 {strides = array<i32>} : memref<225x16xf32, #tpu.memory_space<vmem>>, vector<15x16xf32>,
    %c540 = arith.constant 540 : index
    %c0_141 = arith.constant 0 : index
    %132 = tpu.strided_load %arg9[%c540, %c0_141] {strides = array<i32: 2, 1>} : memref<900x16xf32, #tpu.memory_space<vmem>>, vector<15x16xf32>
    %c570 = arith.constant 570 : index
    %c0_142 = arith.constant 0 : index
    %133 = tpu.strided_load %arg9[%c570, %c0_142] {strides = array<i32: 2, 1>} : memref<900x16xf32, #tpu.memory_space<vmem>>, vector<15x16xf32>
    %134 = arith.maximumf %132, %133 : vector<15x16xf32>
    %c135 = arith.constant 135 : index
    %c0_143 = arith.constant 0 : index
    %135 = vector.load %arg10[%c135, %c0_143] : memref<225x16xf32, #tpu.memory_space<vmem>>, vector<15x16xf32>
    tpu.vector_store %arg10[%c135, %c0_143], %134 {strides = array<i32>} : memref<225x16xf32, #tpu.memory_space<vmem>>, vector<15x16xf32>,
    %c600_144 = arith.constant 600 : index
    %c0_145 = arith.constant 0 : index
    %136 = tpu.strided_load %arg9[%c600_144, %c0_145] {strides = array<i32: 2, 1>} : memref<900x16xf32, #tpu.memory_space<vmem>>, vector<15x16xf32>
    %c630 = arith.constant 630 : index
    %c0_146 = arith.constant 0 : index
    %137 = tpu.strided_load %arg9[%c630, %c0_146] {strides = array<i32: 2, 1>} : memref<900x16xf32, #tpu.memory_space<vmem>>, vector<15x16xf32>
    %138 = arith.maximumf %136, %137 : vector<15x16xf32>
    %c150_147 = arith.constant 150 : index
    %c0_148 = arith.constant 0 : index
    %139 = vector.load %arg10[%c150_147, %c0_148] : memref<225x16xf32, #tpu.memory_space<vmem>>, vector<15x16xf32>
    tpu.vector_store %arg10[%c150_147, %c0_148], %138 {strides = array<i32>} : memref<225x16xf32, #tpu.memory_space<vmem>>, vector<15x16xf32>,
    %c660 = arith.constant 660 : index
    %c0_149 = arith.constant 0 : index
    %140 = tpu.strided_load %arg9[%c660, %c0_149] {strides = array<i32: 2, 1>} : memref<900x16xf32, #tpu.memory_space<vmem>>, vector<15x16xf32>
    %c690 = arith.constant 690 : index
    %c0_150 = arith.constant 0 : index
    %141 = tpu.strided_load %arg9[%c690, %c0_150] {strides = array<i32: 2, 1>} : memref<900x16xf32, #tpu.memory_space<vmem>>, vector<15x16xf32>
    %142 = arith.maximumf %140, %141 : vector<15x16xf32>
    %c165 = arith.constant 165 : index
    %c0_151 = arith.constant 0 : index
    %143 = vector.load %arg10[%c165, %c0_151] : memref<225x16xf32, #tpu.memory_space<vmem>>, vector<15x16xf32>
    tpu.vector_store %arg10[%c165, %c0_151], %142 {strides = array<i32>} : memref<225x16xf32, #tpu.memory_space<vmem>>, vector<15x16xf32>,
    %c720_152 = arith.constant 720 : index
    %c0_153 = arith.constant 0 : index
    %144 = tpu.strided_load %arg9[%c720_152, %c0_153] {strides = array<i32: 2, 1>} : memref<900x16xf32, #tpu.memory_space<vmem>>, vector<15x16xf32>
    %c750 = arith.constant 750 : index
    %c0_154 = arith.constant 0 : index
    %145 = tpu.strided_load %arg9[%c750, %c0_154] {strides = array<i32: 2, 1>} : memref<900x16xf32, #tpu.memory_space<vmem>>, vector<15x16xf32>
    %146 = arith.maximumf %144, %145 : vector<15x16xf32>
    %c180_155 = arith.constant 180 : index
    %c0_156 = arith.constant 0 : index
    %147 = vector.load %arg10[%c180_155, %c0_156] : memref<225x16xf32, #tpu.memory_space<vmem>>, vector<15x16xf32>
    tpu.vector_store %arg10[%c180_155, %c0_156], %146 {strides = array<i32>} : memref<225x16xf32, #tpu.memory_space<vmem>>, vector<15x16xf32>,
    %c780 = arith.constant 780 : index
    %c0_157 = arith.constant 0 : index
    %148 = tpu.strided_load %arg9[%c780, %c0_157] {strides = array<i32: 2, 1>} : memref<900x16xf32, #tpu.memory_space<vmem>>, vector<15x16xf32>
    %c810 = arith.constant 810 : index
    %c0_158 = arith.constant 0 : index
    %149 = tpu.strided_load %arg9[%c810, %c0_158] {strides = array<i32: 2, 1>} : memref<900x16xf32, #tpu.memory_space<vmem>>, vector<15x16xf32>
    %150 = arith.maximumf %148, %149 : vector<15x16xf32>
    %c195 = arith.constant 195 : index
    %c0_159 = arith.constant 0 : index
    %151 = vector.load %arg10[%c195, %c0_159] : memref<225x16xf32, #tpu.memory_space<vmem>>, vector<15x16xf32>
    tpu.vector_store %arg10[%c195, %c0_159], %150 {strides = array<i32>} : memref<225x16xf32, #tpu.memory_space<vmem>>, vector<15x16xf32>,
    %c840_160 = arith.constant 840 : index
    %c0_161 = arith.constant 0 : index
    %152 = tpu.strided_load %arg9[%c840_160, %c0_161] {strides = array<i32: 2, 1>} : memref<900x16xf32, #tpu.memory_space<vmem>>, vector<15x16xf32>
    %c870 = arith.constant 870 : index
    %c0_162 = arith.constant 0 : index
    %153 = tpu.strided_load %arg9[%c870, %c0_162] {strides = array<i32: 2, 1>} : memref<900x16xf32, #tpu.memory_space<vmem>>, vector<15x16xf32>
    %154 = arith.maximumf %152, %153 : vector<15x16xf32>
    %c210_163 = arith.constant 210 : index
    %c0_164 = arith.constant 0 : index
    %155 = vector.load %arg10[%c210_163, %c0_164] : memref<225x16xf32, #tpu.memory_space<vmem>>, vector<15x16xf32>
    tpu.vector_store %arg10[%c210_163, %c0_164], %154 {strides = array<i32>} : memref<225x16xf32, #tpu.memory_space<vmem>>, vector<15x16xf32>,
    %c0_165 = arith.constant 0 : index
    %c0_166 = arith.constant 0 : index
    %156 = vector.load %arg10[%c0_165, %c0_166] : memref<225x16xf32, #tpu.memory_space<vmem>>, vector<193x16xf32>
    %c0_167 = arith.constant 0 : index
    %c0_168 = arith.constant 0 : index
    %157 = vector.load %arg11[%c0_167, %c0_168] : memref<193x144xf32, #tpu.memory_space<vmem>>, vector<193x16xf32>
    tpu.vector_store %arg11[%c0_167, %c0_168], %156 {strides = array<i32>} : memref<193x144xf32, #tpu.memory_space<vmem>>, vector<193x16xf32>,
    %c1_169 = arith.constant 1 : index
    %c0_170 = arith.constant 0 : index
    %158 = vector.load %arg10[%c1_169, %c0_170] : memref<225x16xf32, #tpu.memory_space<vmem>>, vector<193x16xf32>
    %c0_171 = arith.constant 0 : index
    %c16 = arith.constant 16 : index
    %159 = vector.load %arg11[%c0_171, %c16] : memref<193x144xf32, #tpu.memory_space<vmem>>, vector<193x16xf32>
    tpu.vector_store %arg11[%c0_171, %c16], %158 {strides = array<i32>} : memref<193x144xf32, #tpu.memory_space<vmem>>, vector<193x16xf32>,
    %c2 = arith.constant 2 : index
    %c0_172 = arith.constant 0 : index
    %160 = vector.load %arg10[%c2, %c0_172] : memref<225x16xf32, #tpu.memory_space<vmem>>, vector<193x16xf32>
    %c0_173 = arith.constant 0 : index
    %c32 = arith.constant 32 : index
    %161 = vector.load %arg11[%c0_173, %c32] : memref<193x144xf32, #tpu.memory_space<vmem>>, vector<193x16xf32>
    tpu.vector_store %arg11[%c0_173, %c32], %160 {strides = array<i32>} : memref<193x144xf32, #tpu.memory_space<vmem>>, vector<193x16xf32>,
    %c15_174 = arith.constant 15 : index
    %c0_175 = arith.constant 0 : index
    %162 = vector.load %arg10[%c15_174, %c0_175] : memref<225x16xf32, #tpu.memory_space<vmem>>, vector<193x16xf32>
    %c0_176 = arith.constant 0 : index
    %c48 = arith.constant 48 : index
    %163 = vector.load %arg11[%c0_176, %c48] : memref<193x144xf32, #tpu.memory_space<vmem>>, vector<193x16xf32>
    tpu.vector_store %arg11[%c0_176, %c48], %162 {strides = array<i32>} : memref<193x144xf32, #tpu.memory_space<vmem>>, vector<193x16xf32>,
    %c16_177 = arith.constant 16 : index
    %c0_178 = arith.constant 0 : index
    %164 = vector.load %arg10[%c16_177, %c0_178] : memref<225x16xf32, #tpu.memory_space<vmem>>, vector<193x16xf32>
    %c0_179 = arith.constant 0 : index
    %c64 = arith.constant 64 : index
    %165 = vector.load %arg11[%c0_179, %c64] : memref<193x144xf32, #tpu.memory_space<vmem>>, vector<193x16xf32>
    tpu.vector_store %arg11[%c0_179, %c64], %164 {strides = array<i32>} : memref<193x144xf32, #tpu.memory_space<vmem>>, vector<193x16xf32>,
    %c17 = arith.constant 17 : index
    %c0_180 = arith.constant 0 : index
    %166 = vector.load %arg10[%c17, %c0_180] : memref<225x16xf32, #tpu.memory_space<vmem>>, vector<193x16xf32>
    %c0_181 = arith.constant 0 : index
    %c80 = arith.constant 80 : index
    %167 = vector.load %arg11[%c0_181, %c80] : memref<193x144xf32, #tpu.memory_space<vmem>>, vector<193x16xf32>
    tpu.vector_store %arg11[%c0_181, %c80], %166 {strides = array<i32>} : memref<193x144xf32, #tpu.memory_space<vmem>>, vector<193x16xf32>,
    %c30_182 = arith.constant 30 : index
    %c0_183 = arith.constant 0 : index
    %168 = vector.load %arg10[%c30_182, %c0_183] : memref<225x16xf32, #tpu.memory_space<vmem>>, vector<193x16xf32>
    %c0_184 = arith.constant 0 : index
    %c96 = arith.constant 96 : index
    %169 = vector.load %arg11[%c0_184, %c96] : memref<193x144xf32, #tpu.memory_space<vmem>>, vector<193x16xf32>
    tpu.vector_store %arg11[%c0_184, %c96], %168 {strides = array<i32>} : memref<193x144xf32, #tpu.memory_space<vmem>>, vector<193x16xf32>,
    %c31 = arith.constant 31 : index
    %c0_185 = arith.constant 0 : index
    %170 = vector.load %arg10[%c31, %c0_185] : memref<225x16xf32, #tpu.memory_space<vmem>>, vector<193x16xf32>
    %c0_186 = arith.constant 0 : index
    %c112 = arith.constant 112 : index
    %171 = vector.load %arg11[%c0_186, %c112] : memref<193x144xf32, #tpu.memory_space<vmem>>, vector<193x16xf32>
    tpu.vector_store %arg11[%c0_186, %c112], %170 {strides = array<i32>} : memref<193x144xf32, #tpu.memory_space<vmem>>, vector<193x16xf32>,
    %c32_187 = arith.constant 32 : index
    %c0_188 = arith.constant 0 : index
    %172 = vector.load %arg10[%c32_187, %c0_188] : memref<225x16xf32, #tpu.memory_space<vmem>>, vector<193x16xf32>
    %c0_189 = arith.constant 0 : index
    %c128_190 = arith.constant 128 : index
    %173 = vector.load %arg11[%c0_189, %c128_190] : memref<193x144xf32, #tpu.memory_space<vmem>>, vector<193x16xf32>
    tpu.vector_store %arg11[%c0_189, %c128_190], %172 {strides = array<i32>} : memref<193x144xf32, #tpu.memory_space<vmem>>, vector<193x16xf32>,
    %c0_191 = arith.constant 0 : index
    %c0_192 = arith.constant 0 : index
    %174 = vector.load %arg11[%c0_191, %c0_192] : memref<193x144xf32, #tpu.memory_space<vmem>>, vector<193x144xf32>
    %c0_193 = arith.constant 0 : index
    %c0_194 = arith.constant 0 : index
    %175 = vector.load %arg4[%c0_193, %c0_194] : memref<144x32xf32, #tpu.memory_space<vmem>>, vector<144x32xf32>
    %cst_195 = arith.constant dense<0.000000e+00> : vector<193x32xf32>
    %176 = tpu.matmul %174, %175, %cst_195 {dimension_numbers = #tpu.dot_dimension_numbers<[1], [0], [0], [1], [0, 0, 1, 1], [], []>} : vector<193x144xf32>, vector<144x32xf32>, vector<193x32xf32> -> vector<193x32xf32>
    %c0_196 = arith.constant 0 : index
    %c0_197 = arith.constant 0 : index
    %177 = vector.load %arg5[%c0_196, %c0_197] : memref<1x32xf32, #tpu.memory_space<vmem>>, vector<1x32xf32>
    %178 = vector.broadcast %177 : vector<1x32xf32> to vector<193x32xf32>
    %179 = arith.addf %176, %178 : vector<193x32xf32>
    %c0_198 = arith.constant 0 : index
    %c0_199 = arith.constant 0 : index
    %180 = vector.load %arg12[%c0_198, %c0_199] : memref<193x32xf32, #tpu.memory_space<vmem>>, vector<193x32xf32>
    tpu.vector_store %arg12[%c0_198, %c0_199], %179 {strides = array<i32>} : memref<193x32xf32, #tpu.memory_space<vmem>>, vector<193x32xf32>,
    %c0_200 = arith.constant 0 : index
    %c0_201 = arith.constant 0 : index
    %181 = vector.load %arg12[%c0_200, %c0_201] : memref<193x32xf32, #tpu.memory_space<vmem>>, vector<119x32xf32>
    %c1_202 = arith.constant 1 : index
    %c0_203 = arith.constant 0 : index
    %182 = vector.load %arg12[%c1_202, %c0_203] : memref<193x32xf32, #tpu.memory_space<vmem>>, vector<119x32xf32>
    %183 = arith.maximumf %181, %182 : vector<119x32xf32>
    %c0_204 = arith.constant 0 : index
    %c0_205 = arith.constant 0 : index
    %184 = vector.load %arg12[%c0_204, %c0_205] : memref<193x32xf32, #tpu.memory_space<vmem>>, vector<119x32xf32>
    tpu.vector_store %arg12[%c0_204, %c0_205], %183 {strides = array<i32>} : memref<193x32xf32, #tpu.memory_space<vmem>>, vector<119x32xf32>,
    %c120_206 = arith.constant 120 : index
    %c0_207 = arith.constant 0 : index
    %185 = vector.load %arg12[%c120_206, %c0_207] : memref<193x32xf32, #tpu.memory_space<vmem>>, vector<72x32xf32>
    %c121_208 = arith.constant 121 : index
    %c0_209 = arith.constant 0 : index
    %186 = vector.load %arg12[%c121_208, %c0_209] : memref<193x32xf32, #tpu.memory_space<vmem>>, vector<72x32xf32>
    %187 = arith.maximumf %185, %186 : vector<72x32xf32>
    %c120_210 = arith.constant 120 : index
    %c0_211 = arith.constant 0 : index
    %188 = vector.load %arg12[%c120_210, %c0_211] : memref<193x32xf32, #tpu.memory_space<vmem>>, vector<72x32xf32>
    tpu.vector_store %arg12[%c120_210, %c0_211], %187 {strides = array<i32>} : memref<193x32xf32, #tpu.memory_space<vmem>>, vector<72x32xf32>,
    %c0_212 = arith.constant 0 : index
    %c0_213 = arith.constant 0 : index
    %189 = tpu.strided_load %arg12[%c0_212, %c0_213] {strides = array<i32: 2, 1>} : memref<193x32xf32, #tpu.memory_space<vmem>>, vector<6x32xf32>
    %c15_214 = arith.constant 15 : index
    %c0_215 = arith.constant 0 : index
    %190 = tpu.strided_load %arg12[%c15_214, %c0_215] {strides = array<i32: 2, 1>} : memref<193x32xf32, #tpu.memory_space<vmem>>, vector<6x32xf32>
    %191 = arith.maximumf %189, %190 : vector<6x32xf32>
    %c0_216 = arith.constant 0 : index
    %c0_217 = arith.constant 0 : index
    %192 = vector.load %arg13[%c0_216, %c0_217] : memref<36x32xf32, #tpu.memory_space<vmem>>, vector<6x32xf32>
    tpu.vector_store %arg13[%c0_216, %c0_217], %191 {strides = array<i32>} : memref<36x32xf32, #tpu.memory_space<vmem>>, vector<6x32xf32>,
    %c30_218 = arith.constant 30 : index
    %c0_219 = arith.constant 0 : index
    %193 = tpu.strided_load %arg12[%c30_218, %c0_219] {strides = array<i32: 2, 1>} : memref<193x32xf32, #tpu.memory_space<vmem>>, vector<6x32xf32>
    %c45_220 = arith.constant 45 : index
    %c0_221 = arith.constant 0 : index
    %194 = tpu.strided_load %arg12[%c45_220, %c0_221] {strides = array<i32: 2, 1>} : memref<193x32xf32, #tpu.memory_space<vmem>>, vector<6x32xf32>
    %195 = arith.maximumf %193, %194 : vector<6x32xf32>
    %c6 = arith.constant 6 : index
    %c0_222 = arith.constant 0 : index
    %196 = vector.load %arg13[%c6, %c0_222] : memref<36x32xf32, #tpu.memory_space<vmem>>, vector<6x32xf32>
    tpu.vector_store %arg13[%c6, %c0_222], %195 {strides = array<i32>} : memref<36x32xf32, #tpu.memory_space<vmem>>, vector<6x32xf32>,
    %c60_223 = arith.constant 60 : index
    %c0_224 = arith.constant 0 : index
    %197 = tpu.strided_load %arg12[%c60_223, %c0_224] {strides = array<i32: 2, 1>} : memref<193x32xf32, #tpu.memory_space<vmem>>, vector<6x32xf32>
    %c75_225 = arith.constant 75 : index
    %c0_226 = arith.constant 0 : index
    %198 = tpu.strided_load %arg12[%c75_225, %c0_226] {strides = array<i32: 2, 1>} : memref<193x32xf32, #tpu.memory_space<vmem>>, vector<6x32xf32>
    %199 = arith.maximumf %197, %198 : vector<6x32xf32>
    %c12 = arith.constant 12 : index
    %c0_227 = arith.constant 0 : index
    %200 = vector.load %arg13[%c12, %c0_227] : memref<36x32xf32, #tpu.memory_space<vmem>>, vector<6x32xf32>
    tpu.vector_store %arg13[%c12, %c0_227], %199 {strides = array<i32>} : memref<36x32xf32, #tpu.memory_space<vmem>>, vector<6x32xf32>,
    %c90_228 = arith.constant 90 : index
    %c0_229 = arith.constant 0 : index
    %201 = tpu.strided_load %arg12[%c90_228, %c0_229] {strides = array<i32: 2, 1>} : memref<193x32xf32, #tpu.memory_space<vmem>>, vector<6x32xf32>
    %c105_230 = arith.constant 105 : index
    %c0_231 = arith.constant 0 : index
    %202 = tpu.strided_load %arg12[%c105_230, %c0_231] {strides = array<i32: 2, 1>} : memref<193x32xf32, #tpu.memory_space<vmem>>, vector<6x32xf32>
    %203 = arith.maximumf %201, %202 : vector<6x32xf32>
    %c18 = arith.constant 18 : index
    %c0_232 = arith.constant 0 : index
    %204 = vector.load %arg13[%c18, %c0_232] : memref<36x32xf32, #tpu.memory_space<vmem>>, vector<6x32xf32>
    tpu.vector_store %arg13[%c18, %c0_232], %203 {strides = array<i32>} : memref<36x32xf32, #tpu.memory_space<vmem>>, vector<6x32xf32>,
    %c120_233 = arith.constant 120 : index
    %c0_234 = arith.constant 0 : index
    %205 = tpu.strided_load %arg12[%c120_233, %c0_234] {strides = array<i32: 2, 1>} : memref<193x32xf32, #tpu.memory_space<vmem>>, vector<6x32xf32>
    %c135_235 = arith.constant 135 : index
    %c0_236 = arith.constant 0 : index
    %206 = tpu.strided_load %arg12[%c135_235, %c0_236] {strides = array<i32: 2, 1>} : memref<193x32xf32, #tpu.memory_space<vmem>>, vector<6x32xf32>
    %207 = arith.maximumf %205, %206 : vector<6x32xf32>
    %c24 = arith.constant 24 : index
    %c0_237 = arith.constant 0 : index
    %208 = vector.load %arg13[%c24, %c0_237] : memref<36x32xf32, #tpu.memory_space<vmem>>, vector<6x32xf32>
    tpu.vector_store %arg13[%c24, %c0_237], %207 {strides = array<i32>} : memref<36x32xf32, #tpu.memory_space<vmem>>, vector<6x32xf32>,
    %c150_238 = arith.constant 150 : index
    %c0_239 = arith.constant 0 : index
    %209 = tpu.strided_load %arg12[%c150_238, %c0_239] {strides = array<i32: 2, 1>} : memref<193x32xf32, #tpu.memory_space<vmem>>, vector<6x32xf32>
    %c165_240 = arith.constant 165 : index
    %c0_241 = arith.constant 0 : index
    %210 = tpu.strided_load %arg12[%c165_240, %c0_241] {strides = array<i32: 2, 1>} : memref<193x32xf32, #tpu.memory_space<vmem>>, vector<6x32xf32>
    %211 = arith.maximumf %209, %210 : vector<6x32xf32>
    %c30_242 = arith.constant 30 : index
    %c0_243 = arith.constant 0 : index
    %212 = vector.load %arg13[%c30_242, %c0_243] : memref<36x32xf32, #tpu.memory_space<vmem>>, vector<6x32xf32>
    tpu.vector_store %arg13[%c30_242, %c0_243], %211 {strides = array<i32>} : memref<36x32xf32, #tpu.memory_space<vmem>>, vector<6x32xf32>,
    %c0_244 = arith.constant 0 : index
    %c0_245 = arith.constant 0 : index
    %213 = vector.load %arg13[%c0_244, %c0_245] : memref<36x32xf32, #tpu.memory_space<vmem>>, vector<22x32xf32>
    %c0_246 = arith.constant 0 : index
    %c0_247 = arith.constant 0 : index
    %214 = vector.load %arg14[%c0_246, %c0_247] : memref<22x288xf32, #tpu.memory_space<vmem>>, vector<22x32xf32>
    tpu.vector_store %arg14[%c0_246, %c0_247], %213 {strides = array<i32>} : memref<22x288xf32, #tpu.memory_space<vmem>>, vector<22x32xf32>,
    %c1_248 = arith.constant 1 : index
    %c0_249 = arith.constant 0 : index
    %215 = vector.load %arg13[%c1_248, %c0_249] : memref<36x32xf32, #tpu.memory_space<vmem>>, vector<22x32xf32>
    %c0_250 = arith.constant 0 : index
    %c32_251 = arith.constant 32 : index
    %216 = vector.load %arg14[%c0_250, %c32_251] : memref<22x288xf32, #tpu.memory_space<vmem>>, vector<22x32xf32>
    tpu.vector_store %arg14[%c0_250, %c32_251], %215 {strides = array<i32>} : memref<22x288xf32, #tpu.memory_space<vmem>>, vector<22x32xf32>,
    %c2_252 = arith.constant 2 : index
    %c0_253 = arith.constant 0 : index
    %217 = vector.load %arg13[%c2_252, %c0_253] : memref<36x32xf32, #tpu.memory_space<vmem>>, vector<22x32xf32>
    %c0_254 = arith.constant 0 : index
    %c64_255 = arith.constant 64 : index
    %218 = vector.load %arg14[%c0_254, %c64_255] : memref<22x288xf32, #tpu.memory_space<vmem>>, vector<22x32xf32>
    tpu.vector_store %arg14[%c0_254, %c64_255], %217 {strides = array<i32>} : memref<22x288xf32, #tpu.memory_space<vmem>>, vector<22x32xf32>,
    %c6_256 = arith.constant 6 : index
    %c0_257 = arith.constant 0 : index
    %219 = vector.load %arg13[%c6_256, %c0_257] : memref<36x32xf32, #tpu.memory_space<vmem>>, vector<22x32xf32>
    %c0_258 = arith.constant 0 : index
    %c96_259 = arith.constant 96 : index
    %220 = vector.load %arg14[%c0_258, %c96_259] : memref<22x288xf32, #tpu.memory_space<vmem>>, vector<22x32xf32>
    tpu.vector_store %arg14[%c0_258, %c96_259], %219 {strides = array<i32>} : memref<22x288xf32, #tpu.memory_space<vmem>>, vector<22x32xf32>,
    %c7 = arith.constant 7 : index
    %c0_260 = arith.constant 0 : index
    %221 = vector.load %arg13[%c7, %c0_260] : memref<36x32xf32, #tpu.memory_space<vmem>>, vector<22x32xf32>
    %c0_261 = arith.constant 0 : index
    %c128_262 = arith.constant 128 : index
    %222 = vector.load %arg14[%c0_261, %c128_262] : memref<22x288xf32, #tpu.memory_space<vmem>>, vector<22x32xf32>
    tpu.vector_store %arg14[%c0_261, %c128_262], %221 {strides = array<i32>} : memref<22x288xf32, #tpu.memory_space<vmem>>, vector<22x32xf32>,
    %c8 = arith.constant 8 : index
    %c0_263 = arith.constant 0 : index
    %223 = vector.load %arg13[%c8, %c0_263] : memref<36x32xf32, #tpu.memory_space<vmem>>, vector<22x32xf32>
    %c0_264 = arith.constant 0 : index
    %c160 = arith.constant 160 : index
    %224 = vector.load %arg14[%c0_264, %c160] : memref<22x288xf32, #tpu.memory_space<vmem>>, vector<22x32xf32>
    tpu.vector_store %arg14[%c0_264, %c160], %223 {strides = array<i32>} : memref<22x288xf32, #tpu.memory_space<vmem>>, vector<22x32xf32>,
    %c12_265 = arith.constant 12 : index
    %c0_266 = arith.constant 0 : index
    %225 = vector.load %arg13[%c12_265, %c0_266] : memref<36x32xf32, #tpu.memory_space<vmem>>, vector<22x32xf32>
    %c0_267 = arith.constant 0 : index
    %c192 = arith.constant 192 : index
    %226 = vector.load %arg14[%c0_267, %c192] : memref<22x288xf32, #tpu.memory_space<vmem>>, vector<22x32xf32>
    tpu.vector_store %arg14[%c0_267, %c192], %225 {strides = array<i32>} : memref<22x288xf32, #tpu.memory_space<vmem>>, vector<22x32xf32>,
    %c13 = arith.constant 13 : index
    %c0_268 = arith.constant 0 : index
    %227 = vector.load %arg13[%c13, %c0_268] : memref<36x32xf32, #tpu.memory_space<vmem>>, vector<22x32xf32>
    %c0_269 = arith.constant 0 : index
    %c224 = arith.constant 224 : index
    %228 = vector.load %arg14[%c0_269, %c224] : memref<22x288xf32, #tpu.memory_space<vmem>>, vector<22x32xf32>
    tpu.vector_store %arg14[%c0_269, %c224], %227 {strides = array<i32>} : memref<22x288xf32, #tpu.memory_space<vmem>>, vector<22x32xf32>,
    %c14 = arith.constant 14 : index
    %c0_270 = arith.constant 0 : index
    %229 = vector.load %arg13[%c14, %c0_270] : memref<36x32xf32, #tpu.memory_space<vmem>>, vector<22x32xf32>
    %c0_271 = arith.constant 0 : index
    %c256_272 = arith.constant 256 : index
    %230 = vector.load %arg14[%c0_271, %c256_272] : memref<22x288xf32, #tpu.memory_space<vmem>>, vector<22x32xf32>
    tpu.vector_store %arg14[%c0_271, %c256_272], %229 {strides = array<i32>} : memref<22x288xf32, #tpu.memory_space<vmem>>, vector<22x32xf32>,
    %c0_273 = arith.constant 0 : index
    %c0_274 = arith.constant 0 : index
    %231 = vector.load %arg14[%c0_273, %c0_274] : memref<22x288xf32, #tpu.memory_space<vmem>>, vector<22x288xf32>
    %c0_275 = arith.constant 0 : index
    %c0_276 = arith.constant 0 : index
    %232 = vector.load %arg6[%c0_275, %c0_276] : memref<288x64xf32, #tpu.memory_space<vmem>>, vector<288x64xf32>
    %cst_277 = arith.constant dense<0.000000e+00> : vector<22x64xf32>
    %233 = tpu.matmul %231, %232, %cst_277 {dimension_numbers = #tpu.dot_dimension_numbers<[1], [0], [0], [1], [0, 0, 1, 1], [], []>} : vector<22x288xf32>, vector<288x64xf32>, vector<22x64xf32> -> vector<22x64xf32>
    %c0_278 = arith.constant 0 : index
    %c0_279 = arith.constant 0 : index
    %234 = vector.load %arg7[%c0_278, %c0_279] : memref<1x64xf32, #tpu.memory_space<vmem>>, vector<1x64xf32>
    %235 = vector.broadcast %234 : vector<1x64xf32> to vector<22x64xf32>
    %236 = arith.addf %233, %235 : vector<22x64xf32>
    %c0_280 = arith.constant 0 : index
    %c0_281 = arith.constant 0 : index
    %237 = vector.load %arg15[%c0_280, %c0_281] : memref<22x64xf32, #tpu.memory_space<vmem>>, vector<22x64xf32>
    tpu.vector_store %arg15[%c0_280, %c0_281], %236 {strides = array<i32>} : memref<22x64xf32, #tpu.memory_space<vmem>>, vector<22x64xf32>,
    %c0_282 = arith.constant 0 : index
    %c0_283 = arith.constant 0 : index
    %238 = vector.load %arg15[%c0_282, %c0_283] : memref<22x64xf32, #tpu.memory_space<vmem>>, vector<21x64xf32>
    %c1_284 = arith.constant 1 : index
    %c0_285 = arith.constant 0 : index
    %239 = vector.load %arg15[%c1_284, %c0_285] : memref<22x64xf32, #tpu.memory_space<vmem>>, vector<21x64xf32>
    %240 = arith.maximumf %238, %239 : vector<21x64xf32>
    %c0_286 = arith.constant 0 : index
    %c0_287 = arith.constant 0 : index
    %241 = vector.load %arg15[%c0_286, %c0_287] : memref<22x64xf32, #tpu.memory_space<vmem>>, vector<21x64xf32>
    tpu.vector_store %arg15[%c0_286, %c0_287], %240 {strides = array<i32>} : memref<22x64xf32, #tpu.memory_space<vmem>>, vector<21x64xf32>,
    %c0_288 = arith.constant 0 : index
    %c0_289 = arith.constant 0 : index
    %242 = tpu.strided_load %arg15[%c0_288, %c0_289] {strides = array<i32: 2, 1>} : memref<22x64xf32, #tpu.memory_space<vmem>>, vector<2x64xf32>
    %c6_290 = arith.constant 6 : index
    %c0_291 = arith.constant 0 : index
    %243 = tpu.strided_load %arg15[%c6_290, %c0_291] {strides = array<i32: 2, 1>} : memref<22x64xf32, #tpu.memory_space<vmem>>, vector<2x64xf32>
    %244 = arith.maximumf %242, %243 : vector<2x64xf32>
    %c0_292 = arith.constant 0 : index
    %c0_293 = arith.constant 0 : index
    %c0_294 = arith.constant 0 : index
    %245 = vector.load %arg8[%c0_292, %c0_293, %c0_294] : memref<1x4x64xf32, #tpu.memory_space<vmem>>, vector<1x2x64xf32>
    %246 = vector.shape_cast %245 : vector<1x2x64xf32> to vector<2x64xf32>
    %247 = vector.shape_cast %244 : vector<2x64xf32> to vector<1x2x64xf32>
    tpu.vector_store %arg8[%c0_292, %c0_293, %c0_294], %247 {strides = array<i32>} : memref<1x4x64xf32, #tpu.memory_space<vmem>>, vector<1x2x64xf32>,
    %c12_295 = arith.constant 12 : index
    %c0_296 = arith.constant 0 : index
    %248 = tpu.strided_load %arg15[%c12_295, %c0_296] {strides = array<i32: 2, 1>} : memref<22x64xf32, #tpu.memory_space<vmem>>, vector<2x64xf32>
    %c18_297 = arith.constant 18 : index
    %c0_298 = arith.constant 0 : index
    %249 = tpu.strided_load %arg15[%c18_297, %c0_298] {strides = array<i32: 2, 1>} : memref<22x64xf32, #tpu.memory_space<vmem>>, vector<2x64xf32>
    %250 = arith.maximumf %248, %249 : vector<2x64xf32>
    %c0_299 = arith.constant 0 : index
    %c2_300 = arith.constant 2 : index
    %c0_301 = arith.constant 0 : index
    %251 = vector.load %arg8[%c0_299, %c2_300, %c0_301] : memref<1x4x64xf32, #tpu.memory_space<vmem>>, vector<1x2x64xf32>
    %252 = vector.shape_cast %251 : vector<1x2x64xf32> to vector<2x64xf32>
    %253 = vector.shape_cast %250 : vector<2x64xf32> to vector<1x2x64xf32>
    tpu.vector_store %arg8[%c0_299, %c2_300, %c0_301], %253 {strides = array<i32>} : memref<1x4x64xf32, #tpu.memory_space<vmem>>, vector<1x2x64xf32>,
    return
  }
  func.func @transform_0(%arg0: i32) -> (i32, i32, i32) {
    %c0_i32 = arith.constant 0 : i32
    %c0_i32_0 = arith.constant 0 : i32
    %c0_i32_1 = arith.constant 0 : i32
    return %arg0, %c0_i32, %c0_i32_0 : i32, i32, i32
  }
  func.func @transform_1(%arg0: i32) -> (i32, i32) {
    %c0_i32 = arith.constant 0 : i32
    %c0_i32_0 = arith.constant 0 : i32
    %c0_i32_1 = arith.constant 0 : i32
    return %c0_i32, %c0_i32_0 : i32, i32
  }
  func.func @transform_2(%arg0: i32) -> (i32, i32) {
    %c0_i32 = arith.constant 0 : i32
    %c0_i32_0 = arith.constant 0 : i32
    %c0_i32_1 = arith.constant 0 : i32
    return %c0_i32, %c0_i32_0 : i32, i32
  }
  func.func @transform_3(%arg0: i32) -> (i32, i32) {
    %c0_i32 = arith.constant 0 : i32
    %c0_i32_0 = arith.constant 0 : i32
    %c0_i32_1 = arith.constant 0 : i32
    return %c0_i32, %c0_i32_0 : i32, i32
  }
  func.func @transform_4(%arg0: i32) -> (i32, i32) {
    %c0_i32 = arith.constant 0 : i32
    %c0_i32_0 = arith.constant 0 : i32
    %c0_i32_1 = arith.constant 0 : i32
    return %c0_i32, %c0_i32_0 : i32, i32
  }
  func.func @transform_5(%arg0: i32) -> (i32, i32) {
    %c0_i32 = arith.constant 0 : i32
    %c0_i32_0 = arith.constant 0 : i32
    %c0_i32_1 = arith.constant 0 : i32
    return %c0_i32, %c0_i32_0 : i32, i32
  }
  func.func @transform_6(%arg0: i32) -> (i32, i32) {
    %c0_i32 = arith.constant 0 : i32
    %c0_i32_0 = arith.constant 0 : i32
    %c0_i32_1 = arith.constant 0 : i32
    return %c0_i32, %c0_i32_0 : i32, i32
  }
  func.func @transform_7(%arg0: i32) -> (i32, i32, i32) {
    %c0_i32 = arith.constant 0 : i32
    %c0_i32_0 = arith.constant 0 : i32
    %c0_i32_1 = arith.constant 0 : i32
    return %arg0, %c0_i32, %c0_i32_0 : i32, i32, i32
  }
}

</mosaic_0001>

<llo_original>
// kernel: rover_cnn_forward.1
$region0: #{rover_cnn_forward.1}
  #allocation0 [shape = 'u32[]', space=smem, size = 0x4, offset = 0x4, fixed_abs, tag = 'smem constant byte address 0x4 - core index']
  #allocation1 [shape = 'u32[144,128]{1,0:T(1,128)}', space=vmem, size = 0x12000, scoped, tag = 'internal scratch']
  #allocation2 [shape = 'f32[900,16]{1,0:T(8,128)}', space=vmem, size = 0x71000, scoped, tag = 'scratch operand']
  #allocation3 [shape = 'f32[225,16]{1,0:T(8,128)}', space=vmem, size = 0x1d000, scoped, tag = 'scratch operand']
  #allocation4 [shape = 'f32[193,144]{1,0:T(8,128)}', space=vmem, size = 0x32000, scoped, tag = 'scratch operand']
  #allocation5 [shape = 'f32[193,32]{1,0:T(8,128)}', space=vmem, size = 0x19000, scoped, tag = 'scratch operand']
  #allocation6 [shape = 'f32[36,32]{1,0:T(8,128)}', space=vmem, size = 0x5000, scoped, tag = 'scratch operand']
  #allocation7 [shape = 'f32[22,288]{1,0:T(8,128)}', space=vmem, size = 0x9000, scoped, tag = 'scratch operand']
  #allocation8 [shape = 'f32[22,64]{1,0:T(8,128)}', space=vmem, size = 0x3000, scoped, tag = 'scratch operand']
  %s0 = inlined_call_operand.vmem [shape: f32[2,900,27], index: 0, kind: input, shape index: {}]
  %s1 = inlined_call_operand.vmem [shape: f32[27,16], index: 1, kind: input, shape index: {}]
  %s2 = inlined_call_operand.vmem [shape: f32[1,16], index: 2, kind: input, shape index: {}]
  %s3 = inlined_call_operand.vmem [shape: f32[144,32], index: 3, kind: input, shape index: {}]
  %s4 = inlined_call_operand.vmem [shape: f32[1,32], index: 4, kind: input, shape index: {}]
  %s5 = inlined_call_operand.vmem [shape: f32[288,64], index: 5, kind: input, shape index: {}]
  %s6 = inlined_call_operand.vmem [shape: f32[1,64], index: 6, kind: input, shape index: {}]
  %s7 = inlined_call_operand.hbm [shape: f32[2,4,64], index: 7, kind: output, shape index: {}]
  %s8 = sld [smem:[#allocation0]]
  $region61: #{rover_cnn_forward.1} parent=0
    _
  %s10 = ssub.s32 1, %s8
  %s11 = scalar_select 0, %s10, %s8
  $region1: #{rover_cnn_forward.1} parent=0
    #allocation9 [shape = 'u8[4096]{0}', space=vmem, size = 0x1000, scoped, tag = 'output window, operand 0']
    #allocation10 [shape = 's32[2]{0}', space=sflag, size = 0x8, scoped, tag = 'scoped memory for rover_cnn_forward.1']
    %12 = vsyncpa [#allocation10], 0
    %s13 = scalar_lea.sflag [#allocation10], 1
    %14 = vsyncpa %s13, 0
    loop: start=0, step=1, limit=4
    $region2: #{rover_cnn_forward.1} parent=1 // loop_pre_header
      _
    $region3: #{rover_cnn_forward.1} parent=1 // loop_header
      %s16 = sphi 0, %s20
      %p17 = scmp.ge.s32.totalorder %s16, 4
      %s26 = sphi 0, %s28
      %s29 = sphi 0, %s26
      %s30 = sphi 0, %s29
      %s46 = sphi 0, %s30
      %s50 = sphi 0, %s50
      %s52 = sphi 0, %s50
      %s53 = sphi 0, %s52
      %s67 = sphi 0, %s53
      %s71 = sphi 0, %s71
      %s73 = sphi 0, %s71
      %s74 = sphi 0, %s73
      %s88 = sphi 0, %s74
      %s92 = sphi 0, %s92
      %s94 = sphi 0, %s92
      %s95 = sphi 0, %s94
      %s109 = sphi 0, %s95
      %s113 = sphi 0, %s113
      %s115 = sphi 0, %s113
      %s116 = sphi 0, %s115
      %s130 = sphi 0, %s116
      %s134 = sphi 0, %s134
      %s136 = sphi 0, %s134
      %s137 = sphi 0, %s136
      %s151 = sphi 0, %s137
      %s155 = sphi 0, %s155
      %s157 = sphi 0, %s155
      %s158 = sphi 0, %s157
      %s172 = sphi 0, %s158
      %s178 = sphi 0, %s180
      %s181 = sphi 0, %s178
      %s182 = sphi 0, %s181
      %s198 = sphi 0, %s182
    $region4: #{rover_cnn_forward.1} parent=1 // loop_header_branch
      %19 = sbr.rel (%p17) target = $region8
    $region5: #{rover_cnn_forward.1} parent=1 // loop_body
      %s21 = ssub.s32 %s16, 1
      %s22 = ssub.s32 %s16, 2
      %s23 = sadd.s32 %s16, 1
      %s24 = ssub.s32 %s16, %s23
      %p25 = scmp.eq.s32.totalorder %s24, 0
      %s27 = sadd.s32 %s26, 1
      %s28 = scalar_select %p25, %s26, %s27
      %p31 = pneg %p25
      %p32 = scmp.eq.s32.totalorder %s16, 1
      %p33 = por %p31, %p32
      %p34 = scmp.ne.s32.totalorder %s26, %s29
      %p35 = scmp.eq.s32.totalorder %s16, 0
      %p36 = por %p34, %p35
      %p37 = scmp.ne.s32.totalorder %s26, %s29
      %p38 = scmp.eq.s32.totalorder %s21, 1
      %p39 = por %p37, %p38
      %p40 = scmp.ne.s32.totalorder %s29, %s30
      %p41 = scmp.eq.s32.totalorder %s21, 0
      %p42 = por %p40, %p41
      %p43 = scmp.ne.s32.totalorder %s29, %s30
      %p44 = scmp.eq.s32.totalorder %s22, 1
      %p45 = por %p43, %p44
      %p47 = scmp.ne.s32.totalorder %s30, %s46
      %p48 = scmp.eq.s32.totalorder %s22, 0
      %p49 = por %p47, %p48
      %s51 = sadd.s32 %s50, 1
      %p54 = scmp.eq.s32.totalorder %s16, 1
      %p55 = scmp.ne.s32.totalorder %s50, %s52
      %p56 = scmp.eq.s32.totalorder %s16, 0
      %p57 = por %p55, %p56
      %p58 = scmp.ne.s32.totalorder %s50, %s52
      %p59 = scmp.eq.s32.totalorder %s21, 1
      %p60 = por %p58, %p59
      %p61 = scmp.ne.s32.totalorder %s52, %s53
      %p62 = scmp.eq.s32.totalorder %s21, 0
      %p63 = por %p61, %p62
      %p64 = scmp.ne.s32.totalorder %s52, %s53
      %p65 = scmp.eq.s32.totalorder %s22, 1
      %p66 = por %p64, %p65
      %p68 = scmp.ne.s32.totalorder %s53, %s67
      %p69 = scmp.eq.s32.totalorder %s22, 0
      %p70 = por %p68, %p69
      %s72 = sadd.s32 %s71, 1
      %p75 = scmp.eq.s32.totalorder %s16, 1
      %p76 = scmp.ne.s32.totalorder %s71, %s73
      %p77 = scmp.eq.s32.totalorder %s16, 0
      %p78 = por %p76, %p77
      %p79 = scmp.ne.s32.totalorder %s71, %s73
      %p80 = scmp.eq.s32.totalorder %s21, 1
      %p81 = por %p79, %p80
      %p82 = scmp.ne.s32.totalorder %s73, %s74
      %p83 = scmp.eq.s32.totalorder %s21, 0
      %p84 = por %p82, %p83
      %p85 = scmp.ne.s32.totalorder %s73, %s74
      %p86 = scmp.eq.s32.totalorder %s22, 1
      %p87 = por %p85, %p86
      %p89 = scmp.ne.s32.totalorder %s74, %s88
      %p90 = scmp.eq.s32.totalorder %s22, 0
      %p91 = por %p89, %p90
      %s93 = sadd.s32 %s92, 1
      %p96 = scmp.eq.s32.totalorder %s16, 1
      %p97 = scmp.ne.s32.totalorder %s92, %s94
      %p98 = scmp.eq.s32.totalorder %s16, 0
      %p99 = por %p97, %p98
      %p100 = scmp.ne.s32.totalorder %s92, %s94
      %p101 = scmp.eq.s32.totalorder %s21, 1
      %p102 = por %p100, %p101
      %p103 = scmp.ne.s32.totalorder %s94, %s95
      %p104 = scmp.eq.s32.totalorder %s21, 0
      %p105 = por %p103, %p104
      %p106 = scmp.ne.s32.totalorder %s94, %s95
      %p107 = scmp.eq.s32.totalorder %s22, 1
      %p108 = por %p106, %p107
      %p110 = scmp.ne.s32.totalorder %s95, %s109
      %p111 = scmp.eq.s32.totalorder %s22, 0
      %p112 = por %p110, %p111
      %s114 = sadd.s32 %s113, 1
      %p117 = scmp.eq.s32.totalorder %s16, 1
      %p118 = scmp.ne.s32.totalorder %s113, %s115
      %p119 = scmp.eq.s32.totalorder %s16, 0
      %p120 = por %p118, %p119
      %p121 = scmp.ne.s32.totalorder %s113, %s115
      %p122 = scmp.eq.s32.totalorder %s21, 1
      %p123 = por %p121, %p122
      %p124 = scmp.ne.s32.totalorder %s115, %s116
      %p125 = scmp.eq.s32.totalorder %s21, 0
      %p126 = por %p124, %p125
      %p127 = scmp.ne.s32.totalorder %s115, %s116
      %p128 = scmp.eq.s32.totalorder %s22, 1
      %p129 = por %p127, %p128
      %p131 = scmp.ne.s32.totalorder %s116, %s130
      %p132 = scmp.eq.s32.totalorder %s22, 0
      %p133 = por %p131, %p132
      %s135 = sadd.s32 %s134, 1
      %p138 = scmp.eq.s32.totalorder %s16, 1
      %p139 = scmp.ne.s32.totalorder %s134, %s136
      %p140 = scmp.eq.s32.totalorder %s16, 0
      %p141 = por %p139, %p140
      %p142 = scmp.ne.s32.totalorder %s134, %s136
      %p143 = scmp.eq.s32.totalorder %s21, 1
      %p144 = por %p142, %p143
      %p145 = scmp.ne.s32.totalorder %s136, %s137
      %p146 = scmp.eq.s32.totalorder %s21, 0
      %p147 = por %p145, %p146
      %p148 = scmp.ne.s32.totalorder %s136, %s137
      %p149 = scmp.eq.s32.totalorder %s22, 1
      %p150 = por %p148, %p149
      %p152 = scmp.ne.s32.totalorder %s137, %s151
      %p153 = scmp.eq.s32.totalorder %s22, 0
      %p154 = por %p152, %p153
      %s156 = sadd.s32 %s155, 1
      %p159 = scmp.eq.s32.totalorder %s16, 1
      %p160 = scmp.ne.s32.totalorder %s155, %s157
      %p161 = scmp.eq.s32.totalorder %s16, 0
      %p162 = por %p160, %p161
      %p163 = scmp.ne.s32.totalorder %s155, %s157
      %p164 = scmp.eq.s32.totalorder %s21, 1
      %p165 = por %p163, %p164
      %p166 = scmp.ne.s32.totalorder %s157, %s158
      %p167 = scmp.eq.s32.totalorder %s21, 0
      %p168 = por %p166, %p167
      %p169 = scmp.ne.s32.totalorder %s157, %s158
      %p170 = scmp.eq.s32.totalorder %s22, 1
      %p171 = por %p169, %p170
      %p173 = scmp.ne.s32.totalorder %s158, %s172
      %p174 = scmp.eq.s32.totalorder %s22, 0
      %p175 = por %p173, %p174
      %s176 = ssub.s32 %s16, %s23
      %p177 = scmp.eq.s32.totalorder %s176, 0
      %s179 = sadd.s32 %s178, 1
      %s180 = scalar_select %p177, %s178, %s179
      %p183 = pneg %p177
      %p184 = scmp.eq.s32.totalorder %s16, 1
      %p185 = por %p183, %p184
      %p186 = scmp.ne.s32.totalorder %s178, %s181
      %p187 = scmp.eq.s32.totalorder %s16, 0
      %p188 = por %p186, %p187
      %p189 = scmp.ne.s32.totalorder %s178, %s181
      %p190 = scmp.eq.s32.totalorder %s21, 1
      %p191 = por %p189, %p190
      %p192 = scmp.ne.s32.totalorder %s181, %s182
      %p193 = scmp.eq.s32.totalorder %s21, 0
      %p194 = por %p192, %p193
      %p195 = scmp.ne.s32.totalorder %s181, %s182
      %p196 = scmp.eq.s32.totalorder %s22, 1
      %p197 = por %p195, %p196
      %p199 = scmp.ne.s32.totalorder %s182, %s198
      %p200 = scmp.eq.s32.totalorder %s22, 0
      %p201 = por %p199, %p200
      %p202 = scmp.le.s32.totalorder 1, %s16
      %p203 = scmp.lt.s32.totalorder %s16, 3
      %p204 = pnand %p202, %p203
      %p205 = pneg %p204
      // Predicated region
      $region9: #{rover_cnn_forward.1} parent=5 // pred_check
        _
      $region10: #{rover_cnn_forward.1} parent=5 // pred_check_branch
        %207 = sbr.rel (%p204) target = $region12
      $region11: #{rover_cnn_forward.1} parent=5 // pred_region
        %s208 = ssub.s32 %s16, 1
        // Predicated region
        $region13: #{rover_cnn_forward.1} parent=11 // pred_check
          %p209 = pneg %p63
        $region14: #{rover_cnn_forward.1} parent=11 // pred_check_branch
          %211 = sbr.rel (%p209) target = $region16
        $region15: #{rover_cnn_forward.1} parent=11 // pred_region
          _
        $region16: #{rover_cnn_forward.1} parent=11 // pred_fallthru
          _
        // Predicated region
        $region17: #{rover_cnn_forward.1} parent=11 // pred_check
          %p212 = pneg %p84
        $region18: #{rover_cnn_forward.1} parent=11 // pred_check_branch
          %214 = sbr.rel (%p212) target = $region20
        $region19: #{rover_cnn_forward.1} parent=11 // pred_region
          _
        $region20: #{rover_cnn_forward.1} parent=11 // pred_fallthru
          _
        // Predicated region
        $region21: #{rover_cnn_forward.1} parent=11 // pred_check
          %p215 = pneg %p105
        $region22: #{rover_cnn_forward.1} parent=11 // pred_check_branch
          %217 = sbr.rel (%p215) target = $region24
        $region23: #{rover_cnn_forward.1} parent=11 // pred_region
          _
        $region24: #{rover_cnn_forward.1} parent=11 // pred_fallthru
          _
        // Predicated region
        $region25: #{rover_cnn_forward.1} parent=11 // pred_check
          %p218 = pneg %p126
        $region26: #{rover_cnn_forward.1} parent=11 // pred_check_branch
          %220 = sbr.rel (%p218) target = $region28
        $region27: #{rover_cnn_forward.1} parent=11 // pred_region
          _
        $region28: #{rover_cnn_forward.1} parent=11 // pred_fallthru
          _
        // Predicated region
        $region29: #{rover_cnn_forward.1} parent=11 // pred_check
          %p221 = pneg %p147
        $region30: #{rover_cnn_forward.1} parent=11 // pred_check_branch
          %223 = sbr.rel (%p221) target = $region32
        $region31: #{rover_cnn_forward.1} parent=11 // pred_region
          _
        $region32: #{rover_cnn_forward.1} parent=11 // pred_fallthru
          _
        // Predicated region
        $region33: #{rover_cnn_forward.1} parent=11 // pred_check
          %p224 = pneg %p168
        $region34: #{rover_cnn_forward.1} parent=11 // pred_check_branch
          %226 = sbr.rel (%p224) target = $region36
        $region35: #{rover_cnn_forward.1} parent=11 // pred_region
          _
        $region36: #{rover_cnn_forward.1} parent=11 // pred_fallthru
          _
      $region12: #{rover_cnn_forward.1} parent=5 // pred_fallthru
        _
      %p227 = scmp.lt.s32.totalorder %s16, 2
      // Predicated region
      $region37: #{rover_cnn_forward.1} parent=5 // pred_check
        %p228 = pneg %p227
      $region38: #{rover_cnn_forward.1} parent=5 // pred_check_branch
        %230 = sbr.rel (%p228) target = $region40
      $region39: #{rover_cnn_forward.1} parent=5 // pred_region
        // Predicated region
        $region41: #{rover_cnn_forward.1} parent=39 // pred_check
          %p231 = pneg %p36
        $region42: #{rover_cnn_forward.1} parent=39 // pred_check_branch
          %233 = sbr.rel (%p231) target = $region44
        $region43: #{rover_cnn_forward.1} parent=39 // pred_region
          %p234 = scmp.lt.s32.totalorder %s16, 1
          %s235 = scalar_select %p234, %s16, 1
          %s236 = smul.addr %s235, 113
          %s237 = smul.addr %s236, 8
          %s238 = scalar_lea.vmem %s0, %s237
        $region44: #{rover_cnn_forward.1} parent=39 // pred_fallthru
          _
      $region40: #{rover_cnn_forward.1} parent=5 // pred_fallthru
        _
      %p239 = scmp.le.s32.totalorder 1, %s16
      %p240 = scmp.lt.s32.totalorder %s16, 3
      %p241 = pnand %p239, %p240
      %p242 = pneg %p241
      // Predicated region
      $region45: #{rover_cnn_forward.1} parent=5 // pred_check
        _
      $region46: #{rover_cnn_forward.1} parent=5 // pred_check_branch
        %244 = sbr.rel (%p241) target = $region48
      $region47: #{rover_cnn_forward.1} parent=5 // pred_region
        %s245 = ssub.s32 %s16, 1
        %p246 = scmp.lt.s32.totalorder %s21, 1
        %s247 = scalar_select %p246, %s21, 1
        %s248 = smul.addr %s247, 113
        %s249 = smul.addr %s248, 8
        %s250 = scalar_lea.vmem %s0, %s249
        %p251 = pneg %p42
        %p252 = pneg %p39
        %p253 = pneg %p63
        %p254 = pneg %p60
        %p255 = pneg %p84
        %p256 = pneg %p81
        %p257 = pneg %p105
        %p258 = pneg %p102
        %p259 = pneg %p126
        %p260 = pneg %p123
        %p261 = pneg %p147
        %p262 = pneg %p144
        %p263 = pneg %p168
        %p264 = pneg %p165
        %p265 = pneg %p194
        %p266 = pneg %p191
        %s267 = sand.u32 %s181, 1
        %s268 = scalar_lea.sflag [#allocation10], %s267
        %s269 = sand.u32 %s181, 1
        %s270 = smul.addr %s269, 4
        %s271 = scalar_lea.vmem [#allocation9], %s270
        %p272 = scmp.lt.s32.totalorder %s21, 1
        %s273 = scalar_select %p272, %s21, 1
        %s274 = smul.addr %s273, 113
        %s275 = smul.addr %s274, 8
        %s276 = scalar_lea.vmem %s0, %s275
        %v277 = vld [vmem:[%s276] sm:$0xff]
        %v278 = vld [vmem:[%s276 + $0x8] sm:$0xff]
        %v279 = vld [vmem:[%s276 + $0x10] sm:$0xff]
        %v280 = vld [vmem:[%s276 + $0x18] sm:$0xff]
        %v281 = vld [vmem:[%s276 + $0x20] sm:$0xff]
        %v282 = vld [vmem:[%s276 + $0x28] sm:$0xff]
        %v283 = vld [vmem:[%s276 + $0x30] sm:$0xff]
        %v284 = vld [vmem:[%s276 + $0x38] sm:$0xff]
        %v285 = vld [vmem:[%s276 + $0x40] sm:$0xff]
        %v286 = vld [vmem:[%s276 + $0x48] sm:$0xff]
        %v287 = vld [vmem:[%s276 + $0x50] sm:$0xff]
        %v288 = vld [vmem:[%s276 + $0x58] sm:$0xff]
        %v289 = vld [vmem:[%s276 + $0x60] sm:$0xff]
        %v290 = vld [vmem:[%s276 + $0x68] sm:$0xff]
        %v291 = vld [vmem:[%s276 + $0x70] sm:$0xff]
        %v292 = vld [vmem:[%s276 + $0x78] sm:$0xff]
        %v293 = vld [vmem:[%s1] sm:$0xff]
        %v294 = vld [vmem:[%s1 + $0x8] sm:$0xff]
        %v295 = vld [vmem:[%s1 + $0x10] sm:$0xff]
        %v296 = vld [vmem:[%s1 + $0x18] sm:$0x7]
        %v297 = vld [vmem:[%s2] sm:$0x1]
        %v299 = vlaneseq
        %v300 = vshrl.u32 %v299, 7
        %v301 = vsub.s32 0, %v300
        %v302 = vrot.slane %v297, %v301
        %vm304 = vcmask 220160
        %v306 = vsel %vm304, %v277, 0
        %v309 = vsel %vm304, %v278, 0
        %v312 = vsel %vm304, %v279, 0
        %v315 = vsel %vm304, %v280, 0
        %v318 = vsel %vm304, %v281, 0
        %v321 = vsel %vm304, %v282, 0
        %v324 = vsel %vm304, %v283, 0
        %v327 = vsel %vm304, %v284, 0
        %v330 = vsel %vm304, %v285, 0
        %v333 = vsel %vm304, %v286, 0
        %v336 = vsel %vm304, %v287, 0
        %v339 = vsel %vm304, %v288, 0
        %v342 = vsel %vm304, %v289, 0
        %v345 = vsel %vm304, %v290, 0
        %v348 = vsel %vm304, %v291, 0
        %v351 = vsel %vm304, %v292, 0
        %vm353 = vcmask 1042432
        %v355 = vsel %vm353, %v296, 0
        %357 = vmatprep.subr.mxu0 0.0
        %358 = vmatpush1.msra.mxu0 0.0
        %359 = vmatprep.subr.mxu0 0.0
        %360 = vmatpush1.msra.mxu0 0.0
        %361 = vmatprep.subr.mxu0 0.0
        %362 = vmatpush1.msra.mxu0 0.0
        %363 = vmatprep.subr.mxu0 0.0
        %364 = vmatpush1.msra.mxu0 0.0
        %365 = vmatprep.subr.mxu0 0.0
        %366 = vmatpush1.msra.mxu0 0.0
        %367 = vmatprep.subr.mxu0 0.0
        %368 = vmatpush1.msra.mxu0 0.0
        %369 = vmatprep.subr.mxu0 0.0
        %370 = vmatpush1.msra.mxu0 0.0
        %371 = vmatprep.subr.mxu0 0.0
        %372 = vmatpush1.msra.mxu0 0.0
        %373 = vmatprep.subr.mxu0 0.0
        %374 = vmatpush1.msra.mxu0 0.0
        %375 = vmatprep.subr.mxu0 0.0
        %376 = vmatpush1.msra.mxu0 0.0
        %377 = vmatprep.subr.mxu0 0.0
        %378 = vmatpush1.msra.mxu0 0.0
        %379 = vmatprep.subr.mxu0 0.0
        %380 = vmatpush1.msra.mxu0 0.0
        %381 = vmatprep.subr.mxu0 0.0
        %382 = vmatpush1.msra.mxu0 %v355
        %383 = vmatprep.subr.mxu0 0.0
        %384 = vmatpush1.msra.mxu0 %v295
        %385 = vmatprep.subr.mxu0 0.0
        %386 = vmatpush1.msra.mxu0 %v294
        %387 = vmatprep.subr.mxu0 0.0
        %388 = vmatpush1.msra.mxu0 %v293
        %389 = vmatprep.subr.mxu0 0.0
        %390 = vmatpush2.msra.mxu0 0.0
        %391 = vmatprep.subr.mxu0 0.0
        %392 = vmatpush2.msra.mxu0 0.0
        %393 = vmatprep.subr.mxu0 0.0
        %394 = vmatpush2.msra.mxu0 0.0
        %395 = vmatprep.subr.mxu0 0.0
        %396 = vmatpush2.msra.mxu0 0.0
        %397 = vmatprep.subr.mxu0 0.0
        %398 = vmatpush2.msra.mxu0 0.0
        %399 = vmatprep.subr.mxu0 0.0
        %400 = vmatpush2.msra.mxu0 0.0
        %401 = vmatprep.subr.mxu0 0.0
        %402 = vmatpush2.msra.mxu0 0.0
        %403 = vmatprep.subr.mxu0 0.0
        %404 = vmatpush2.msra.mxu0 0.0
        %405 = vmatprep.subr.mxu0 0.0
        %406 = vmatpush2.msra.mxu0 0.0
        %407 = vmatprep.subr.mxu0 0.0
        %408 = vmatpush2.msra.mxu0 0.0
        %409 = vmatprep.subr.mxu0 0.0
        %410 = vmatpush2.msra.mxu0 0.0
        %411 = vmatprep.subr.mxu0 0.0
        %412 = vmatpush2.msra.mxu0 0.0
        %413 = vmatprep.subr.mxu0 0.0
        %414 = vmatpush2.msra.mxu0 0.0
        %415 = vmatprep.subr.mxu0 0.0
        %416 = vmatpush2.msra.mxu0 0.0
        %417 = vmatprep.subr.mxu0 0.0
        %418 = vmatpush2.msra.mxu0 0.0
        %419 = vmatprep.subr.mxu0 0.0
        %420 = vmatpush2.msra.mxu0 0.0
        %421 = vmatprep.mubr.f32.mxu0 0.0
        %422 = vmatmul.mubr.f32.gmra.mxu0 %v306
        %v423 = vpop.f32.mrf.mxu0
        %v424 = vadd.f32 %v302, %v423
        %v425 = vpop.f32.mrf.mxu0
        %426 = vmatprep.mubr.f32.mxu0 0.0
        %427 = vmatmul.mubr.f32.gmra.mxu0 %v309
        %v428 = vpop.f32.mrf.mxu0
        %v429 = vadd.f32 %v302, %v428
        %v430 = vpop.f32.mrf.mxu0
        %431 = vmatprep.mubr.f32.mxu0 0.0
        %432 = vmatmul.mubr.f32.gmra.mxu0 %v312
        %v433 = vpop.f32.mrf.mxu0
        %v434 = vadd.f32 %v302, %v433
        %v435 = vpop.f32.mrf.mxu0
        %436 = vmatprep.mubr.f32.mxu0 0.0
        %437 = vmatmul.mubr.f32.gmra.mxu0 %v315
        %v438 = vpop.f32.mrf.mxu0
        %v439 = vadd.f32 %v302, %v438
        %v440 = vpop.f32.mrf.mxu0
        %441 = vmatprep.mubr.f32.mxu0 0.0
        %442 = vmatmul.mubr.f32.gmra.mxu0 %v318
        %v443 = vpop.f32.mrf.mxu0
        %v444 = vadd.f32 %v302, %v443
        %v445 = vpop.f32.mrf.mxu0
        %446 = vmatprep.mubr.f32.mxu0 0.0
        %447 = vmatmul.mubr.f32.gmra.mxu0 %v321
        %v448 = vpop.f32.mrf.mxu0
        %v449 = vadd.f32 %v302, %v448
        %v450 = vpop.f32.mrf.mxu0
        %451 = vmatprep.mubr.f32.mxu0 0.0
        %452 = vmatmul.mubr.f32.gmra.mxu0 %v324
        %v453 = vpop.f32.mrf.mxu0
        %v454 = vadd.f32 %v302, %v453
        %v455 = vpop.f32.mrf.mxu0
        %456 = vmatprep.mubr.f32.mxu0 0.0
        %457 = vmatmul.mubr.f32.gmra.mxu0 %v327
        %v458 = vpop.f32.mrf.mxu0
        %v459 = vadd.f32 %v302, %v458
        %v460 = vpop.f32.mrf.mxu0
        %461 = vmatprep.mubr.f32.mxu0 0.0
        %462 = vmatmul.mubr.f32.gmra.mxu0 %v330
        %v463 = vpop.f32.mrf.mxu0
        %v464 = vadd.f32 %v302, %v463
        %v465 = vpop.f32.mrf.mxu0
        %466 = vmatprep.mubr.f32.mxu0 0.0
        %467 = vmatmul.mubr.f32.gmra.mxu0 %v333
        %v468 = vpop.f32.mrf.mxu0
        %v469 = vadd.f32 %v302, %v468
        %v470 = vpop.f32.mrf.mxu0
        %471 = vmatprep.mubr.f32.mxu0 0.0
        %472 = vmatmul.mubr.f32.gmra.mxu0 %v336
        %v473 = vpop.f32.mrf.mxu0
        %v474 = vadd.f32 %v302, %v473
        %v475 = vpop.f32.mrf.mxu0
        %476 = vmatprep.mubr.f32.mxu0 0.0
        %477 = vmatmul.mubr.f32.gmra.mxu0 %v339
        %v478 = vpop.f32.mrf.mxu0
        %v479 = vadd.f32 %v302, %v478
        %v480 = vpop.f32.mrf.mxu0
        %481 = vmatprep.mubr.f32.mxu0 0.0
        %482 = vmatmul.mubr.f32.gmra.mxu0 %v342
        %v483 = vpop.f32.mrf.mxu0
        %v484 = vadd.f32 %v302, %v483
        %v485 = vpop.f32.mrf.mxu0
        %486 = vmatprep.mubr.f32.mxu0 0.0
        %487 = vmatmul.mubr.f32.gmra.mxu0 %v345
        %v488 = vpop.f32.mrf.mxu0
        %v489 = vadd.f32 %v302, %v488
        %v490 = vpop.f32.mrf.mxu0
        %491 = vmatprep.mubr.f32.mxu0 0.0
        %492 = vmatmul.mubr.f32.gmra.mxu0 %v348
        %v493 = vpop.f32.mrf.mxu0
        %v494 = vadd.f32 %v302, %v493
        %v495 = vpop.f32.mrf.mxu0
        %496 = vmatprep.mubr.f32.mxu0 0.0
        %497 = vmatmul.mubr.f32.gmra.mxu0 %v351
        %v498 = vpop.f32.mrf.mxu0
        %v499 = vadd.f32 %v302, %v498
        %v500 = vpop.f32.mrf.mxu0
        %501 = vdwg.mxu0
        %vm502 = vcmask 130048
        %503 = vst.msk [vmem:[#allocation2] sm:$0xff] %vm502, %v424
        %504 = vst.msk [vmem:[#allocation2 + $0x8] sm:$0xff] %vm502, %v429
        %505 = vst.msk [vmem:[#allocation2 + $0x10] sm:$0xff] %vm502, %v434
        %506 = vst.msk [vmem:[#allocation2 + $0x18] sm:$0xff] %vm502, %v439
        %507 = vst.msk [vmem:[#allocation2 + $0x20] sm:$0xff] %vm502, %v444
        %508 = vst.msk [vmem:[#allocation2 + $0x28] sm:$0xff] %vm502, %v449
        %509 = vst.msk [vmem:[#allocation2 + $0x30] sm:$0xff] %vm502, %v454
        %510 = vst.msk [vmem:[#allocation2 + $0x38] sm:$0xff] %vm502, %v459
        %511 = vst.msk [vmem:[#allocation2 + $0x40] sm:$0xff] %vm502, %v464
        %512 = vst.msk [vmem:[#allocation2 + $0x48] sm:$0xff] %vm502, %v469
        %513 = vst.msk [vmem:[#allocation2 + $0x50] sm:$0xff] %vm502, %v474
        %514 = vst.msk [vmem:[#allocation2 + $0x58] sm:$0xff] %vm502, %v479
        %515 = vst.msk [vmem:[#allocation2 + $0x60] sm:$0xff] %vm502, %v484
        %516 = vst.msk [vmem:[#allocation2 + $0x68] sm:$0xff] %vm502, %v489
        %517 = vst.msk [vmem:[#allocation2 + $0x70] sm:$0xff] %vm502, %v494
        %518 = vst.msk [vmem:[#allocation2 + $0x78] sm:$0xff] %vm502, %v499
        %v519 = vld [vmem:[%s276 + $0x80] sm:$0xff]
        %v520 = vld [vmem:[%s276 + $0x88] sm:$0xff]
        %v521 = vld [vmem:[%s276 + $0x90] sm:$0xff]
        %v522 = vld [vmem:[%s276 + $0x98] sm:$0xff]
        %v523 = vld [vmem:[%s276 + $0xa0] sm:$0xff]
        %v524 = vld [vmem:[%s276 + $0xa8] sm:$0xff]
        %v525 = vld [vmem:[%s276 + $0xb0] sm:$0xff]
        %v526 = vld [vmem:[%s276 + $0xb8] sm:$0xff]
        %v527 = vld [vmem:[%s276 + $0xc0] sm:$0xff]
        %v528 = vld [vmem:[%s276 + $0xc8] sm:$0xff]
        %v529 = vld [vmem:[%s276 + $0xd0] sm:$0xff]
        %v530 = vld [vmem:[%s276 + $0xd8] sm:$0xff]
        %v531 = vld [vmem:[%s276 + $0xe0] sm:$0xff]
        %v532 = vld [vmem:[%s276 + $0xe8] sm:$0xff]
        %v533 = vld [vmem:[%s276 + $0xf0] sm:$0xff]
        %v534 = vld [vmem:[%s276 + $0xf8] sm:$0xff]
        %v535 = vld [vmem:[%s1] sm:$0xff]
        %v536 = vld [vmem:[%s1 + $0x8] sm:$0xff]
        %v537 = vld [vmem:[%s1 + $0x10] sm:$0xff]
        %v538 = vld [vmem:[%s1 + $0x18] sm:$0x7]
        %v539 = vld [vmem:[%s2] sm:$0x1]
        %v541 = vlaneseq
        %v542 = vshrl.u32 %v541, 7
        %v543 = vsub.s32 0, %v542
        %v544 = vrot.slane %v539, %v543
        %v547 = vsel %vm304, %v519, 0
        %v550 = vsel %vm304, %v520, 0
        %v553 = vsel %vm304, %v521, 0
        %v556 = vsel %vm304, %v522, 0
        %v559 = vsel %vm304, %v523, 0
        %v562 = vsel %vm304, %v524, 0
        %v565 = vsel %vm304, %v525, 0
        %v568 = vsel %vm304, %v526, 0
        %v571 = vsel %vm304, %v527, 0
        %v574 = vsel %vm304, %v528, 0
        %v577 = vsel %vm304, %v529, 0
        %v580 = vsel %vm304, %v530, 0
        %v583 = vsel %vm304, %v531, 0
        %v586 = vsel %vm304, %v532, 0
        %v589 = vsel %vm304, %v533, 0
        %v592 = vsel %vm304, %v534, 0
        %v595 = vsel %vm353, %v538, 0
        %597 = vmatprep.subr.mxu0 0.0
        %598 = vmatpush1.msra.mxu0 0.0
        %599 = vmatprep.subr.mxu0 0.0
        %600 = vmatpush1.msra.mxu0 0.0
        %601 = vmatprep.subr.mxu0 0.0
        %602 = vmatpush1.msra.mxu0 0.0
        %603 = vmatprep.subr.mxu0 0.0
        %604 = vmatpush1.msra.mxu0 0.0
        %605 = vmatprep.subr.mxu0 0.0
        %606 = vmatpush1.msra.mxu0 0.0
        %607 = vmatprep.subr.mxu0 0.0
        %608 = vmatpush1.msra.mxu0 0.0
        %609 = vmatprep.subr.mxu0 0.0
        %610 = vmatpush1.msra.mxu0 0.0
        %611 = vmatprep.subr.mxu0 0.0
        %612 = vmatpush1.msra.mxu0 0.0
        %613 = vmatprep.subr.mxu0 0.0
        %614 = vmatpush1.msra.mxu0 0.0
        %615 = vmatprep.subr.mxu0 0.0
        %616 = vmatpush1.msra.mxu0 0.0
        %617 = vmatprep.subr.mxu0 0.0
        %618 = vmatpush1.msra.mxu0 0.0
        %619 = vmatprep.subr.mxu0 0.0
        %620 = vmatpush1.msra.mxu0 0.0
        %621 = vmatprep.subr.mxu0 0.0
        %622 = vmatpush1.msra.mxu0 %v595
        %623 = vmatprep.subr.mxu0 0.0
        %624 = vmatpush1.msra.mxu0 %v537
        %625 = vmatprep.subr.mxu0 0.0
        %626 = vmatpush1.msra.mxu0 %v536
        %627 = vmatprep.subr.mxu0 0.0
        %628 = vmatpush1.msra.mxu0 %v535
        %629 = vmatprep.subr.mxu0 0.0
        %630 = vmatpush2.msra.mxu0 0.0
        %631 = vmatprep.subr.mxu0 0.0
        %632 = vmatpush2.msra.mxu0 0.0
        %633 = vmatprep.subr.mxu0 0.0
        %634 = vmatpush2.msra.mxu0 0.0
        %635 = vmatprep.subr.mxu0 0.0
        %636 = vmatpush2.msra.mxu0 0.0
        %637 = vmatprep.subr.mxu0 0.0
        %638 = vmatpush2.msra.mxu0 0.0
        %639 = vmatprep.subr.mxu0 0.0
        %640 = vmatpush2.msra.mxu0 0.0
        %641 = vmatprep.subr.mxu0 0.0
        %642 = vmatpush2.msra.mxu0 0.0
        %643 = vmatprep.subr.mxu0 0.0
        %644 = vmatpush2.msra.mxu0 0.0
        %645 = vmatprep.subr.mxu0 0.0
        %646 = vmatpush2.msra.mxu0 0.0
        %647 = vmatprep.subr.mxu0 0.0
        %648 = vmatpush2.msra.mxu0 0.0
        %649 = vmatprep.subr.mxu0 0.0
        %650 = vmatpush2.msra.mxu0 0.0
        %651 = vmatprep.subr.mxu0 0.0
        %652 = vmatpush2.msra.mxu0 0.0
        %653 = vmatprep.subr.mxu0 0.0
        %654 = vmatpush2.msra.mxu0 0.0
        %655 = vmatprep.subr.mxu0 0.0
        %656 = vmatpush2.msra.mxu0 0.0
        %657 = vmatprep.subr.mxu0 0.0
        %658 = vmatpush2.msra.mxu0 0.0
        %659 = vmatprep.subr.mxu0 0.0
        %660 = vmatpush2.msra.mxu0 0.0
        %661 = vmatprep.mubr.f32.mxu0 0.0
        %662 = vmatmul.mubr.f32.gmra.mxu0 %v547
        %v663 = vpop.f32.mrf.mxu0
        %v664 = vadd.f32 %v544, %v663
        %v665 = vpop.f32.mrf.mxu0
        %666 = vmatprep.mubr.f32.mxu0 0.0
        %667 = vmatmul.mubr.f32.gmra.mxu0 %v550
        %v668 = vpop.f32.mrf.mxu0
        %v669 = vadd.f32 %v544, %v668
        %v670 = vpop.f32.mrf.mxu0
        %671 = vmatprep.mubr.f32.mxu0 0.0
        %672 = vmatmul.mubr.f32.gmra.mxu0 %v553
        %v673 = vpop.f32.mrf.mxu0
        %v674 = vadd.f32 %v544, %v673
        %v675 = vpop.f32.mrf.mxu0
        %676 = vmatprep.mubr.f32.mxu0 0.0
        %677 = vmatmul.mubr.f32.gmra.mxu0 %v556
        %v678 = vpop.f32.mrf.mxu0
        %v679 = vadd.f32 %v544, %v678
        %v680 = vpop.f32.mrf.mxu0
        %681 = vmatprep.mubr.f32.mxu0 0.0
        %682 = vmatmul.mubr.f32.gmra.mxu0 %v559
        %v683 = vpop.f32.mrf.mxu0
        %v684 = vadd.f32 %v544, %v683
        %v685 = vpop.f32.mrf.mxu0
        %686 = vmatprep.mubr.f32.mxu0 0.0
        %687 = vmatmul.mubr.f32.gmra.mxu0 %v562
        %v688 = vpop.f32.mrf.mxu0
        %v689 = vadd.f32 %v544, %v688
        %v690 = vpop.f32.mrf.mxu0
        %691 = vmatprep.mubr.f32.mxu0 0.0
        %692 = vmatmul.mubr.f32.gmra.mxu0 %v565
        %v693 = vpop.f32.mrf.mxu0
        %v694 = vadd.f32 %v544, %v693
        %v695 = vpop.f32.mrf.mxu0
        %696 = vmatprep.mubr.f32.mxu0 0.0
        %697 = vmatmul.mubr.f32.gmra.mxu0 %v568
        %v698 = vpop.f32.mrf.mxu0
        %v699 = vadd.f32 %v544, %v698
        %v700 = vpop.f32.mrf.mxu0
        %701 = vmatprep.mubr.f32.mxu0 0.0
        %702 = vmatmul.mubr.f32.gmra.mxu0 %v571
        %v703 = vpop.f32.mrf.mxu0
        %v704 = vadd.f32 %v544, %v703
        %v705 = vpop.f32.mrf.mxu0
        %706 = vmatprep.mubr.f32.mxu0 0.0
        %707 = vmatmul.mubr.f32.gmra.mxu0 %v574
        %v708 = vpop.f32.mrf.mxu0
        %v709 = vadd.f32 %v544, %v708
        %v710 = vpop.f32.mrf.mxu0
        %711 = vmatprep.mubr.f32.mxu0 0.0
        %712 = vmatmul.mubr.f32.gmra.mxu0 %v577
        %v713 = vpop.f32.mrf.mxu0
        %v714 = vadd.f32 %v544, %v713
        %v715 = vpop.f32.mrf.mxu0
        %716 = vmatprep.mubr.f32.mxu0 0.0
        %717 = vmatmul.mubr.f32.gmra.mxu0 %v580
        %v718 = vpop.f32.mrf.mxu0
        %v719 = vadd.f32 %v544, %v718
        %v720 = vpop.f32.mrf.mxu0
        %721 = vmatprep.mubr.f32.mxu0 0.0
        %722 = vmatmul.mubr.f32.gmra.mxu0 %v583
        %v723 = vpop.f32.mrf.mxu0
        %v724 = vadd.f32 %v544, %v723
        %v725 = vpop.f32.mrf.mxu0
        %726 = vmatprep.mubr.f32.mxu0 0.0
        %727 = vmatmul.mubr.f32.gmra.mxu0 %v586
        %v728 = vpop.f32.mrf.mxu0
        %v729 = vadd.f32 %v544, %v728
        %v730 = vpop.f32.mrf.mxu0
        %731 = vmatprep.mubr.f32.mxu0 0.0
        %732 = vmatmul.mubr.f32.gmra.mxu0 %v589
        %v733 = vpop.f32.mrf.mxu0
        %v734 = vadd.f32 %v544, %v733
        %v735 = vpop.f32.mrf.mxu0
        %736 = vmatprep.mubr.f32.mxu0 0.0
        %737 = vmatmul.mubr.f32.gmra.mxu0 %v592
        %v738 = vpop.f32.mrf.mxu0
        %v739 = vadd.f32 %v544, %v738
        %v740 = vpop.f32.mrf.mxu0
        %741 = vdwg.mxu0
        %742 = vst.msk [vmem:[#allocation2 + $0x80] sm:$0xff] %vm502, %v664
        %743 = vst.msk [vmem:[#allocation2 + $0x88] sm:$0xff] %vm502, %v669
        %744 = vst.msk [vmem:[#allocation2 + $0x90] sm:$0xff] %vm502, %v674
        %745 = vst.msk [vmem:[#allocation2 + $0x98] sm:$0xff] %vm502, %v679
        %746 = vst.msk [vmem:[#allocation2 + $0xa0] sm:$0xff] %vm502, %v684
        %747 = vst.msk [vmem:[#allocation2 + $0xa8] sm:$0xff] %vm502, %v689
        %748 = vst.msk [vmem:[#allocation2 + $0xb0] sm:$0xff] %vm502, %v694
        %749 = vst.msk [vmem:[#allocation2 + $0xb8] sm:$0xff] %vm502, %v699
        %750 = vst.msk [vmem:[#allocation2 + $0xc0] sm:$0xff] %vm502, %v704
        %751 = vst.msk [vmem:[#allocation2 + $0xc8] sm:$0xff] %vm502, %v709
        %752 = vst.msk [vmem:[#allocation2 + $0xd0] sm:$0xff] %vm502, %v714
        %753 = vst.msk [vmem:[#allocation2 + $0xd8] sm:$0xff] %vm502, %v719
        %754 = vst.msk [vmem:[#allocation2 + $0xe0] sm:$0xff] %vm502, %v724
        %755 = vst.msk [vmem:[#allocation2 + $0xe8] sm:$0xff] %vm502, %v729
        %756 = vst.msk [vmem:[#allocation2 + $0xf0] sm:$0xff] %vm502, %v734
        %757 = vst.msk [vmem:[#allocation2 + $0xf8] sm:$0xff] %vm502, %v739
        %v758 = vld [vmem:[%s276 + $0x100] sm:$0xff]
        %v759 = vld [vmem:[%s276 + $0x108] sm:$0xff]
        %v760 = vld [vmem:[%s276 + $0x110] sm:$0xff]
        %v761 = vld [vmem:[%s276 + $0x118] sm:$0xff]
        %v762 = vld [vmem:[%s276 + $0x120] sm:$0xff]
        %v763 = vld [vmem:[%s276 + $0x128] sm:$0xff]
        %v764 = vld [vmem:[%s276 + $0x130] sm:$0xff]
        %v765 = vld [vmem:[%s276 + $0x138] sm:$0xff]
        %v766 = vld [vmem:[%s276 + $0x140] sm:$0xff]
        %v767 = vld [vmem:[%s276 + $0x148] sm:$0xff]
        %v768 = vld [vmem:[%s276 + $0x150] sm:$0xff]
        %v769 = vld [vmem:[%s276 + $0x158] sm:$0xff]
        %v770 = vld [vmem:[%s276 + $0x160] sm:$0xff]
        %v771 = vld [vmem:[%s276 + $0x168] sm:$0xff]
        %v772 = vld [vmem:[%s276 + $0x170] sm:$0xff]
        %v773 = vld [vmem:[%s276 + $0x178] sm:$0xff]
        %v774 = vld [vmem:[%s1] sm:$0xff]
        %v775 = vld [vmem:[%s1 + $0x8] sm:$0xff]
        %v776 = vld [vmem:[%s1 + $0x10] sm:$0xff]
        %v777 = vld [vmem:[%s1 + $0x18] sm:$0x7]
        %v778 = vld [vmem:[%s2] sm:$0x1]
        %v780 = vlaneseq
        %v781 = vshrl.u32 %v780, 7
        %v782 = vsub.s32 0, %v781
        %v783 = vrot.slane %v778, %v782
        %v786 = vsel %vm304, %v758, 0
        %v789 = vsel %vm304, %v759, 0
        %v792 = vsel %vm304, %v760, 0
        %v795 = vsel %vm304, %v761, 0
        %v798 = vsel %vm304, %v762, 0
        %v801 = vsel %vm304, %v763, 0
        %v804 = vsel %vm304, %v764, 0
        %v807 = vsel %vm304, %v765, 0
        %v810 = vsel %vm304, %v766, 0
        %v813 = vsel %vm304, %v767, 0
        %v816 = vsel %vm304, %v768, 0
        %v819 = vsel %vm304, %v769, 0
        %v822 = vsel %vm304, %v770, 0
        %v825 = vsel %vm304, %v771, 0
        %v828 = vsel %vm304, %v772, 0
        %v831 = vsel %vm304, %v773, 0
        %v834 = vsel %vm353, %v777, 0
        %836 = vmatprep.subr.mxu0 0.0
        %837 = vmatpush1.msra.mxu0 0.0
        %838 = vmatprep.subr.mxu0 0.0
        %839 = vmatpush1.msra.mxu0 0.0
        %840 = vmatprep.subr.mxu0 0.0
        %841 = vmatpush1.msra.mxu0 0.0
        %842 = vmatprep.subr.mxu0 0.0
        %843 = vmatpush1.msra.mxu0 0.0
        %844 = vmatprep.subr.mxu0 0.0
        %845 = vmatpush1.msra.mxu0 0.0
        %846 = vmatprep.subr.mxu0 0.0
        %847 = vmatpush1.msra.mxu0 0.0
        %848 = vmatprep.subr.mxu0 0.0
        %849 = vmatpush1.msra.mxu0 0.0
        %850 = vmatprep.subr.mxu0 0.0
        %851 = vmatpush1.msra.mxu0 0.0
        %852 = vmatprep.subr.mxu0 0.0
        %853 = vmatpush1.msra.mxu0 0.0
        %854 = vmatprep.subr.mxu0 0.0
        %855 = vmatpush1.msra.mxu0 0.0
        %856 = vmatprep.subr.mxu0 0.0
        %857 = vmatpush1.msra.mxu0 0.0
        %858 = vmatprep.subr.mxu0 0.0
        %859 = vmatpush1.msra.mxu0 0.0
        %860 = vmatprep.subr.mxu0 0.0
        %861 = vmatpush1.msra.mxu0 %v834
        %862 = vmatprep.subr.mxu0 0.0
        %863 = vmatpush1.msra.mxu0 %v776
        %864 = vmatprep.subr.mxu0 0.0
        %865 = vmatpush1.msra.mxu0 %v775
        %866 = vmatprep.subr.mxu0 0.0
        %867 = vmatpush1.msra.mxu0 %v774
        %868 = vmatprep.subr.mxu0 0.0
        %869 = vmatpush2.msra.mxu0 0.0
        %870 = vmatprep.subr.mxu0 0.0
        %871 = vmatpush2.msra.mxu0 0.0
        %872 = vmatprep.subr.mxu0 0.0
        %873 = vmatpush2.msra.mxu0 0.0
        %874 = vmatprep.subr.mxu0 0.0
        %875 = vmatpush2.msra.mxu0 0.0
        %876 = vmatprep.subr.mxu0 0.0
        %877 = vmatpush2.msra.mxu0 0.0
        %878 = vmatprep.subr.mxu0 0.0
        %879 = vmatpush2.msra.mxu0 0.0
        %880 = vmatprep.subr.mxu0 0.0
        %881 = vmatpush2.msra.mxu0 0.0
        %882 = vmatprep.subr.mxu0 0.0
        %883 = vmatpush2.msra.mxu0 0.0
        %884 = vmatprep.subr.mxu0 0.0
        %885 = vmatpush2.msra.mxu0 0.0
        %886 = vmatprep.subr.mxu0 0.0
        %887 = vmatpush2.msra.mxu0 0.0
        %888 = vmatprep.subr.mxu0 0.0
        %889 = vmatpush2.msra.mxu0 0.0
        %890 = vmatprep.subr.mxu0 0.0
        %891 = vmatpush2.msra.mxu0 0.0
        %892 = vmatprep.subr.mxu0 0.0
        %893 = vmatpush2.msra.mxu0 0.0
        %894 = vmatprep.subr.mxu0 0.0
        %895 = vmatpush2.msra.mxu0 0.0
        %896 = vmatprep.subr.mxu0 0.0
        %897 = vmatpush2.msra.mxu0 0.0
        %898 = vmatprep.subr.mxu0 0.0
        %899 = vmatpush2.msra.mxu0 0.0
        %900 = vmatprep.mubr.f32.mxu0 0.0
        %901 = vmatmul.mubr.f32.gmra.mxu0 %v786
        %v902 = vpop.f32.mrf.mxu0
        %v903 = vadd.f32 %v783, %v902
        %v904 = vpop.f32.mrf.mxu0
        %905 = vmatprep.mubr.f32.mxu0 0.0
        %906 = vmatmul.mubr.f32.gmra.mxu0 %v789
        %v907 = vpop.f32.mrf.mxu0
        %v908 = vadd.f32 %v783, %v907
        %v909 = vpop.f32.mrf.mxu0
        %910 = vmatprep.mubr.f32.mxu0 0.0
        %911 = vmatmul.mubr.f32.gmra.mxu0 %v792
        %v912 = vpop.f32.mrf.mxu0
        %v913 = vadd.f32 %v783, %v912
        %v914 = vpop.f32.mrf.mxu0
        %915 = vmatprep.mubr.f32.mxu0 0.0
        %916 = vmatmul.mubr.f32.gmra.mxu0 %v795
        %v917 = vpop.f32.mrf.mxu0
        %v918 = vadd.f32 %v783, %v917
        %v919 = vpop.f32.mrf.mxu0
        %920 = vmatprep.mubr.f32.mxu0 0.0
        %921 = vmatmul.mubr.f32.gmra.mxu0 %v798
        %v922 = vpop.f32.mrf.mxu0
        %v923 = vadd.f32 %v783, %v922
        %v924 = vpop.f32.mrf.mxu0
        %925 = vmatprep.mubr.f32.mxu0 0.0
        %926 = vmatmul.mubr.f32.gmra.mxu0 %v801
        %v927 = vpop.f32.mrf.mxu0
        %v928 = vadd.f32 %v783, %v927
        %v929 = vpop.f32.mrf.mxu0
        %930 = vmatprep.mubr.f32.mxu0 0.0
        %931 = vmatmul.mubr.f32.gmra.mxu0 %v804
        %v932 = vpop.f32.mrf.mxu0
        %v933 = vadd.f32 %v783, %v932
        %v934 = vpop.f32.mrf.mxu0
        %935 = vmatprep.mubr.f32.mxu0 0.0
        %936 = vmatmul.mubr.f32.gmra.mxu0 %v807
        %v937 = vpop.f32.mrf.mxu0
        %v938 = vadd.f32 %v783, %v937
        %v939 = vpop.f32.mrf.mxu0
        %940 = vmatprep.mubr.f32.mxu0 0.0
        %941 = vmatmul.mubr.f32.gmra.mxu0 %v810
        %v942 = vpop.f32.mrf.mxu0
        %v943 = vadd.f32 %v783, %v942
        %v944 = vpop.f32.mrf.mxu0
        %945 = vmatprep.mubr.f32.mxu0 0.0
        %946 = vmatmul.mubr.f32.gmra.mxu0 %v813
        %v947 = vpop.f32.mrf.mxu0
        %v948 = vadd.f32 %v783, %v947
        %v949 = vpop.f32.mrf.mxu0
        %950 = vmatprep.mubr.f32.mxu0 0.0
        %951 = vmatmul.mubr.f32.gmra.mxu0 %v816
        %v952 = vpop.f32.mrf.mxu0
        %v953 = vadd.f32 %v783, %v952
        %v954 = vpop.f32.mrf.mxu0
        %955 = vmatprep.mubr.f32.mxu0 0.0
        %956 = vmatmul.mubr.f32.gmra.mxu0 %v819
        %v957 = vpop.f32.mrf.mxu0
        %v958 = vadd.f32 %v783, %v957
        %v959 = vpop.f32.mrf.mxu0
        %960 = vmatprep.mubr.f32.mxu0 0.0
        %961 = vmatmul.mubr.f32.gmra.mxu0 %v822
        %v962 = vpop.f32.mrf.mxu0
        %v963 = vadd.f32 %v783, %v962
        %v964 = vpop.f32.mrf.mxu0
        %965 = vmatprep.mubr.f32.mxu0 0.0
        %966 = vmatmul.mubr.f32.gmra.mxu0 %v825
        %v967 = vpop.f32.mrf.mxu0
        %v968 = vadd.f32 %v783, %v967
        %v969 = vpop.f32.mrf.mxu0
        %970 = vmatprep.mubr.f32.mxu0 0.0
        %971 = vmatmul.mubr.f32.gmra.mxu0 %v828
        %v972 = vpop.f32.mrf.mxu0
        %v973 = vadd.f32 %v783, %v972
        %v974 = vpop.f32.mrf.mxu0
        %975 = vmatprep.mubr.f32.mxu0 0.0
        %976 = vmatmul.mubr.f32.gmra.mxu0 %v831
        %v977 = vpop.f32.mrf.mxu0
        %v978 = vadd.f32 %v783, %v977
        %v979 = vpop.f32.mrf.mxu0
        %980 = vdwg.mxu0
        %981 = vst.msk [vmem:[#allocation2 + $0x100] sm:$0xff] %vm502, %v903
        %982 = vst.msk [vmem:[#allocation2 + $0x108] sm:$0xff] %vm502, %v908
        %983 = vst.msk [vmem:[#allocation2 + $0x110] sm:$0xff] %vm502, %v913
        %984 = vst.msk [vmem:[#allocation2 + $0x118] sm:$0xff] %vm502, %v918
        %985 = vst.msk [vmem:[#allocation2 + $0x120] sm:$0xff] %vm502, %v923
        %986 = vst.msk [vmem:[#allocation2 + $0x128] sm:$0xff] %vm502, %v928
        %987 = vst.msk [vmem:[#allocation2 + $0x130] sm:$0xff] %vm502, %v933
        %988 = vst.msk [vmem:[#allocation2 + $0x138] sm:$0xff] %vm502, %v938
        %989 = vst.msk [vmem:[#allocation2 + $0x140] sm:$0xff] %vm502, %v943
        %990 = vst.msk [vmem:[#allocation2 + $0x148] sm:$0xff] %vm502, %v948
        %991 = vst.msk [vmem:[#allocation2 + $0x150] sm:$0xff] %vm502, %v953
        %992 = vst.msk [vmem:[#allocation2 + $0x158] sm:$0xff] %vm502, %v958
        %993 = vst.msk [vmem:[#allocation2 + $0x160] sm:$0xff] %vm502, %v963
        %994 = vst.msk [vmem:[#allocation2 + $0x168] sm:$0xff] %vm502, %v968
        %995 = vst.msk [vmem:[#allocation2 + $0x170] sm:$0xff] %vm502, %v973
        %996 = vst.msk [vmem:[#allocation2 + $0x178] sm:$0xff] %vm502, %v978
        %v997 = vld [vmem:[%s276 + $0x180] sm:$0xff]
        %v998 = vld [vmem:[%s276 + $0x188] sm:$0xff]
        %v999 = vld [vmem:[%s276 + $0x190] sm:$0xff]
        %v1000 = vld [vmem:[%s276 + $0x198] sm:$0xff]
        %v1001 = vld [vmem:[%s276 + $0x1a0] sm:$0xff]
        %v1002 = vld [vmem:[%s276 + $0x1a8] sm:$0xff]
        %v1003 = vld [vmem:[%s276 + $0x1b0] sm:$0xff]
        %v1004 = vld [vmem:[%s276 + $0x1b8] sm:$0xff]
        %v1005 = vld [vmem:[%s276 + $0x1c0] sm:$0xff]
        %v1006 = vld [vmem:[%s276 + $0x1c8] sm:$0xff]
        %v1007 = vld [vmem:[%s276 + $0x1d0] sm:$0xff]
        %v1008 = vld [vmem:[%s276 + $0x1d8] sm:$0xff]
        %v1009 = vld [vmem:[%s276 + $0x1e0] sm:$0xff]
        %v1010 = vld [vmem:[%s276 + $0x1e8] sm:$0xff]
        %v1011 = vld [vmem:[%s276 + $0x1f0] sm:$0xff]
        %v1012 = vld [vmem:[%s276 + $0x1f8] sm:$0xff]
        %v1013 = vld [vmem:[%s1] sm:$0xff]
        %v1014 = vld [vmem:[%s1 + $0x8] sm:$0xff]
        %v1015 = vld [vmem:[%s1 + $0x10] sm:$0xff]
        %v1016 = vld [vmem:[%s1 + $0x18] sm:$0x7]
        %v1017 = vld [vmem:[%s2] sm:$0x1]
        %v1019 = vlaneseq
        %v1020 = vshrl.u32 %v1019, 7
        %v1021 = vsub.s32 0, %v1020
        %v1022 = vrot.slane %v1017, %v1021
        %v1025 = vsel %vm304, %v997, 0
        %v1028 = vsel %vm304, %v998, 0
        %v1031 = vsel %vm304, %v999, 0
        %v1034 = vsel %vm304, %v1000, 0
        %v1037 = vsel %vm304, %v1001, 0
        %v1040 = vsel %vm304, %v1002, 0
        %v1043 = vsel %vm304, %v1003, 0
        %v1046 = vsel %vm304, %v1004, 0
        %v1049 = vsel %vm304, %v1005, 0
        %v1052 = vsel %vm304, %v1006, 0
        %v1055 = vsel %vm304, %v1007, 0
        %v1058 = vsel %vm304, %v1008, 0
        %v1061 = vsel %vm304, %v1009, 0
        %v1064 = vsel %vm304, %v1010, 0
        %v1067 = vsel %vm304, %v1011, 0
        %v1070 = vsel %vm304, %v1012, 0
        %v1073 = vsel %vm353, %v1016, 0
        %1075 = vmatprep.subr.mxu0 0.0
        %1076 = vmatpush1.msra.mxu0 0.0
        %1077 = vmatprep.subr.mxu0 0.0
        %1078 = vmatpush1.msra.mxu0 0.0
        %1079 = vmatprep.subr.mxu0 0.0
        %1080 = vmatpush1.msra.mxu0 0.0
        %1081 = vmatprep.subr.mxu0 0.0
        %1082 = vmatpush1.msra.mxu0 0.0
        %1083 = vmatprep.subr.mxu0 0.0
        %1084 = vmatpush1.msra.mxu0 0.0
        %1085 = vmatprep.subr.mxu0 0.0
        %1086 = vmatpush1.msra.mxu0 0.0
        %1087 = vmatprep.subr.mxu0 0.0
        %1088 = vmatpush1.msra.mxu0 0.0
        %1089 = vmatprep.subr.mxu0 0.0
        %1090 = vmatpush1.msra.mxu0 0.0
        %1091 = vmatprep.subr.mxu0 0.0
        %1092 = vmatpush1.msra.mxu0 0.0
        %1093 = vmatprep.subr.mxu0 0.0
        %1094 = vmatpush1.msra.mxu0 0.0
        %1095 = vmatprep.subr.mxu0 0.0
        %1096 = vmatpush1.msra.mxu0 0.0
        %1097 = vmatprep.subr.mxu0 0.0
        %1098 = vmatpush1.msra.mxu0 0.0
        %1099 = vmatprep.subr.mxu0 0.0
        %1100 = vmatpush1.msra.mxu0 %v1073
        %1101 = vmatprep.subr.mxu0 0.0
        %1102 = vmatpush1.msra.mxu0 %v1015
        %1103 = vmatprep.subr.mxu0 0.0
        %1104 = vmatpush1.msra.mxu0 %v1014
        %1105 = vmatprep.subr.mxu0 0.0
        %1106 = vmatpush1.msra.mxu0 %v1013
        %1107 = vmatprep.subr.mxu0 0.0
        %1108 = vmatpush2.msra.mxu0 0.0
        %1109 = vmatprep.subr.mxu0 0.0
        %1110 = vmatpush2.msra.mxu0 0.0
        %1111 = vmatprep.subr.mxu0 0.0
        %1112 = vmatpush2.msra.mxu0 0.0
        %1113 = vmatprep.subr.mxu0 0.0
        %1114 = vmatpush2.msra.mxu0 0.0
        %1115 = vmatprep.subr.mxu0 0.0
        %1116 = vmatpush2.msra.mxu0 0.0
        %1117 = vmatprep.subr.mxu0 0.0
        %1118 = vmatpush2.msra.mxu0 0.0
        %1119 = vmatprep.subr.mxu0 0.0
        %1120 = vmatpush2.msra.mxu0 0.0
        %1121 = vmatprep.subr.mxu0 0.0
        %1122 = vmatpush2.msra.mxu0 0.0
        %1123 = vmatprep.subr.mxu0 0.0
        %1124 = vmatpush2.msra.mxu0 0.0
        %1125 = vmatprep.subr.mxu0 0.0
        %1126 = vmatpush2.msra.mxu0 0.0
        %1127 = vmatprep.subr.mxu0 0.0
        %1128 = vmatpush2.msra.mxu0 0.0
        %1129 = vmatprep.subr.mxu0 0.0
        %1130 = vmatpush2.msra.mxu0 0.0
        %1131 = vmatprep.subr.mxu0 0.0
        %1132 = vmatpush2.msra.mxu0 0.0
        %1133 = vmatprep.subr.mxu0 0.0
        %1134 = vmatpush2.msra.mxu0 0.0
        %1135 = vmatprep.subr.mxu0 0.0
        %1136 = vmatpush2.msra.mxu0 0.0
        %1137 = vmatprep.subr.mxu0 0.0
        %1138 = vmatpush2.msra.mxu0 0.0
        %1139 = vmatprep.mubr.f32.mxu0 0.0
        %1140 = vmatmul.mubr.f32.gmra.mxu0 %v1025
        %v1141 = vpop.f32.mrf.mxu0
        %v1142 = vadd.f32 %v1022, %v1141
        %v1143 = vpop.f32.mrf.mxu0
        %1144 = vmatprep.mubr.f32.mxu0 0.0
        %1145 = vmatmul.mubr.f32.gmra.mxu0 %v1028
        %v1146 = vpop.f32.mrf.mxu0
        %v1147 = vadd.f32 %v1022, %v1146
        %v1148 = vpop.f32.mrf.mxu0
        %1149 = vmatprep.mubr.f32.mxu0 0.0
        %1150 = vmatmul.mubr.f32.gmra.mxu0 %v1031
        %v1151 = vpop.f32.mrf.mxu0
        %v1152 = vadd.f32 %v1022, %v1151
        %v1153 = vpop.f32.mrf.mxu0
        %1154 = vmatprep.mubr.f32.mxu0 0.0
        %1155 = vmatmul.mubr.f32.gmra.mxu0 %v1034
        %v1156 = vpop.f32.mrf.mxu0
        %v1157 = vadd.f32 %v1022, %v1156
        %v1158 = vpop.f32.mrf.mxu0
        %1159 = vmatprep.mubr.f32.mxu0 0.0
        %1160 = vmatmul.mubr.f32.gmra.mxu0 %v1037
        %v1161 = vpop.f32.mrf.mxu0
        %v1162 = vadd.f32 %v1022, %v1161
        %v1163 = vpop.f32.mrf.mxu0
        %1164 = vmatprep.mubr.f32.mxu0 0.0
        %1165 = vmatmul.mubr.f32.gmra.mxu0 %v1040
        %v1166 = vpop.f32.mrf.mxu0
        %v1167 = vadd.f32 %v1022, %v1166
        %v1168 = vpop.f32.mrf.mxu0
        %1169 = vmatprep.mubr.f32.mxu0 0.0
        %1170 = vmatmul.mubr.f32.gmra.mxu0 %v1043
        %v1171 = vpop.f32.mrf.mxu0
        %v1172 = vadd.f32 %v1022, %v1171
        %v1173 = vpop.f32.mrf.mxu0
        %1174 = vmatprep.mubr.f32.mxu0 0.0
        %1175 = vmatmul.mubr.f32.gmra.mxu0 %v1046
        %v1176 = vpop.f32.mrf.mxu0
        %v1177 = vadd.f32 %v1022, %v1176
        %v1178 = vpop.f32.mrf.mxu0
        %1179 = vmatprep.mubr.f32.mxu0 0.0
        %1180 = vmatmul.mubr.f32.gmra.mxu0 %v1049
        %v1181 = vpop.f32.mrf.mxu0
        %v1182 = vadd.f32 %v1022, %v1181
        %v1183 = vpop.f32.mrf.mxu0
        %1184 = vmatprep.mubr.f32.mxu0 0.0
        %1185 = vmatmul.mubr.f32.gmra.mxu0 %v1052
        %v1186 = vpop.f32.mrf.mxu0
        %v1187 = vadd.f32 %v1022, %v1186
        %v1188 = vpop.f32.mrf.mxu0
        %1189 = vmatprep.mubr.f32.mxu0 0.0
        %1190 = vmatmul.mubr.f32.gmra.mxu0 %v1055
        %v1191 = vpop.f32.mrf.mxu0
        %v1192 = vadd.f32 %v1022, %v1191
        %v1193 = vpop.f32.mrf.mxu0
        %1194 = vmatprep.mubr.f32.mxu0 0.0
        %1195 = vmatmul.mubr.f32.gmra.mxu0 %v1058
        %v1196 = vpop.f32.mrf.mxu0
        %v1197 = vadd.f32 %v1022, %v1196
        %v1198 = vpop.f32.mrf.mxu0
        %1199 = vmatprep.mubr.f32.mxu0 0.0
        %1200 = vmatmul.mubr.f32.gmra.mxu0 %v1061
        %v1201 = vpop.f32.mrf.mxu0
        %v1202 = vadd.f32 %v1022, %v1201
        %v1203 = vpop.f32.mrf.mxu0
        %1204 = vmatprep.mubr.f32.mxu0 0.0
        %1205 = vmatmul.mubr.f32.gmra.mxu0 %v1064
        %v1206 = vpop.f32.mrf.mxu0
        %v1207 = vadd.f32 %v1022, %v1206
        %v1208 = vpop.f32.mrf.mxu0
        %1209 = vmatprep.mubr.f32.mxu0 0.0
        %1210 = vmatmul.mubr.f32.gmra.mxu0 %v1067
        %v1211 = vpop.f32.mrf.mxu0
        %v1212 = vadd.f32 %v1022, %v1211
        %v1213 = vpop.f32.mrf.mxu0
        %1214 = vmatprep.mubr.f32.mxu0 0.0
        %1215 = vmatmul.mubr.f32.gmra.mxu0 %v1070
        %v1216 = vpop.f32.mrf.mxu0
        %v1217 = vadd.f32 %v1022, %v1216
        %v1218 = vpop.f32.mrf.mxu0
        %1219 = vdwg.mxu0
        %1220 = vst.msk [vmem:[#allocation2 + $0x180] sm:$0xff] %vm502, %v1142
        %1221 = vst.msk [vmem:[#allocation2 + $0x188] sm:$0xff] %vm502, %v1147
        %1222 = vst.msk [vmem:[#allocation2 + $0x190] sm:$0xff] %vm502, %v1152
        %1223 = vst.msk [vmem:[#allocation2 + $0x198] sm:$0xff] %vm502, %v1157
        %1224 = vst.msk [vmem:[#allocation2 + $0x1a0] sm:$0xff] %vm502, %v1162
        %1225 = vst.msk [vmem:[#allocation2 + $0x1a8] sm:$0xff] %vm502, %v1167
        %1226 = vst.msk [vmem:[#allocation2 + $0x1b0] sm:$0xff] %vm502, %v1172
        %1227 = vst.msk [vmem:[#allocation2 + $0x1b8] sm:$0xff] %vm502, %v1177
        %1228 = vst.msk [vmem:[#allocation2 + $0x1c0] sm:$0xff] %vm502, %v1182
        %1229 = vst.msk [vmem:[#allocation2 + $0x1c8] sm:$0xff] %vm502, %v1187
        %1230 = vst.msk [vmem:[#allocation2 + $0x1d0] sm:$0xff] %vm502, %v1192
        %1231 = vst.msk [vmem:[#allocation2 + $0x1d8] sm:$0xff] %vm502, %v1197
        %1232 = vst.msk [vmem:[#allocation2 + $0x1e0] sm:$0xff] %vm502, %v1202
        %1233 = vst.msk [vmem:[#allocation2 + $0x1e8] sm:$0xff] %vm502, %v1207
        %1234 = vst.msk [vmem:[#allocation2 + $0x1f0] sm:$0xff] %vm502, %v1212
        %1235 = vst.msk [vmem:[#allocation2 + $0x1f8] sm:$0xff] %vm502, %v1217
        %v1236 = vld [vmem:[%s276 + $0x200] sm:$0xff]
        %v1237 = vld [vmem:[%s276 + $0x208] sm:$0xff]
        %v1238 = vld [vmem:[%s276 + $0x210] sm:$0xff]
        %v1239 = vld [vmem:[%s276 + $0x218] sm:$0xff]
        %v1240 = vld [vmem:[%s276 + $0x220] sm:$0xff]
        %v1241 = vld [vmem:[%s276 + $0x228] sm:$0xff]
        %v1242 = vld [vmem:[%s276 + $0x230] sm:$0xff]
        %v1243 = vld [vmem:[%s276 + $0x238] sm:$0xff]
        %v1244 = vld [vmem:[%s276 + $0x240] sm:$0xff]
        %v1245 = vld [vmem:[%s276 + $0x248] sm:$0xff]
        %v1246 = vld [vmem:[%s276 + $0x250] sm:$0xff]
        %v1247 = vld [vmem:[%s276 + $0x258] sm:$0xff]
        %v1248 = vld [vmem:[%s276 + $0x260] sm:$0xff]
        %v1249 = vld [vmem:[%s276 + $0x268] sm:$0xff]
        %v1250 = vld [vmem:[%s276 + $0x270] sm:$0xff]
        %v1251 = vld [vmem:[%s276 + $0x278] sm:$0xff]
        %v1252 = vld [vmem:[%s1] sm:$0xff]
        %v1253 = vld [vmem:[%s1 + $0x8] sm:$0xff]
        %v1254 = vld [vmem:[%s1 + $0x10] sm:$0xff]
        %v1255 = vld [vmem:[%s1 + $0x18] sm:$0x7]
        %v1256 = vld [vmem:[%s2] sm:$0x1]
        %v1258 = vlaneseq
        %v1259 = vshrl.u32 %v1258, 7
        %v1260 = vsub.s32 0, %v1259
        %v1261 = vrot.slane %v1256, %v1260
        %v1264 = vsel %vm304, %v1236, 0
        %v1267 = vsel %vm304, %v1237, 0
        %v1270 = vsel %vm304, %v1238, 0
        %v1273 = vsel %vm304, %v1239, 0
        %v1276 = vsel %vm304, %v1240, 0
        %v1279 = vsel %vm304, %v1241, 0
        %v1282 = vsel %vm304, %v1242, 0
        %v1285 = vsel %vm304, %v1243, 0
        %v1288 = vsel %vm304, %v1244, 0
        %v1291 = vsel %vm304, %v1245, 0
        %v1294 = vsel %vm304, %v1246, 0
        %v1297 = vsel %vm304, %v1247, 0
        %v1300 = vsel %vm304, %v1248, 0
        %v1303 = vsel %vm304, %v1249, 0
        %v1306 = vsel %vm304, %v1250, 0
        %v1309 = vsel %vm304, %v1251, 0
        %v1312 = vsel %vm353, %v1255, 0
        %1314 = vmatprep.subr.mxu0 0.0
        %1315 = vmatpush1.msra.mxu0 0.0
        %1316 = vmatprep.subr.mxu0 0.0
        %1317 = vmatpush1.msra.mxu0 0.0
        %1318 = vmatprep.subr.mxu0 0.0
        %1319 = vmatpush1.msra.mxu0 0.0
        %1320 = vmatprep.subr.mxu0 0.0
        %1321 = vmatpush1.msra.mxu0 0.0
        %1322 = vmatprep.subr.mxu0 0.0
        %1323 = vmatpush1.msra.mxu0 0.0
        %1324 = vmatprep.subr.mxu0 0.0
        %1325 = vmatpush1.msra.mxu0 0.0
        %1326 = vmatprep.subr.mxu0 0.0
        %1327 = vmatpush1.msra.mxu0 0.0
        %1328 = vmatprep.subr.mxu0 0.0
        %1329 = vmatpush1.msra.mxu0 0.0
        %1330 = vmatprep.subr.mxu0 0.0
        %1331 = vmatpush1.msra.mxu0 0.0
        %1332 = vmatprep.subr.mxu0 0.0
        %1333 = vmatpush1.msra.mxu0 0.0
        %1334 = vmatprep.subr.mxu0 0.0
        %1335 = vmatpush1.msra.mxu0 0.0
        %1336 = vmatprep.subr.mxu0 0.0
        %1337 = vmatpush1.msra.mxu0 0.0
        %1338 = vmatprep.subr.mxu0 0.0
        %1339 = vmatpush1.msra.mxu0 %v1312
        %1340 = vmatprep.subr.mxu0 0.0
        %1341 = vmatpush1.msra.mxu0 %v1254
        %1342 = vmatprep.subr.mxu0 0.0
        %1343 = vmatpush1.msra.mxu0 %v1253
        %1344 = vmatprep.subr.mxu0 0.0
        %1345 = vmatpush1.msra.mxu0 %v1252
        %1346 = vmatprep.subr.mxu0 0.0
        %1347 = vmatpush2.msra.mxu0 0.0
        %1348 = vmatprep.subr.mxu0 0.0
        %1349 = vmatpush2.msra.mxu0 0.0
        %1350 = vmatprep.subr.mxu0 0.0
        %1351 = vmatpush2.msra.mxu0 0.0
        %1352 = vmatprep.subr.mxu0 0.0
        %1353 = vmatpush2.msra.mxu0 0.0
        %1354 = vmatprep.subr.mxu0 0.0
        %1355 = vmatpush2.msra.mxu0 0.0
        %1356 = vmatprep.subr.mxu0 0.0
        %1357 = vmatpush2.msra.mxu0 0.0
        %1358 = vmatprep.subr.mxu0 0.0
        %1359 = vmatpush2.msra.mxu0 0.0
        %1360 = vmatprep.subr.mxu0 0.0
        %1361 = vmatpush2.msra.mxu0 0.0
        %1362 = vmatprep.subr.mxu0 0.0
        %1363 = vmatpush2.msra.mxu0 0.0
        %1364 = vmatprep.subr.mxu0 0.0
        %1365 = vmatpush2.msra.mxu0 0.0
        %1366 = vmatprep.subr.mxu0 0.0
        %1367 = vmatpush2.msra.mxu0 0.0
        %1368 = vmatprep.subr.mxu0 0.0
        %1369 = vmatpush2.msra.mxu0 0.0
        %1370 = vmatprep.subr.mxu0 0.0
        %1371 = vmatpush2.msra.mxu0 0.0
        %1372 = vmatprep.subr.mxu0 0.0
        %1373 = vmatpush2.msra.mxu0 0.0
        %1374 = vmatprep.subr.mxu0 0.0
        %1375 = vmatpush2.msra.mxu0 0.0
        %1376 = vmatprep.subr.mxu0 0.0
        %1377 = vmatpush2.msra.mxu0 0.0
        %1378 = vmatprep.mubr.f32.mxu0 0.0
        %1379 = vmatmul.mubr.f32.gmra.mxu0 %v1264
        %v1380 = vpop.f32.mrf.mxu0
        %v1381 = vadd.f32 %v1261, %v1380
        %v1382 = vpop.f32.mrf.mxu0
        %1383 = vmatprep.mubr.f32.mxu0 0.0
        %1384 = vmatmul.mubr.f32.gmra.mxu0 %v1267
        %v1385 = vpop.f32.mrf.mxu0
        %v1386 = vadd.f32 %v1261, %v1385
        %v1387 = vpop.f32.mrf.mxu0
        %1388 = vmatprep.mubr.f32.mxu0 0.0
        %1389 = vmatmul.mubr.f32.gmra.mxu0 %v1270
        %v1390 = vpop.f32.mrf.mxu0
        %v1391 = vadd.f32 %v1261, %v1390
        %v1392 = vpop.f32.mrf.mxu0
        %1393 = vmatprep.mubr.f32.mxu0 0.0
        %1394 = vmatmul.mubr.f32.gmra.mxu0 %v1273
        %v1395 = vpop.f32.mrf.mxu0
        %v1396 = vadd.f32 %v1261, %v1395
        %v1397 = vpop.f32.mrf.mxu0
        %1398 = vmatprep.mubr.f32.mxu0 0.0
        %1399 = vmatmul.mubr.f32.gmra.mxu0 %v1276
        %v1400 = vpop.f32.mrf.mxu0
        %v1401 = vadd.f32 %v1261, %v1400
        %v1402 = vpop.f32.mrf.mxu0
        %1403 = vmatprep.mubr.f32.mxu0 0.0
        %1404 = vmatmul.mubr.f32.gmra.mxu0 %v1279
        %v1405 = vpop.f32.mrf.mxu0
        %v1406 = vadd.f32 %v1261, %v1405
        %v1407 = vpop.f32.mrf.mxu0
        %1408 = vmatprep.mubr.f32.mxu0 0.0
        %1409 = vmatmul.mubr.f32.gmra.mxu0 %v1282
        %v1410 = vpop.f32.mrf.mxu0
        %v1411 = vadd.f32 %v1261, %v1410
        %v1412 = vpop.f32.mrf.mxu0
        %1413 = vmatprep.mubr.f32.mxu0 0.0
        %1414 = vmatmul.mubr.f32.gmra.mxu0 %v1285
        %v1415 = vpop.f32.mrf.mxu0
        %v1416 = vadd.f32 %v1261, %v1415
        %v1417 = vpop.f32.mrf.mxu0
        %1418 = vmatprep.mubr.f32.mxu0 0.0
        %1419 = vmatmul.mubr.f32.gmra.mxu0 %v1288
        %v1420 = vpop.f32.mrf.mxu0
        %v1421 = vadd.f32 %v1261, %v1420
        %v1422 = vpop.f32.mrf.mxu0
        %1423 = vmatprep.mubr.f32.mxu0 0.0
        %1424 = vmatmul.mubr.f32.gmra.mxu0 %v1291
        %v1425 = vpop.f32.mrf.mxu0
        %v1426 = vadd.f32 %v1261, %v1425
        %v1427 = vpop.f32.mrf.mxu0
        %1428 = vmatprep.mubr.f32.mxu0 0.0
        %1429 = vmatmul.mubr.f32.gmra.mxu0 %v1294
        %v1430 = vpop.f32.mrf.mxu0
        %v1431 = vadd.f32 %v1261, %v1430
        %v1432 = vpop.f32.mrf.mxu0
        %1433 = vmatprep.mubr.f32.mxu0 0.0
        %1434 = vmatmul.mubr.f32.gmra.mxu0 %v1297
        %v1435 = vpop.f32.mrf.mxu0
        %v1436 = vadd.f32 %v1261, %v1435
        %v1437 = vpop.f32.mrf.mxu0
        %1438 = vmatprep.mubr.f32.mxu0 0.0
        %1439 = vmatmul.mubr.f32.gmra.mxu0 %v1300
        %v1440 = vpop.f32.mrf.mxu0
        %v1441 = vadd.f32 %v1261, %v1440
        %v1442 = vpop.f32.mrf.mxu0
        %1443 = vmatprep.mubr.f32.mxu0 0.0
        %1444 = vmatmul.mubr.f32.gmra.mxu0 %v1303
        %v1445 = vpop.f32.mrf.mxu0
        %v1446 = vadd.f32 %v1261, %v1445
        %v1447 = vpop.f32.mrf.mxu0
        %1448 = vmatprep.mubr.f32.mxu0 0.0
        %1449 = vmatmul.mubr.f32.gmra.mxu0 %v1306
        %v1450 = vpop.f32.mrf.mxu0
        %v1451 = vadd.f32 %v1261, %v1450
        %v1452 = vpop.f32.mrf.mxu0
        %1453 = vmatprep.mubr.f32.mxu0 0.0
        %1454 = vmatmul.mubr.f32.gmra.mxu0 %v1309
        %v1455 = vpop.f32.mrf.mxu0
        %v1456 = vadd.f32 %v1261, %v1455
        %v1457 = vpop.f32.mrf.mxu0
        %1458 = vdwg.mxu0
        %1459 = vst.msk [vmem:[#allocation2 + $0x200] sm:$0xff] %vm502, %v1381
        %1460 = vst.msk [vmem:[#allocation2 + $0x208] sm:$0xff] %vm502, %v1386
        %1461 = vst.msk [vmem:[#allocation2 + $0x210] sm:$0xff] %vm502, %v1391
        %1462 = vst.msk [vmem:[#allocation2 + $0x218] sm:$0xff] %vm502, %v1396
        %1463 = vst.msk [vmem:[#allocation2 + $0x220] sm:$0xff] %vm502, %v1401
        %1464 = vst.msk [vmem:[#allocation2 + $0x228] sm:$0xff] %vm502, %v1406
        %1465 = vst.msk [vmem:[#allocation2 + $0x230] sm:$0xff] %vm502, %v1411
        %1466 = vst.msk [vmem:[#allocation2 + $0x238] sm:$0xff] %vm502, %v1416
        %1467 = vst.msk [vmem:[#allocation2 + $0x240] sm:$0xff] %vm502, %v1421
        %1468 = vst.msk [vmem:[#allocation2 + $0x248] sm:$0xff] %vm502, %v1426
        %1469 = vst.msk [vmem:[#allocation2 + $0x250] sm:$0xff] %vm502, %v1431
        %1470 = vst.msk [vmem:[#allocation2 + $0x258] sm:$0xff] %vm502, %v1436
        %1471 = vst.msk [vmem:[#allocation2 + $0x260] sm:$0xff] %vm502, %v1441
        %1472 = vst.msk [vmem:[#allocation2 + $0x268] sm:$0xff] %vm502, %v1446
        %1473 = vst.msk [vmem:[#allocation2 + $0x270] sm:$0xff] %vm502, %v1451
        %1474 = vst.msk [vmem:[#allocation2 + $0x278] sm:$0xff] %vm502, %v1456
        %v1475 = vld [vmem:[%s276 + $0x280] sm:$0xff]
        %v1476 = vld [vmem:[%s276 + $0x288] sm:$0xff]
        %v1477 = vld [vmem:[%s276 + $0x290] sm:$0xff]
        %v1478 = vld [vmem:[%s276 + $0x298] sm:$0xff]
        %v1479 = vld [vmem:[%s276 + $0x2a0] sm:$0xff]
        %v1480 = vld [vmem:[%s276 + $0x2a8] sm:$0xff]
        %v1481 = vld [vmem:[%s276 + $0x2b0] sm:$0xff]
        %v1482 = vld [vmem:[%s276 + $0x2b8] sm:$0xff]
        %v1483 = vld [vmem:[%s276 + $0x2c0] sm:$0xff]
        %v1484 = vld [vmem:[%s276 + $0x2c8] sm:$0xff]
        %v1485 = vld [vmem:[%s276 + $0x2d0] sm:$0xff]
        %v1486 = vld [vmem:[%s276 + $0x2d8] sm:$0xff]
        %v1487 = vld [vmem:[%s276 + $0x2e0] sm:$0xff]
        %v1488 = vld [vmem:[%s276 + $0x2e8] sm:$0xff]
        %v1489 = vld [vmem:[%s276 + $0x2f0] sm:$0xff]
        %v1490 = vld [vmem:[%s276 + $0x2f8] sm:$0xff]
        %v1491 = vld [vmem:[%s1] sm:$0xff]
        %v1492 = vld [vmem:[%s1 + $0x8] sm:$0xff]
        %v1493 = vld [vmem:[%s1 + $0x10] sm:$0xff]
        %v1494 = vld [vmem:[%s1 + $0x18] sm:$0x7]
        %v1495 = vld [vmem:[%s2] sm:$0x1]
        %v1497 = vlaneseq
        %v1498 = vshrl.u32 %v1497, 7
        %v1499 = vsub.s32 0, %v1498
        %v1500 = vrot.slane %v1495, %v1499
        %v1503 = vsel %vm304, %v1475, 0
        %v1506 = vsel %vm304, %v1476, 0
        %v1509 = vsel %vm304, %v1477, 0
        %v1512 = vsel %vm304, %v1478, 0
        %v1515 = vsel %vm304, %v1479, 0
        %v1518 = vsel %vm304, %v1480, 0
        %v1521 = vsel %vm304, %v1481, 0
        %v1524 = vsel %vm304, %v1482, 0
        %v1527 = vsel %vm304, %v1483, 0
        %v1530 = vsel %vm304, %v1484, 0
        %v1533 = vsel %vm304, %v1485, 0
        %v1536 = vsel %vm304, %v1486, 0
        %v1539 = vsel %vm304, %v1487, 0
        %v1542 = vsel %vm304, %v1488, 0
        %v1545 = vsel %vm304, %v1489, 0
        %v1548 = vsel %vm304, %v1490, 0
        %v1551 = vsel %vm353, %v1494, 0
        %1553 = vmatprep.subr.mxu0 0.0
        %1554 = vmatpush1.msra.mxu0 0.0
        %1555 = vmatprep.subr.mxu0 0.0
        %1556 = vmatpush1.msra.mxu0 0.0
        %1557 = vmatprep.subr.mxu0 0.0
        %1558 = vmatpush1.msra.mxu0 0.0
        %1559 = vmatprep.subr.mxu0 0.0
        %1560 = vmatpush1.msra.mxu0 0.0
        %1561 = vmatprep.subr.mxu0 0.0
        %1562 = vmatpush1.msra.mxu0 0.0
        %1563 = vmatprep.subr.mxu0 0.0
        %1564 = vmatpush1.msra.mxu0 0.0
        %1565 = vmatprep.subr.mxu0 0.0
        %1566 = vmatpush1.msra.mxu0 0.0
        %1567 = vmatprep.subr.mxu0 0.0
        %1568 = vmatpush1.msra.mxu0 0.0
        %1569 = vmatprep.subr.mxu0 0.0
        %1570 = vmatpush1.msra.mxu0 0.0
        %1571 = vmatprep.subr.mxu0 0.0
        %1572 = vmatpush1.msra.mxu0 0.0
        %1573 = vmatprep.subr.mxu0 0.0
        %1574 = vmatpush1.msra.mxu0 0.0
        %1575 = vmatprep.subr.mxu0 0.0
        %1576 = vmatpush1.msra.mxu0 0.0
        %1577 = vmatprep.subr.mxu0 0.0
        %1578 = vmatpush1.msra.mxu0 %v1551
        %1579 = vmatprep.subr.mxu0 0.0
        %1580 = vmatpush1.msra.mxu0 %v1493
        %1581 = vmatprep.subr.mxu0 0.0
        %1582 = vmatpush1.msra.mxu0 %v1492
        %1583 = vmatprep.subr.mxu0 0.0
        %1584 = vmatpush1.msra.mxu0 %v1491
        %1585 = vmatprep.subr.mxu0 0.0
        %1586 = vmatpush2.msra.mxu0 0.0
        %1587 = vmatprep.subr.mxu0 0.0
        %1588 = vmatpush2.msra.mxu0 0.0
        %1589 = vmatprep.subr.mxu0 0.0
        %1590 = vmatpush2.msra.mxu0 0.0
        %1591 = vmatprep.subr.mxu0 0.0
        %1592 = vmatpush2.msra.mxu0 0.0
        %1593 = vmatprep.subr.mxu0 0.0
        %1594 = vmatpush2.msra.mxu0 0.0
        %1595 = vmatprep.subr.mxu0 0.0
        %1596 = vmatpush2.msra.mxu0 0.0
        %1597 = vmatprep.subr.mxu0 0.0
        %1598 = vmatpush2.msra.mxu0 0.0
        %1599 = vmatprep.subr.mxu0 0.0
        %1600 = vmatpush2.msra.mxu0 0.0
        %1601 = vmatprep.subr.mxu0 0.0
        %1602 = vmatpush2.msra.mxu0 0.0
        %1603 = vmatprep.subr.mxu0 0.0
        %1604 = vmatpush2.msra.mxu0 0.0
        %1605 = vmatprep.subr.mxu0 0.0
        %1606 = vmatpush2.msra.mxu0 0.0
        %1607 = vmatprep.subr.mxu0 0.0
        %1608 = vmatpush2.msra.mxu0 0.0
        %1609 = vmatprep.subr.mxu0 0.0
        %1610 = vmatpush2.msra.mxu0 0.0
        %1611 = vmatprep.subr.mxu0 0.0
        %1612 = vmatpush2.msra.mxu0 0.0
        %1613 = vmatprep.subr.mxu0 0.0
        %1614 = vmatpush2.msra.mxu0 0.0
        %1615 = vmatprep.subr.mxu0 0.0
        %1616 = vmatpush2.msra.mxu0 0.0
        %1617 = vmatprep.mubr.f32.mxu0 0.0
        %1618 = vmatmul.mubr.f32.gmra.mxu0 %v1503
        %v1619 = vpop.f32.mrf.mxu0
        %v1620 = vadd.f32 %v1500, %v1619
        %v1621 = vpop.f32.mrf.mxu0
        %1622 = vmatprep.mubr.f32.mxu0 0.0
        %1623 = vmatmul.mubr.f32.gmra.mxu0 %v1506
        %v1624 = vpop.f32.mrf.mxu0
        %v1625 = vadd.f32 %v1500, %v1624
        %v1626 = vpop.f32.mrf.mxu0
        %1627 = vmatprep.mubr.f32.mxu0 0.0
        %1628 = vmatmul.mubr.f32.gmra.mxu0 %v1509
        %v1629 = vpop.f32.mrf.mxu0
        %v1630 = vadd.f32 %v1500, %v1629
        %v1631 = vpop.f32.mrf.mxu0
        %1632 = vmatprep.mubr.f32.mxu0 0.0
        %1633 = vmatmul.mubr.f32.gmra.mxu0 %v1512
        %v1634 = vpop.f32.mrf.mxu0
        %v1635 = vadd.f32 %v1500, %v1634
        %v1636 = vpop.f32.mrf.mxu0
        %1637 = vmatprep.mubr.f32.mxu0 0.0
        %1638 = vmatmul.mubr.f32.gmra.mxu0 %v1515
        %v1639 = vpop.f32.mrf.mxu0
        %v1640 = vadd.f32 %v1500, %v1639
        %v1641 = vpop.f32.mrf.mxu0
        %1642 = vmatprep.mubr.f32.mxu0 0.0
        %1643 = vmatmul.mubr.f32.gmra.mxu0 %v1518
        %v1644 = vpop.f32.mrf.mxu0
        %v1645 = vadd.f32 %v1500, %v1644
        %v1646 = vpop.f32.mrf.mxu0
        %1647 = vmatprep.mubr.f32.mxu0 0.0
        %1648 = vmatmul.mubr.f32.gmra.mxu0 %v1521
        %v1649 = vpop.f32.mrf.mxu0
        %v1650 = vadd.f32 %v1500, %v1649
        %v1651 = vpop.f32.mrf.mxu0
        %1652 = vmatprep.mubr.f32.mxu0 0.0
        %1653 = vmatmul.mubr.f32.gmra.mxu0 %v1524
        %v1654 = vpop.f32.mrf.mxu0
        %v1655 = vadd.f32 %v1500, %v1654
        %v1656 = vpop.f32.mrf.mxu0
        %1657 = vmatprep.mubr.f32.mxu0 0.0
        %1658 = vmatmul.mubr.f32.gmra.mxu0 %v1527
        %v1659 = vpop.f32.mrf.mxu0
        %v1660 = vadd.f32 %v1500, %v1659
        %v1661 = vpop.f32.mrf.mxu0
        %1662 = vmatprep.mubr.f32.mxu0 0.0
        %1663 = vmatmul.mubr.f32.gmra.mxu0 %v1530
        %v1664 = vpop.f32.mrf.mxu0
        %v1665 = vadd.f32 %v1500, %v1664
        %v1666 = vpop.f32.mrf.mxu0
        %1667 = vmatprep.mubr.f32.mxu0 0.0
        %1668 = vmatmul.mubr.f32.gmra.mxu0 %v1533
        %v1669 = vpop.f32.mrf.mxu0
        %v1670 = vadd.f32 %v1500, %v1669
        %v1671 = vpop.f32.mrf.mxu0
        %1672 = vmatprep.mubr.f32.mxu0 0.0
        %1673 = vmatmul.mubr.f32.gmra.mxu0 %v1536
        %v1674 = vpop.f32.mrf.mxu0
        %v1675 = vadd.f32 %v1500, %v1674
        %v1676 = vpop.f32.mrf.mxu0
        %1677 = vmatprep.mubr.f32.mxu0 0.0
        %1678 = vmatmul.mubr.f32.gmra.mxu0 %v1539
        %v1679 = vpop.f32.mrf.mxu0
        %v1680 = vadd.f32 %v1500, %v1679
        %v1681 = vpop.f32.mrf.mxu0
        %1682 = vmatprep.mubr.f32.mxu0 0.0
        %1683 = vmatmul.mubr.f32.gmra.mxu0 %v1542
        %v1684 = vpop.f32.mrf.mxu0
        %v1685 = vadd.f32 %v1500, %v1684
        %v1686 = vpop.f32.mrf.mxu0
        %1687 = vmatprep.mubr.f32.mxu0 0.0
        %1688 = vmatmul.mubr.f32.gmra.mxu0 %v1545
        %v1689 = vpop.f32.mrf.mxu0
        %v1690 = vadd.f32 %v1500, %v1689
        %v1691 = vpop.f32.mrf.mxu0
        %1692 = vmatprep.mubr.f32.mxu0 0.0
        %1693 = vmatmul.mubr.f32.gmra.mxu0 %v1548
        %v1694 = vpop.f32.mrf.mxu0
        %v1695 = vadd.f32 %v1500, %v1694
        %v1696 = vpop.f32.mrf.mxu0
        %1697 = vdwg.mxu0
        %1698 = vst.msk [vmem:[#allocation2 + $0x280] sm:$0xff] %vm502, %v1620
        %1699 = vst.msk [vmem:[#allocation2 + $0x288] sm:$0xff] %vm502, %v1625
        %1700 = vst.msk [vmem:[#allocation2 + $0x290] sm:$0xff] %vm502, %v1630
        %1701 = vst.msk [vmem:[#allocation2 + $0x298] sm:$0xff] %vm502, %v1635
        %1702 = vst.msk [vmem:[#allocation2 + $0x2a0] sm:$0xff] %vm502, %v1640
        %1703 = vst.msk [vmem:[#allocation2 + $0x2a8] sm:$0xff] %vm502, %v1645
        %1704 = vst.msk [vmem:[#allocation2 + $0x2b0] sm:$0xff] %vm502, %v1650
        %1705 = vst.msk [vmem:[#allocation2 + $0x2b8] sm:$0xff] %vm502, %v1655
        %1706 = vst.msk [vmem:[#allocation2 + $0x2c0] sm:$0xff] %vm502, %v1660
        %1707 = vst.msk [vmem:[#allocation2 + $0x2c8] sm:$0xff] %vm502, %v1665
        %1708 = vst.msk [vmem:[#allocation2 + $0x2d0] sm:$0xff] %vm502, %v1670
        %1709 = vst.msk [vmem:[#allocation2 + $0x2d8] sm:$0xff] %vm502, %v1675
        %1710 = vst.msk [vmem:[#allocation2 + $0x2e0] sm:$0xff] %vm502, %v1680
        %1711 = vst.msk [vmem:[#allocation2 + $0x2e8] sm:$0xff] %vm502, %v1685
        %1712 = vst.msk [vmem:[#allocation2 + $0x2f0] sm:$0xff] %vm502, %v1690
        %1713 = vst.msk [vmem:[#allocation2 + $0x2f8] sm:$0xff] %vm502, %v1695
        %v1714 = vld [vmem:[%s276 + $0x300] sm:$0xff]
        %v1715 = vld [vmem:[%s276 + $0x308] sm:$0xff]
        %v1716 = vld [vmem:[%s276 + $0x310] sm:$0xff]
        %v1717 = vld [vmem:[%s276 + $0x318] sm:$0xff]
        %v1718 = vld [vmem:[%s276 + $0x320] sm:$0xff]
        %v1719 = vld [vmem:[%s276 + $0x328] sm:$0xff]
        %v1720 = vld [vmem:[%s276 + $0x330] sm:$0xff]
        %v1721 = vld [vmem:[%s276 + $0x338] sm:$0xff]
        %v1722 = vld [vmem:[%s276 + $0x340] sm:$0xff]
        %v1723 = vld [vmem:[%s276 + $0x348] sm:$0xff]
        %v1724 = vld [vmem:[%s276 + $0x350] sm:$0xff]
        %v1725 = vld [vmem:[%s276 + $0x358] sm:$0xff]
        %v1726 = vld [vmem:[%s276 + $0x360] sm:$0xff]
        %v1727 = vld [vmem:[%s276 + $0x368] sm:$0xff]
        %v1728 = vld [vmem:[%s276 + $0x370] sm:$0xff]
        %v1729 = vld [vmem:[%s276 + $0x378] sm:$0xff]
        %v1730 = vld [vmem:[%s1] sm:$0xff]
        %v1731 = vld [vmem:[%s1 + $0x8] sm:$0xff]
        %v1732 = vld [vmem:[%s1 + $0x10] sm:$0xff]
        %v1733 = vld [vmem:[%s1 + $0x18] sm:$0x7]
        %v1734 = vld [vmem:[%s2] sm:$0x1]
        %v1736 = vlaneseq
        %v1737 = vshrl.u32 %v1736, 7
        %v1738 = vsub.s32 0, %v1737
        %v1739 = vrot.slane %v1734, %v1738
        %v1742 = vsel %vm304, %v1714, 0
        %v1745 = vsel %vm304, %v1715, 0
        %v1748 = vsel %vm304, %v1716, 0
        %v1751 = vsel %vm304, %v1717, 0
        %v1754 = vsel %vm304, %v1718, 0
        %v1757 = vsel %vm304, %v1719, 0
        %v1760 = vsel %vm304, %v1720, 0
        %v1763 = vsel %vm304, %v1721, 0
        %v1766 = vsel %vm304, %v1722, 0
        %v1769 = vsel %vm304, %v1723, 0
        %v1772 = vsel %vm304, %v1724, 0
        %v1775 = vsel %vm304, %v1725, 0
        %v1778 = vsel %vm304, %v1726, 0
        %v1781 = vsel %vm304, %v1727, 0
        %v1784 = vsel %vm304, %v1728, 0
        %v1787 = vsel %vm304, %v1729, 0
        %v1790 = vsel %vm353, %v1733, 0
        %1792 = vmatprep.subr.mxu0 0.0
        %1793 = vmatpush1.msra.mxu0 0.0
        %1794 = vmatprep.subr.mxu0 0.0
        %1795 = vmatpush1.msra.mxu0 0.0
        %1796 = vmatprep.subr.mxu0 0.0
        %1797 = vmatpush1.msra.mxu0 0.0
        %1798 = vmatprep.subr.mxu0 0.0
        %1799 = vmatpush1.msra.mxu0 0.0
        %1800 = vmatprep.subr.mxu0 0.0
        %1801 = vmatpush1.msra.mxu0 0.0
        %1802 = vmatprep.subr.mxu0 0.0
        %1803 = vmatpush1.msra.mxu0 0.0
        %1804 = vmatprep.subr.mxu0 0.0
        %1805 = vmatpush1.msra.mxu0 0.0
        %1806 = vmatprep.subr.mxu0 0.0
        %1807 = vmatpush1.msra.mxu0 0.0
        %1808 = vmatprep.subr.mxu0 0.0
        %1809 = vmatpush1.msra.mxu0 0.0
        %1810 = vmatprep.subr.mxu0 0.0
        %1811 = vmatpush1.msra.mxu0 0.0
        %1812 = vmatprep.subr.mxu0 0.0
        %1813 = vmatpush1.msra.mxu0 0.0
        %1814 = vmatprep.subr.mxu0 0.0
        %1815 = vmatpush1.msra.mxu0 0.0
        %1816 = vmatprep.subr.mxu0 0.0
        %1817 = vmatpush1.msra.mxu0 %v1790
        %1818 = vmatprep.subr.mxu0 0.0
        %1819 = vmatpush1.msra.mxu0 %v1732
        %1820 = vmatprep.subr.mxu0 0.0
        %1821 = vmatpush1.msra.mxu0 %v1731
        %1822 = vmatprep.subr.mxu0 0.0
        %1823 = vmatpush1.msra.mxu0 %v1730
        %1824 = vmatprep.subr.mxu0 0.0
        %1825 = vmatpush2.msra.mxu0 0.0
        %1826 = vmatprep.subr.mxu0 0.0
        %1827 = vmatpush2.msra.mxu0 0.0
        %1828 = vmatprep.subr.mxu0 0.0
        %1829 = vmatpush2.msra.mxu0 0.0
        %1830 = vmatprep.subr.mxu0 0.0
        %1831 = vmatpush2.msra.mxu0 0.0
        %1832 = vmatprep.subr.mxu0 0.0
        %1833 = vmatpush2.msra.mxu0 0.0
        %1834 = vmatprep.subr.mxu0 0.0
        %1835 = vmatpush2.msra.mxu0 0.0
        %1836 = vmatprep.subr.mxu0 0.0
        %1837 = vmatpush2.msra.mxu0 0.0
        %1838 = vmatprep.subr.mxu0 0.0
        %1839 = vmatpush2.msra.mxu0 0.0
        %1840 = vmatprep.subr.mxu0 0.0
        %1841 = vmatpush2.msra.mxu0 0.0
        %1842 = vmatprep.subr.mxu0 0.0
        %1843 = vmatpush2.msra.mxu0 0.0
        %1844 = vmatprep.subr.mxu0 0.0
        %1845 = vmatpush2.msra.mxu0 0.0
        %1846 = vmatprep.subr.mxu0 0.0
        %1847 = vmatpush2.msra.mxu0 0.0
        %1848 = vmatprep.subr.mxu0 0.0
        %1849 = vmatpush2.msra.mxu0 0.0
        %1850 = vmatprep.subr.mxu0 0.0
        %1851 = vmatpush2.msra.mxu0 0.0
        %1852 = vmatprep.subr.mxu0 0.0
        %1853 = vmatpush2.msra.mxu0 0.0
        %1854 = vmatprep.subr.mxu0 0.0
        %1855 = vmatpush2.msra.mxu0 0.0
        %1856 = vmatprep.mubr.f32.mxu0 0.0
        %1857 = vmatmul.mubr.f32.gmra.mxu0 %v1742
        %v1858 = vpop.f32.mrf.mxu0
        %v1859 = vadd.f32 %v1739, %v1858
        %v1860 = vpop.f32.mrf.mxu0
        %1861 = vmatprep.mubr.f32.mxu0 0.0
        %1862 = vmatmul.mubr.f32.gmra.mxu0 %v1745
        %v1863 = vpop.f32.mrf.mxu0
        %v1864 = vadd.f32 %v1739, %v1863
        %v1865 = vpop.f32.mrf.mxu0
        %1866 = vmatprep.mubr.f32.mxu0 0.0
        %1867 = vmatmul.mubr.f32.gmra.mxu0 %v1748
        %v1868 = vpop.f32.mrf.mxu0
        %v1869 = vadd.f32 %v1739, %v1868
        %v1870 = vpop.f32.mrf.mxu0
        %1871 = vmatprep.mubr.f32.mxu0 0.0
        %1872 = vmatmul.mubr.f32.gmra.mxu0 %v1751
        %v1873 = vpop.f32.mrf.mxu0
        %v1874 = vadd.f32 %v1739, %v1873
        %v1875 = vpop.f32.mrf.mxu0
        %1876 = vmatprep.mubr.f32.mxu0 0.0
        %1877 = vmatmul.mubr.f32.gmra.mxu0 %v1754
        %v1878 = vpop.f32.mrf.mxu0
        %v1879 = vadd.f32 %v1739, %v1878
        %v1880 = vpop.f32.mrf.mxu0
        %1881 = vmatprep.mubr.f32.mxu0 0.0
        %1882 = vmatmul.mubr.f32.gmra.mxu0 %v1757
        %v1883 = vpop.f32.mrf.mxu0
        %v1884 = vadd.f32 %v1739, %v1883
        %v1885 = vpop.f32.mrf.mxu0
        %1886 = vmatprep.mubr.f32.mxu0 0.0
        %1887 = vmatmul.mubr.f32.gmra.mxu0 %v1760
        %v1888 = vpop.f32.mrf.mxu0
        %v1889 = vadd.f32 %v1739, %v1888
        %v1890 = vpop.f32.mrf.mxu0
        %1891 = vmatprep.mubr.f32.mxu0 0.0
        %1892 = vmatmul.mubr.f32.gmra.mxu0 %v1763
        %v1893 = vpop.f32.mrf.mxu0
        %v1894 = vadd.f32 %v1739, %v1893
        %v1895 = vpop.f32.mrf.mxu0
        %1896 = vmatprep.mubr.f32.mxu0 0.0
        %1897 = vmatmul.mubr.f32.gmra.mxu0 %v1766
        %v1898 = vpop.f32.mrf.mxu0
        %v1899 = vadd.f32 %v1739, %v1898
        %v1900 = vpop.f32.mrf.mxu0
        %1901 = vmatprep.mubr.f32.mxu0 0.0
        %1902 = vmatmul.mubr.f32.gmra.mxu0 %v1769
        %v1903 = vpop.f32.mrf.mxu0
        %v1904 = vadd.f32 %v1739, %v1903
        %v1905 = vpop.f32.mrf.mxu0
        %1906 = vmatprep.mubr.f32.mxu0 0.0
        %1907 = vmatmul.mubr.f32.gmra.mxu0 %v1772
        %v1908 = vpop.f32.mrf.mxu0
        %v1909 = vadd.f32 %v1739, %v1908
        %v1910 = vpop.f32.mrf.mxu0
        %1911 = vmatprep.mubr.f32.mxu0 0.0
        %1912 = vmatmul.mubr.f32.gmra.mxu0 %v1775
        %v1913 = vpop.f32.mrf.mxu0
        %v1914 = vadd.f32 %v1739, %v1913
        %v1915 = vpop.f32.mrf.mxu0
        %1916 = vmatprep.mubr.f32.mxu0 0.0
        %1917 = vmatmul.mubr.f32.gmra.mxu0 %v1778
        %v1918 = vpop.f32.mrf.mxu0
        %v1919 = vadd.f32 %v1739, %v1918
        %v1920 = vpop.f32.mrf.mxu0
        %1921 = vmatprep.mubr.f32.mxu0 0.0
        %1922 = vmatmul.mubr.f32.gmra.mxu0 %v1781
        %v1923 = vpop.f32.mrf.mxu0
        %v1924 = vadd.f32 %v1739, %v1923
        %v1925 = vpop.f32.mrf.mxu0
        %1926 = vmatprep.mubr.f32.mxu0 0.0
        %1927 = vmatmul.mubr.f32.gmra.mxu0 %v1784
        %v1928 = vpop.f32.mrf.mxu0
        %v1929 = vadd.f32 %v1739, %v1928
        %v1930 = vpop.f32.mrf.mxu0
        %1931 = vmatprep.mubr.f32.mxu0 0.0
        %1932 = vmatmul.mubr.f32.gmra.mxu0 %v1787
        %v1933 = vpop.f32.mrf.mxu0
        %v1934 = vadd.f32 %v1739, %v1933
        %v1935 = vpop.f32.mrf.mxu0
        %1936 = vdwg.mxu0
        %1937 = vst.msk [vmem:[#allocation2 + $0x300] sm:$0xff] %vm502, %v1859
        %1938 = vst.msk [vmem:[#allocation2 + $0x308] sm:$0xff] %vm502, %v1864
        %1939 = vst.msk [vmem:[#allocation2 + $0x310] sm:$0xff] %vm502, %v1869
        %1940 = vst.msk [vmem:[#allocation2 + $0x318] sm:$0xff] %vm502, %v1874
        %1941 = vst.msk [vmem:[#allocation2 + $0x320] sm:$0xff] %vm502, %v1879
        %1942 = vst.msk [vmem:[#allocation2 + $0x328] sm:$0xff] %vm502, %v1884
        %1943 = vst.msk [vmem:[#allocation2 + $0x330] sm:$0xff] %vm502, %v1889
        %1944 = vst.msk [vmem:[#allocation2 + $0x338] sm:$0xff] %vm502, %v1894
        %1945 = vst.msk [vmem:[#allocation2 + $0x340] sm:$0xff] %vm502, %v1899
        %1946 = vst.msk [vmem:[#allocation2 + $0x348] sm:$0xff] %vm502, %v1904
        %1947 = vst.msk [vmem:[#allocation2 + $0x350] sm:$0xff] %vm502, %v1909
        %1948 = vst.msk [vmem:[#allocation2 + $0x358] sm:$0xff] %vm502, %v1914
        %1949 = vst.msk [vmem:[#allocation2 + $0x360] sm:$0xff] %vm502, %v1919
        %1950 = vst.msk [vmem:[#allocation2 + $0x368] sm:$0xff] %vm502, %v1924
        %1951 = vst.msk [vmem:[#allocation2 + $0x370] sm:$0xff] %vm502, %v1929
        %1952 = vst.msk [vmem:[#allocation2 + $0x378] sm:$0xff] %vm502, %v1934
        %v1953 = vld [vmem:[%s276 + $0x380] sm:$0xf]
        %v1954 = vld [vmem:[%s1] sm:$0xff]
        %v1955 = vld [vmem:[%s1 + $0x8] sm:$0xff]
        %v1956 = vld [vmem:[%s1 + $0x10] sm:$0xff]
        %v1957 = vld [vmem:[%s1 + $0x18] sm:$0x7]
        %v1958 = vld [vmem:[%s2] sm:$0x1]
        %v1960 = vlaneseq
        %v1961 = vshrl.u32 %v1960, 7
        %v1962 = vsub.s32 0, %v1961
        %v1963 = vrot.slane %v1958, %v1962
        %v1966 = vsel %vm304, %v1953, 0
        %v1969 = vsel %vm353, %v1957, 0
        %1971 = vmatprep.subr.mxu0 0.0
        %1972 = vmatpush1.msra.mxu0 0.0
        %1973 = vmatprep.subr.mxu0 0.0
        %1974 = vmatpush1.msra.mxu0 0.0
        %1975 = vmatprep.subr.mxu0 0.0
        %1976 = vmatpush1.msra.mxu0 0.0
        %1977 = vmatprep.subr.mxu0 0.0
        %1978 = vmatpush1.msra.mxu0 0.0
        %1979 = vmatprep.subr.mxu0 0.0
        %1980 = vmatpush1.msra.mxu0 0.0
        %1981 = vmatprep.subr.mxu0 0.0
        %1982 = vmatpush1.msra.mxu0 0.0
        %1983 = vmatprep.subr.mxu0 0.0
        %1984 = vmatpush1.msra.mxu0 0.0
        %1985 = vmatprep.subr.mxu0 0.0
        %1986 = vmatpush1.msra.mxu0 0.0
        %1987 = vmatprep.subr.mxu0 0.0
        %1988 = vmatpush1.msra.mxu0 0.0
        %1989 = vmatprep.subr.mxu0 0.0
        %1990 = vmatpush1.msra.mxu0 0.0
        %1991 = vmatprep.subr.mxu0 0.0
        %1992 = vmatpush1.msra.mxu0 0.0
        %1993 = vmatprep.subr.mxu0 0.0
        %1994 = vmatpush1.msra.mxu0 0.0
        %1995 = vmatprep.subr.mxu0 0.0
        %1996 = vmatpush1.msra.mxu0 %v1969
        %1997 = vmatprep.subr.mxu0 0.0
        %1998 = vmatpush1.msra.mxu0 %v1956
        %1999 = vmatprep.subr.mxu0 0.0
        %2000 = vmatpush1.msra.mxu0 %v1955
        %2001 = vmatprep.subr.mxu0 0.0
        %2002 = vmatpush1.msra.mxu0 %v1954
        %2003 = vmatprep.subr.mxu0 0.0
        %2004 = vmatpush2.msra.mxu0 0.0
        %2005 = vmatprep.subr.mxu0 0.0
        %2006 = vmatpush2.msra.mxu0 0.0
        %2007 = vmatprep.subr.mxu0 0.0
        %2008 = vmatpush2.msra.mxu0 0.0
        %2009 = vmatprep.subr.mxu0 0.0
        %2010 = vmatpush2.msra.mxu0 0.0
        %2011 = vmatprep.subr.mxu0 0.0
        %2012 = vmatpush2.msra.mxu0 0.0
        %2013 = vmatprep.subr.mxu0 0.0
        %2014 = vmatpush2.msra.mxu0 0.0
        %2015 = vmatprep.subr.mxu0 0.0
        %2016 = vmatpush2.msra.mxu0 0.0
        %2017 = vmatprep.subr.mxu0 0.0
        %2018 = vmatpush2.msra.mxu0 0.0
        %2019 = vmatprep.subr.mxu0 0.0
        %2020 = vmatpush2.msra.mxu0 0.0
        %2021 = vmatprep.subr.mxu0 0.0
        %2022 = vmatpush2.msra.mxu0 0.0
        %2023 = vmatprep.subr.mxu0 0.0
        %2024 = vmatpush2.msra.mxu0 0.0
        %2025 = vmatprep.subr.mxu0 0.0
        %2026 = vmatpush2.msra.mxu0 0.0
        %2027 = vmatprep.subr.mxu0 0.0
        %2028 = vmatpush2.msra.mxu0 0.0
        %2029 = vmatprep.subr.mxu0 0.0
        %2030 = vmatpush2.msra.mxu0 0.0
        %2031 = vmatprep.subr.mxu0 0.0
        %2032 = vmatpush2.msra.mxu0 0.0
        %2033 = vmatprep.subr.mxu0 0.0
        %2034 = vmatpush2.msra.mxu0 0.0
        %2035 = vmatprep.mubr.f32.mxu0 0.0
        %2036 = vmatmul.mubr.f32.gmra.mxu0 %v1966
        %v2037 = vpop.f32.mrf.mxu0
        %v2038 = vadd.f32 %v1963, %v2037
        %v2039 = vpop.f32.mrf.mxu0
        %2040 = vdwg.mxu0
        %vm2041 = vcmask 125952
        %2042 = vst.msk [vmem:[#allocation2 + $0x380] sm:$0xf] %vm2041, %v2038
        %v2043 = vld [vmem:[#allocation2] sm:$0xff]
        %v2044 = vld [vmem:[#allocation2 + $0x8] sm:$0xff]
        %v2045 = vld [vmem:[#allocation2 + $0x10] sm:$0xff]
        %v2046 = vld [vmem:[#allocation2 + $0x18] sm:$0xff]
        %v2047 = vld [vmem:[#allocation2 + $0x20] sm:$0xff]
        %v2048 = vld [vmem:[#allocation2 + $0x28] sm:$0xff]
        %v2049 = vld [vmem:[#allocation2 + $0x30] sm:$0xff]
        %v2050 = vld [vmem:[#allocation2 + $0x38] sm:$0xff]
        %v2051 = vld [vmem:[#allocation2 + $0x40] sm:$0xff]
        %v2052 = vld [vmem:[#allocation2 + $0x48] sm:$0xff]
        %v2053 = vld [vmem:[#allocation2 + $0x50] sm:$0xff]
        %v2054 = vld [vmem:[#allocation2 + $0x58] sm:$0xff]
        %v2055 = vld [vmem:[#allocation2 + $0x60] sm:$0xff]
        %v2056 = vld [vmem:[#allocation2 + $0x68] sm:$0xff]
        %v2057 = vld [vmem:[#allocation2 + $0x70] sm:$0x7f]
        %v2058 = vld [vmem:[#allocation2 + $0x1] sm:$0xff]
        %v2059 = vld [vmem:[#allocation2 + $0x9] sm:$0xff]
        %v2060 = vld [vmem:[#allocation2 + $0x11] sm:$0xff]
        %v2061 = vld [vmem:[#allocation2 + $0x19] sm:$0xff]
        %v2062 = vld [vmem:[#allocation2 + $0x21] sm:$0xff]
        %v2063 = vld [vmem:[#allocation2 + $0x29] sm:$0xff]
        %v2064 = vld [vmem:[#allocation2 + $0x31] sm:$0xff]
        %v2065 = vld [vmem:[#allocation2 + $0x39] sm:$0xff]
        %v2066 = vld [vmem:[#allocation2 + $0x41] sm:$0xff]
        %v2067 = vld [vmem:[#allocation2 + $0x49] sm:$0xff]
        %v2068 = vld [vmem:[#allocation2 + $0x51] sm:$0xff]
        %v2069 = vld [vmem:[#allocation2 + $0x59] sm:$0xff]
        %v2070 = vld [vmem:[#allocation2 + $0x61] sm:$0xff]
        %v2071 = vld [vmem:[#allocation2 + $0x69] sm:$0xff]
        %v2072 = vld [vmem:[#allocation2 + $0x71] sm:$0x7f]
        %v2073 = vmax.f32 %v2043, %v2058
        %v2074 = vmax.f32 %v2044, %v2059
        %v2075 = vmax.f32 %v2045, %v2060
        %v2076 = vmax.f32 %v2046, %v2061
        %v2077 = vmax.f32 %v2047, %v2062
        %v2078 = vmax.f32 %v2048, %v2063
        %v2079 = vmax.f32 %v2049, %v2064
        %v2080 = vmax.f32 %v2050, %v2065
        %v2081 = vmax.f32 %v2051, %v2066
        %v2082 = vmax.f32 %v2052, %v2067
        %v2083 = vmax.f32 %v2053, %v2068
        %v2084 = vmax.f32 %v2054, %v2069
        %v2085 = vmax.f32 %v2055, %v2070
        %v2086 = vmax.f32 %v2056, %v2071
        %v2087 = vmax.f32 %v2057, %v2072
        %2088 = vst.msk [vmem:[#allocation2] sm:$0xff] %vm502, %v2073
        %2089 = vst.msk [vmem:[#allocation2 + $0x8] sm:$0xff] %vm502, %v2074
        %2090 = vst.msk [vmem:[#allocation2 + $0x10] sm:$0xff] %vm502, %v2075
        %2091 = vst.msk [vmem:[#allocation2 + $0x18] sm:$0xff] %vm502, %v2076
        %2092 = vst.msk [vmem:[#allocation2 + $0x20] sm:$0xff] %vm502, %v2077
        %2093 = vst.msk [vmem:[#allocation2 + $0x28] sm:$0xff] %vm502, %v2078
        %2094 = vst.msk [vmem:[#allocation2 + $0x30] sm:$0xff] %vm502, %v2079
        %2095 = vst.msk [vmem:[#allocation2 + $0x38] sm:$0xff] %vm502, %v2080
        %2096 = vst.msk [vmem:[#allocation2 + $0x40] sm:$0xff] %vm502, %v2081
        %2097 = vst.msk [vmem:[#allocation2 + $0x48] sm:$0xff] %vm502, %v2082
        %2098 = vst.msk [vmem:[#allocation2 + $0x50] sm:$0xff] %vm502, %v2083
        %2099 = vst.msk [vmem:[#allocation2 + $0x58] sm:$0xff] %vm502, %v2084
        %2100 = vst.msk [vmem:[#allocation2 + $0x60] sm:$0xff] %vm502, %v2085
        %2101 = vst.msk [vmem:[#allocation2 + $0x68] sm:$0xff] %vm502, %v2086
        %vm2102 = vcmask 129024
        %2103 = vst.msk [vmem:[#allocation2 + $0x70] sm:$0x7f] %vm2102, %v2087
        %v2104 = vld [vmem:[#allocation2 + $0x78] sm:$0xff]
        %v2105 = vld [vmem:[#allocation2 + $0x80] sm:$0xff]
        %v2106 = vld [vmem:[#allocation2 + $0x88] sm:$0xff]
        %v2107 = vld [vmem:[#allocation2 + $0x90] sm:$0xff]
        %v2108 = vld [vmem:[#allocation2 + $0x98] sm:$0xff]
        %v2109 = vld [vmem:[#allocation2 + $0xa0] sm:$0xff]
        %v2110 = vld [vmem:[#allocation2 + $0xa8] sm:$0xff]
        %v2111 = vld [vmem:[#allocation2 + $0xb0] sm:$0xff]
        %v2112 = vld [vmem:[#allocation2 + $0xb8] sm:$0xff]
        %v2113 = vld [vmem:[#allocation2 + $0xc0] sm:$0xff]
        %v2114 = vld [vmem:[#allocation2 + $0xc8] sm:$0xff]
        %v2115 = vld [vmem:[#allocation2 + $0xd0] sm:$0xff]
        %v2116 = vld [vmem:[#allocation2 + $0xd8] sm:$0xff]
        %v2117 = vld [vmem:[#allocation2 + $0xe0] sm:$0xff]
        %v2118 = vld [vmem:[#allocation2 + $0xe8] sm:$0x7f]
        %v2119 = vld [vmem:[#allocation2 + $0x79] sm:$0xff]
        %v2120 = vld [vmem:[#allocation2 + $0x81] sm:$0xff]
        %v2121 = vld [vmem:[#allocation2 + $0x89] sm:$0xff]
        %v2122 = vld [vmem:[#allocation2 + $0x91] sm:$0xff]
        %v2123 = vld [vmem:[#allocation2 + $0x99] sm:$0xff]
        %v2124 = vld [vmem:[#allocation2 + $0xa1] sm:$0xff]
        %v2125 = vld [vmem:[#allocation2 + $0xa9] sm:$0xff]
        %v2126 = vld [vmem:[#allocation2 + $0xb1] sm:$0xff]
        %v2127 = vld [vmem:[#allocation2 + $0xb9] sm:$0xff]
        %v2128 = vld [vmem:[#allocation2 + $0xc1] sm:$0xff]
        %v2129 = vld [vmem:[#allocation2 + $0xc9] sm:$0xff]
        %v2130 = vld [vmem:[#allocation2 + $0xd1] sm:$0xff]
        %v2131 = vld [vmem:[#allocation2 + $0xd9] sm:$0xff]
        %v2132 = vld [vmem:[#allocation2 + $0xe1] sm:$0xff]
        %v2133 = vld [vmem:[#allocation2 + $0xe9] sm:$0x7f]
        %v2134 = vmax.f32 %v2104, %v2119
        %v2135 = vmax.f32 %v2105, %v2120
        %v2136 = vmax.f32 %v2106, %v2121
        %v2137 = vmax.f32 %v2107, %v2122
        %v2138 = vmax.f32 %v2108, %v2123
        %v2139 = vmax.f32 %v2109, %v2124
        %v2140 = vmax.f32 %v2110, %v2125
        %v2141 = vmax.f32 %v2111, %v2126
        %v2142 = vmax.f32 %v2112, %v2127
        %v2143 = vmax.f32 %v2113, %v2128
        %v2144 = vmax.f32 %v2114, %v2129
        %v2145 = vmax.f32 %v2115, %v2130
        %v2146 = vmax.f32 %v2116, %v2131
        %v2147 = vmax.f32 %v2117, %v2132
        %v2148 = vmax.f32 %v2118, %v2133
        %2149 = vst.msk [vmem:[#allocation2 + $0x78] sm:$0xff] %vm502, %v2134
        %2150 = vst.msk [vmem:[#allocation2 + $0x80] sm:$0xff] %vm502, %v2135
        %2151 = vst.msk [vmem:[#allocation2 + $0x88] sm:$0xff] %vm502, %v2136
        %2152 = vst.msk [vmem:[#allocation2 + $0x90] sm:$0xff] %vm502, %v2137
        %2153 = vst.msk [vmem:[#allocation2 + $0x98] sm:$0xff] %vm502, %v2138
        %2154 = vst.msk [vmem:[#allocation2 + $0xa0] sm:$0xff] %vm502, %v2139
        %2155 = vst.msk [vmem:[#allocation2 + $0xa8] sm:$0xff] %vm502, %v2140
        %2156 = vst.msk [vmem:[#allocation2 + $0xb0] sm:$0xff] %vm502, %v2141
        %2157 = vst.msk [vmem:[#allocation2 + $0xb8] sm:$0xff] %vm502, %v2142
        %2158 = vst.msk [vmem:[#allocation2 + $0xc0] sm:$0xff] %vm502, %v2143
        %2159 = vst.msk [vmem:[#allocation2 + $0xc8] sm:$0xff] %vm502, %v2144
        %2160 = vst.msk [vmem:[#allocation2 + $0xd0] sm:$0xff] %vm502, %v2145
        %2161 = vst.msk [vmem:[#allocation2 + $0xd8] sm:$0xff] %vm502, %v2146
        %2162 = vst.msk [vmem:[#allocation2 + $0xe0] sm:$0xff] %vm502, %v2147
        %2163 = vst.msk [vmem:[#allocation2 + $0xe8] sm:$0x7f] %vm2102, %v2148
        %v2164 = vld [vmem:[#allocation2 + $0xf0] sm:$0xff]
        %v2165 = vld [vmem:[#allocation2 + $0xf8] sm:$0xff]
        %v2166 = vld [vmem:[#allocation2 + $0x100] sm:$0xff]
        %v2167 = vld [vmem:[#allocation2 + $0x108] sm:$0xff]
        %v2168 = vld [vmem:[#allocation2 + $0x110] sm:$0xff]
        %v2169 = vld [vmem:[#allocation2 + $0x118] sm:$0xff]
        %v2170 = vld [vmem:[#allocation2 + $0x120] sm:$0xff]
        %v2171 = vld [vmem:[#allocation2 + $0x128] sm:$0xff]
        %v2172 = vld [vmem:[#allocation2 + $0x130] sm:$0xff]
        %v2173 = vld [vmem:[#allocation2 + $0x138] sm:$0xff]
        %v2174 = vld [vmem:[#allocation2 + $0x140] sm:$0xff]
        %v2175 = vld [vmem:[#allocation2 + $0x148] sm:$0xff]
        %v2176 = vld [vmem:[#allocation2 + $0x150] sm:$0xff]
        %v2177 = vld [vmem:[#allocation2 + $0x158] sm:$0xff]
        %v2178 = vld [vmem:[#allocation2 + $0x160] sm:$0x7f]
        %v2179 = vld [vmem:[#allocation2 + $0xf1] sm:$0xff]
        %v2180 = vld [vmem:[#allocation2 + $0xf9] sm:$0xff]
        %v2181 = vld [vmem:[#allocation2 + $0x101] sm:$0xff]
        %v2182 = vld [vmem:[#allocation2 + $0x109] sm:$0xff]
        %v2183 = vld [vmem:[#allocation2 + $0x111] sm:$0xff]
        %v2184 = vld [vmem:[#allocation2 + $0x119] sm:$0xff]
        %v2185 = vld [vmem:[#allocation2 + $0x121] sm:$0xff]
        %v2186 = vld [vmem:[#allocation2 + $0x129] sm:$0xff]
        %v2187 = vld [vmem:[#allocation2 + $0x131] sm:$0xff]
        %v2188 = vld [vmem:[#allocation2 + $0x139] sm:$0xff]
        %v2189 = vld [vmem:[#allocation2 + $0x141] sm:$0xff]
        %v2190 = vld [vmem:[#allocation2 + $0x149] sm:$0xff]
        %v2191 = vld [vmem:[#allocation2 + $0x151] sm:$0xff]
        %v2192 = vld [vmem:[#allocation2 + $0x159] sm:$0xff]
        %v2193 = vld [vmem:[#allocation2 + $0x161] sm:$0x7f]
        %v2194 = vmax.f32 %v2164, %v2179
        %v2195 = vmax.f32 %v2165, %v2180
        %v2196 = vmax.f32 %v2166, %v2181
        %v2197 = vmax.f32 %v2167, %v2182
        %v2198 = vmax.f32 %v2168, %v2183
        %v2199 = vmax.f32 %v2169, %v2184
        %v2200 = vmax.f32 %v2170, %v2185
        %v2201 = vmax.f32 %v2171, %v2186
        %v2202 = vmax.f32 %v2172, %v2187
        %v2203 = vmax.f32 %v2173, %v2188
        %v2204 = vmax.f32 %v2174, %v2189
        %v2205 = vmax.f32 %v2175, %v2190
        %v2206 = vmax.f32 %v2176, %v2191
        %v2207 = vmax.f32 %v2177, %v2192
        %v2208 = vmax.f32 %v2178, %v2193
        %2209 = vst.msk [vmem:[#allocation2 + $0xf0] sm:$0xff] %vm502, %v2194
        %2210 = vst.msk [vmem:[#allocation2 + $0xf8] sm:$0xff] %vm502, %v2195
        %2211 = vst.msk [vmem:[#allocation2 + $0x100] sm:$0xff] %vm502, %v2196
        %2212 = vst.msk [vmem:[#allocation2 + $0x108] sm:$0xff] %vm502, %v2197
        %2213 = vst.msk [vmem:[#allocation2 + $0x110] sm:$0xff] %vm502, %v2198
        %2214 = vst.msk [vmem:[#allocation2 + $0x118] sm:$0xff] %vm502, %v2199
        %2215 = vst.msk [vmem:[#allocation2 + $0x120] sm:$0xff] %vm502, %v2200
        %2216 = vst.msk [vmem:[#allocation2 + $0x128] sm:$0xff] %vm502, %v2201
        %2217 = vst.msk [vmem:[#allocation2 + $0x130] sm:$0xff] %vm502, %v2202
        %2218 = vst.msk [vmem:[#allocation2 + $0x138] sm:$0xff] %vm502, %v2203
        %2219 = vst.msk [vmem:[#allocation2 + $0x140] sm:$0xff] %vm502, %v2204
        %2220 = vst.msk [vmem:[#allocation2 + $0x148] sm:$0xff] %vm502, %v2205
        %2221 = vst.msk [vmem:[#allocation2 + $0x150] sm:$0xff] %vm502, %v2206
        %2222 = vst.msk [vmem:[#allocation2 + $0x158] sm:$0xff] %vm502, %v2207
        %2223 = vst.msk [vmem:[#allocation2 + $0x160] sm:$0x7f] %vm2102, %v2208
        %v2224 = vld [vmem:[#allocation2 + $0x168] sm:$0xff]
        %v2225 = vld [vmem:[#allocation2 + $0x170] sm:$0xff]
        %v2226 = vld [vmem:[#allocation2 + $0x178] sm:$0xff]
        %v2227 = vld [vmem:[#allocation2 + $0x180] sm:$0xff]
        %v2228 = vld [vmem:[#allocation2 + $0x188] sm:$0xff]
        %v2229 = vld [vmem:[#allocation2 + $0x190] sm:$0xff]
        %v2230 = vld [vmem:[#allocation2 + $0x198] sm:$0xff]
        %v2231 = vld [vmem:[#allocation2 + $0x1a0] sm:$0xff]
        %v2232 = vld [vmem:[#allocation2 + $0x1a8] sm:$0xff]
        %v2233 = vld [vmem:[#allocation2 + $0x1b0] sm:$0xff]
        %v2234 = vld [vmem:[#allocation2 + $0x1b8] sm:$0xff]
        %v2235 = vld [vmem:[#allocation2 + $0x1c0] sm:$0xff]
        %v2236 = vld [vmem:[#allocation2 + $0x1c8] sm:$0xff]
        %v2237 = vld [vmem:[#allocation2 + $0x1d0] sm:$0xff]
        %v2238 = vld [vmem:[#allocation2 + $0x1d8] sm:$0x7f]
        %v2239 = vld [vmem:[#allocation2 + $0x169] sm:$0xff]
        %v2240 = vld [vmem:[#allocation2 + $0x171] sm:$0xff]
        %v2241 = vld [vmem:[#allocation2 + $0x179] sm:$0xff]
        %v2242 = vld [vmem:[#allocation2 + $0x181] sm:$0xff]
        %v2243 = vld [vmem:[#allocation2 + $0x189] sm:$0xff]
        %v2244 = vld [vmem:[#allocation2 + $0x191] sm:$0xff]
        %v2245 = vld [vmem:[#allocation2 + $0x199] sm:$0xff]
        %v2246 = vld [vmem:[#allocation2 + $0x1a1] sm:$0xff]
        %v2247 = vld [vmem:[#allocation2 + $0x1a9] sm:$0xff]
        %v2248 = vld [vmem:[#allocation2 + $0x1b1] sm:$0xff]
        %v2249 = vld [vmem:[#allocation2 + $0x1b9] sm:$0xff]
        %v2250 = vld [vmem:[#allocation2 + $0x1c1] sm:$0xff]
        %v2251 = vld [vmem:[#allocation2 + $0x1c9] sm:$0xff]
        %v2252 = vld [vmem:[#allocation2 + $0x1d1] sm:$0xff]
        %v2253 = vld [vmem:[#allocation2 + $0x1d9] sm:$0x7f]
        %v2254 = vmax.f32 %v2224, %v2239
        %v2255 = vmax.f32 %v2225, %v2240
        %v2256 = vmax.f32 %v2226, %v2241
        %v2257 = vmax.f32 %v2227, %v2242
        %v2258 = vmax.f32 %v2228, %v2243
        %v2259 = vmax.f32 %v2229, %v2244
        %v2260 = vmax.f32 %v2230, %v2245
        %v2261 = vmax.f32 %v2231, %v2246
        %v2262 = vmax.f32 %v2232, %v2247
        %v2263 = vmax.f32 %v2233, %v2248
        %v2264 = vmax.f32 %v2234, %v2249
        %v2265 = vmax.f32 %v2235, %v2250
        %v2266 = vmax.f32 %v2236, %v2251
        %v2267 = vmax.f32 %v2237, %v2252
        %v2268 = vmax.f32 %v2238, %v2253
        %2269 = vst.msk [vmem:[#allocation2 + $0x168] sm:$0xff] %vm502, %v2254
        %2270 = vst.msk [vmem:[#allocation2 + $0x170] sm:$0xff] %vm502, %v2255
        %2271 = vst.msk [vmem:[#allocation2 + $0x178] sm:$0xff] %vm502, %v2256
        %2272 = vst.msk [vmem:[#allocation2 + $0x180] sm:$0xff] %vm502, %v2257
        %2273 = vst.msk [vmem:[#allocation2 + $0x188] sm:$0xff] %vm502, %v2258
        %2274 = vst.msk [vmem:[#allocation2 + $0x190] sm:$0xff] %vm502, %v2259
        %2275 = vst.msk [vmem:[#allocation2 + $0x198] sm:$0xff] %vm502, %v2260
        %2276 = vst.msk [vmem:[#allocation2 + $0x1a0] sm:$0xff] %vm502, %v2261
        %2277 = vst.msk [vmem:[#allocation2 + $0x1a8] sm:$0xff] %vm502, %v2262
        %2278 = vst.msk [vmem:[#allocation2 + $0x1b0] sm:$0xff] %vm502, %v2263
        %2279 = vst.msk [vmem:[#allocation2 + $0x1b8] sm:$0xff] %vm502, %v2264
        %2280 = vst.msk [vmem:[#allocation2 + $0x1c0] sm:$0xff] %vm502, %v2265
        %2281 = vst.msk [vmem:[#allocation2 + $0x1c8] sm:$0xff] %vm502, %v2266
        %2282 = vst.msk [vmem:[#allocation2 + $0x1d0] sm:$0xff] %vm502, %v2267
        %2283 = vst.msk [vmem:[#allocation2 + $0x1d8] sm:$0x7f] %vm2102, %v2268
        %v2284 = vld [vmem:[#allocation2 + $0x1e0] sm:$0xff]
        %v2285 = vld [vmem:[#allocation2 + $0x1e8] sm:$0xff]
        %v2286 = vld [vmem:[#allocation2 + $0x1f0] sm:$0xff]
        %v2287 = vld [vmem:[#allocation2 + $0x1f8] sm:$0xff]
        %v2288 = vld [vmem:[#allocation2 + $0x200] sm:$0xff]
        %v2289 = vld [vmem:[#allocation2 + $0x208] sm:$0xff]
        %v2290 = vld [vmem:[#allocation2 + $0x210] sm:$0xff]
        %v2291 = vld [vmem:[#allocation2 + $0x218] sm:$0xff]
        %v2292 = vld [vmem:[#allocation2 + $0x220] sm:$0xff]
        %v2293 = vld [vmem:[#allocation2 + $0x228] sm:$0xff]
        %v2294 = vld [vmem:[#allocation2 + $0x230] sm:$0xff]
        %v2295 = vld [vmem:[#allocation2 + $0x238] sm:$0xff]
        %v2296 = vld [vmem:[#allocation2 + $0x240] sm:$0xff]
        %v2297 = vld [vmem:[#allocation2 + $0x248] sm:$0xff]
        %v2298 = vld [vmem:[#allocation2 + $0x250] sm:$0x7f]
        %v2299 = vld [vmem:[#allocation2 + $0x1e1] sm:$0xff]
        %v2300 = vld [vmem:[#allocation2 + $0x1e9] sm:$0xff]
        %v2301 = vld [vmem:[#allocation2 + $0x1f1] sm:$0xff]
        %v2302 = vld [vmem:[#allocation2 + $0x1f9] sm:$0xff]
        %v2303 = vld [vmem:[#allocation2 + $0x201] sm:$0xff]
        %v2304 = vld [vmem:[#allocation2 + $0x209] sm:$0xff]
        %v2305 = vld [vmem:[#allocation2 + $0x211] sm:$0xff]
        %v2306 = vld [vmem:[#allocation2 + $0x219] sm:$0xff]
        %v2307 = vld [vmem:[#allocation2 + $0x221] sm:$0xff]
        %v2308 = vld [vmem:[#allocation2 + $0x229] sm:$0xff]
        %v2309 = vld [vmem:[#allocation2 + $0x231] sm:$0xff]
        %v2310 = vld [vmem:[#allocation2 + $0x239] sm:$0xff]
        %v2311 = vld [vmem:[#allocation2 + $0x241] sm:$0xff]
        %v2312 = vld [vmem:[#allocation2 + $0x249] sm:$0xff]
        %v2313 = vld [vmem:[#allocation2 + $0x251] sm:$0x7f]
        %v2314 = vmax.f32 %v2284, %v2299
        %v2315 = vmax.f32 %v2285, %v2300
        %v2316 = vmax.f32 %v2286, %v2301
        %v2317 = vmax.f32 %v2287, %v2302
        %v2318 = vmax.f32 %v2288, %v2303
        %v2319 = vmax.f32 %v2289, %v2304
        %v2320 = vmax.f32 %v2290, %v2305
        %v2321 = vmax.f32 %v2291, %v2306
        %v2322 = vmax.f32 %v2292, %v2307
        %v2323 = vmax.f32 %v2293, %v2308
        %v2324 = vmax.f32 %v2294, %v2309
        %v2325 = vmax.f32 %v2295, %v2310
        %v2326 = vmax.f32 %v2296, %v2311
        %v2327 = vmax.f32 %v2297, %v2312
        %v2328 = vmax.f32 %v2298, %v2313
        %2329 = vst.msk [vmem:[#allocation2 + $0x1e0] sm:$0xff] %vm502, %v2314
        %2330 = vst.msk [vmem:[#allocation2 + $0x1e8] sm:$0xff] %vm502, %v2315
        %2331 = vst.msk [vmem:[#allocation2 + $0x1f0] sm:$0xff] %vm502, %v2316
        %2332 = vst.msk [vmem:[#allocation2 + $0x1f8] sm:$0xff] %vm502, %v2317
        %2333 = vst.msk [vmem:[#allocation2 + $0x200] sm:$0xff] %vm502, %v2318
        %2334 = vst.msk [vmem:[#allocation2 + $0x208] sm:$0xff] %vm502, %v2319
        %2335 = vst.msk [vmem:[#allocation2 + $0x210] sm:$0xff] %vm502, %v2320
        %2336 = vst.msk [vmem:[#allocation2 + $0x218] sm:$0xff] %vm502, %v2321
        %2337 = vst.msk [vmem:[#allocation2 + $0x220] sm:$0xff] %vm502, %v2322
        %2338 = vst.msk [vmem:[#allocation2 + $0x228] sm:$0xff] %vm502, %v2323
        %2339 = vst.msk [vmem:[#allocation2 + $0x230] sm:$0xff] %vm502, %v2324
        %2340 = vst.msk [vmem:[#allocation2 + $0x238] sm:$0xff] %vm502, %v2325
        %2341 = vst.msk [vmem:[#allocation2 + $0x240] sm:$0xff] %vm502, %v2326
        %2342 = vst.msk [vmem:[#allocation2 + $0x248] sm:$0xff] %vm502, %v2327
        %2343 = vst.msk [vmem:[#allocation2 + $0x250] sm:$0x7f] %vm2102, %v2328
        %v2344 = vld [vmem:[#allocation2 + $0x258] sm:$0xff]
        %v2345 = vld [vmem:[#allocation2 + $0x260] sm:$0xff]
        %v2346 = vld [vmem:[#allocation2 + $0x268] sm:$0xff]
        %v2347 = vld [vmem:[#allocation2 + $0x270] sm:$0xff]
        %v2348 = vld [vmem:[#allocation2 + $0x278] sm:$0xff]
        %v2349 = vld [vmem:[#allocation2 + $0x280] sm:$0xff]
        %v2350 = vld [vmem:[#allocation2 + $0x288] sm:$0xff]
        %v2351 = vld [vmem:[#allocation2 + $0x290] sm:$0xff]
        %v2352 = vld [vmem:[#allocation2 + $0x298] sm:$0xff]
        %v2353 = vld [vmem:[#allocation2 + $0x2a0] sm:$0xff]
        %v2354 = vld [vmem:[#allocation2 + $0x2a8] sm:$0xff]
        %v2355 = vld [vmem:[#allocation2 + $0x2b0] sm:$0xff]
        %v2356 = vld [vmem:[#allocation2 + $0x2b8] sm:$0xff]
        %v2357 = vld [vmem:[#allocation2 + $0x2c0] sm:$0xff]
        %v2358 = vld [vmem:[#allocation2 + $0x2c8] sm:$0x7f]
        %v2359 = vld [vmem:[#allocation2 + $0x259] sm:$0xff]
        %v2360 = vld [vmem:[#allocation2 + $0x261] sm:$0xff]
        %v2361 = vld [vmem:[#allocation2 + $0x269] sm:$0xff]
        %v2362 = vld [vmem:[#allocation2 + $0x271] sm:$0xff]
        %v2363 = vld [vmem:[#allocation2 + $0x279] sm:$0xff]
        %v2364 = vld [vmem:[#allocation2 + $0x281] sm:$0xff]
        %v2365 = vld [vmem:[#allocation2 + $0x289] sm:$0xff]
        %v2366 = vld [vmem:[#allocation2 + $0x291] sm:$0xff]
        %v2367 = vld [vmem:[#allocation2 + $0x299] sm:$0xff]
        %v2368 = vld [vmem:[#allocation2 + $0x2a1] sm:$0xff]
        %v2369 = vld [vmem:[#allocation2 + $0x2a9] sm:$0xff]
        %v2370 = vld [vmem:[#allocation2 + $0x2b1] sm:$0xff]
        %v2371 = vld [vmem:[#allocation2 + $0x2b9] sm:$0xff]
        %v2372 = vld [vmem:[#allocation2 + $0x2c1] sm:$0xff]
        %v2373 = vld [vmem:[#allocation2 + $0x2c9] sm:$0x7f]
        %v2374 = vmax.f32 %v2344, %v2359
        %v2375 = vmax.f32 %v2345, %v2360
        %v2376 = vmax.f32 %v2346, %v2361
        %v2377 = vmax.f32 %v2347, %v2362
        %v2378 = vmax.f32 %v2348, %v2363
        %v2379 = vmax.f32 %v2349, %v2364
        %v2380 = vmax.f32 %v2350, %v2365
        %v2381 = vmax.f32 %v2351, %v2366
        %v2382 = vmax.f32 %v2352, %v2367
        %v2383 = vmax.f32 %v2353, %v2368
        %v2384 = vmax.f32 %v2354, %v2369
        %v2385 = vmax.f32 %v2355, %v2370
        %v2386 = vmax.f32 %v2356, %v2371
        %v2387 = vmax.f32 %v2357, %v2372
        %v2388 = vmax.f32 %v2358, %v2373
        %2389 = vst.msk [vmem:[#allocation2 + $0x258] sm:$0xff] %vm502, %v2374
        %2390 = vst.msk [vmem:[#allocation2 + $0x260] sm:$0xff] %vm502, %v2375
        %2391 = vst.msk [vmem:[#allocation2 + $0x268] sm:$0xff] %vm502, %v2376
        %2392 = vst.msk [vmem:[#allocation2 + $0x270] sm:$0xff] %vm502, %v2377
        %2393 = vst.msk [vmem:[#allocation2 + $0x278] sm:$0xff] %vm502, %v2378
        %2394 = vst.msk [vmem:[#allocation2 + $0x280] sm:$0xff] %vm502, %v2379
        %2395 = vst.msk [vmem:[#allocation2 + $0x288] sm:$0xff] %vm502, %v2380
        %2396 = vst.msk [vmem:[#allocation2 + $0x290] sm:$0xff] %vm502, %v2381
        %2397 = vst.msk [vmem:[#allocation2 + $0x298] sm:$0xff] %vm502, %v2382
        %2398 = vst.msk [vmem:[#allocation2 + $0x2a0] sm:$0xff] %vm502, %v2383
        %2399 = vst.msk [vmem:[#allocation2 + $0x2a8] sm:$0xff] %vm502, %v2384
        %2400 = vst.msk [vmem:[#allocation2 + $0x2b0] sm:$0xff] %vm502, %v2385
        %2401 = vst.msk [vmem:[#allocation2 + $0x2b8] sm:$0xff] %vm502, %v2386
        %2402 = vst.msk [vmem:[#allocation2 + $0x2c0] sm:$0xff] %vm502, %v2387
        %2403 = vst.msk [vmem:[#allocation2 + $0x2c8] sm:$0x7f] %vm2102, %v2388
        %v2404 = vld [vmem:[#allocation2 + $0x2d0] sm:$0xff]
        %v2405 = vld [vmem:[#allocation2 + $0x2d8] sm:$0xff]
        %v2406 = vld [vmem:[#allocation2 + $0x2e0] sm:$0xff]
        %v2407 = vld [vmem:[#allocation2 + $0x2e8] sm:$0xff]
        %v2408 = vld [vmem:[#allocation2 + $0x2f0] sm:$0xff]
        %v2409 = vld [vmem:[#allocation2 + $0x2f8] sm:$0xff]
        %v2410 = vld [vmem:[#allocation2 + $0x300] sm:$0xff]
        %v2411 = vld [vmem:[#allocation2 + $0x308] sm:$0xff]
        %v2412 = vld [vmem:[#allocation2 + $0x310] sm:$0xff]
        %v2413 = vld [vmem:[#allocation2 + $0x318] sm:$0xff]
        %v2414 = vld [vmem:[#allocation2 + $0x320] sm:$0xff]
        %v2415 = vld [vmem:[#allocation2 + $0x328] sm:$0xff]
        %v2416 = vld [vmem:[#allocation2 + $0x330] sm:$0xff]
        %v2417 = vld [vmem:[#allocation2 + $0x338] sm:$0xff]
        %v2418 = vld [vmem:[#allocation2 + $0x340] sm:$0x7f]
        %v2419 = vld [vmem:[#allocation2 + $0x2d1] sm:$0xff]
        %v2420 = vld [vmem:[#allocation2 + $0x2d9] sm:$0xff]
        %v2421 = vld [vmem:[#allocation2 + $0x2e1] sm:$0xff]
        %v2422 = vld [vmem:[#allocation2 + $0x2e9] sm:$0xff]
        %v2423 = vld [vmem:[#allocation2 + $0x2f1] sm:$0xff]
        %v2424 = vld [vmem:[#allocation2 + $0x2f9] sm:$0xff]
        %v2425 = vld [vmem:[#allocation2 + $0x301] sm:$0xff]
        %v2426 = vld [vmem:[#allocation2 + $0x309] sm:$0xff]
        %v2427 = vld [vmem:[#allocation2 + $0x311] sm:$0xff]
        %v2428 = vld [vmem:[#allocation2 + $0x319] sm:$0xff]
        %v2429 = vld [vmem:[#allocation2 + $0x321] sm:$0xff]
        %v2430 = vld [vmem:[#allocation2 + $0x329] sm:$0xff]
        %v2431 = vld [vmem:[#allocation2 + $0x331] sm:$0xff]
        %v2432 = vld [vmem:[#allocation2 + $0x339] sm:$0xff]
        %v2433 = vld [vmem:[#allocation2 + $0x341] sm:$0x7f]
        %v2434 = vmax.f32 %v2404, %v2419
        %v2435 = vmax.f32 %v2405, %v2420
        %v2436 = vmax.f32 %v2406, %v2421
        %v2437 = vmax.f32 %v2407, %v2422
        %v2438 = vmax.f32 %v2408, %v2423
        %v2439 = vmax.f32 %v2409, %v2424
        %v2440 = vmax.f32 %v2410, %v2425
        %v2441 = vmax.f32 %v2411, %v2426
        %v2442 = vmax.f32 %v2412, %v2427
        %v2443 = vmax.f32 %v2413, %v2428
        %v2444 = vmax.f32 %v2414, %v2429
        %v2445 = vmax.f32 %v2415, %v2430
        %v2446 = vmax.f32 %v2416, %v2431
        %v2447 = vmax.f32 %v2417, %v2432
        %v2448 = vmax.f32 %v2418, %v2433
        %2449 = vst.msk [vmem:[#allocation2 + $0x2d0] sm:$0xff] %vm502, %v2434
        %2450 = vst.msk [vmem:[#allocation2 + $0x2d8] sm:$0xff] %vm502, %v2435
        %2451 = vst.msk [vmem:[#allocation2 + $0x2e0] sm:$0xff] %vm502, %v2436
        %2452 = vst.msk [vmem:[#allocation2 + $0x2e8] sm:$0xff] %vm502, %v2437
        %2453 = vst.msk [vmem:[#allocation2 + $0x2f0] sm:$0xff] %vm502, %v2438
        %2454 = vst.msk [vmem:[#allocation2 + $0x2f8] sm:$0xff] %vm502, %v2439
        %2455 = vst.msk [vmem:[#allocation2 + $0x300] sm:$0xff] %vm502, %v2440
        %2456 = vst.msk [vmem:[#allocation2 + $0x308] sm:$0xff] %vm502, %v2441
        %2457 = vst.msk [vmem:[#allocation2 + $0x310] sm:$0xff] %vm502, %v2442
        %2458 = vst.msk [vmem:[#allocation2 + $0x318] sm:$0xff] %vm502, %v2443
        %2459 = vst.msk [vmem:[#allocation2 + $0x320] sm:$0xff] %vm502, %v2444
        %2460 = vst.msk [vmem:[#allocation2 + $0x328] sm:$0xff] %vm502, %v2445
        %2461 = vst.msk [vmem:[#allocation2 + $0x330] sm:$0xff] %vm502, %v2446
        %2462 = vst.msk [vmem:[#allocation2 + $0x338] sm:$0xff] %vm502, %v2447
        %2463 = vst.msk [vmem:[#allocation2 + $0x340] sm:$0x7f] %vm2102, %v2448
        %v2464 = vld [vmem:[#allocation2 + $0x348] sm:$0xff]
        %v2465 = vld [vmem:[#allocation2 + $0x350] sm:$0xff]
        %v2466 = vld [vmem:[#allocation2 + $0x358] sm:$0xff]
        %v2467 = vld [vmem:[#allocation2 + $0x360] sm:$0xff]
        %v2468 = vld [vmem:[#allocation2 + $0x368] sm:$0xff]
        %v2469 = vld [vmem:[#allocation2 + $0x370] sm:$0xff]
        %v2470 = vld [vmem:[#allocation2 + $0x378] sm:$0xff]
        %v2471 = vld [vmem:[#allocation2 + $0x380] sm:$0x7]
        %v2472 = vld [vmem:[#allocation2 + $0x349] sm:$0xff]
        %v2473 = vld [vmem:[#allocation2 + $0x351] sm:$0xff]
        %v2474 = vld [vmem:[#allocation2 + $0x359] sm:$0xff]
        %v2475 = vld [vmem:[#allocation2 + $0x361] sm:$0xff]
        %v2476 = vld [vmem:[#allocation2 + $0x369] sm:$0xff]
        %v2477 = vld [vmem:[#allocation2 + $0x371] sm:$0xff]
        %v2478 = vld [vmem:[#allocation2 + $0x379] sm:$0xff]
        %v2479 = vld [vmem:[#allocation2 + $0x381] sm:$0x7]
        %v2480 = vmax.f32 %v2464, %v2472
        %v2481 = vmax.f32 %v2465, %v2473
        %v2482 = vmax.f32 %v2466, %v2474
        %v2483 = vmax.f32 %v2467, %v2475
        %v2484 = vmax.f32 %v2468, %v2476
        %v2485 = vmax.f32 %v2469, %v2477
        %v2486 = vmax.f32 %v2470, %v2478
        %v2487 = vmax.f32 %v2471, %v2479
        %2488 = vst.msk [vmem:[#allocation2 + $0x348] sm:$0xff] %vm502, %v2480
        %2489 = vst.msk [vmem:[#allocation2 + $0x350] sm:$0xff] %vm502, %v2481
        %2490 = vst.msk [vmem:[#allocation2 + $0x358] sm:$0xff] %vm502, %v2482
        %2491 = vst.msk [vmem:[#allocation2 + $0x360] sm:$0xff] %vm502, %v2483
        %2492 = vst.msk [vmem:[#allocation2 + $0x368] sm:$0xff] %vm502, %v2484
        %2493 = vst.msk [vmem:[#allocation2 + $0x370] sm:$0xff] %vm502, %v2485
        %2494 = vst.msk [vmem:[#allocation2 + $0x378] sm:$0xff] %vm502, %v2486
        %vm2495 = vcmask 124928
        %2496 = vst.msk [vmem:[#allocation2 + $0x380] sm:$0x7] %vm2495, %v2487
        %v2497 = vld [vmem:[#allocation2] ss:$2 sm:$0xff]
        %s2498 = scalar_lea.vmem [#allocation2], 16
        %v2499 = vld [vmem:[%s2498] ss:$2 sm:$0x7f]
        %s2500 = scalar_lea.vmem [#allocation2], 30
        %v2501 = vld [vmem:[%s2500] ss:$2 sm:$0xff]
        %s2502 = scalar_lea.vmem [#allocation2], 46
        %v2503 = vld [vmem:[%s2502] ss:$2 sm:$0x7f]
        %v2504 = vmax.f32 %v2497, %v2501
        %v2505 = vmax.f32 %v2499, %v2503
        %2506 = vst.msk [vmem:[#allocation3] sm:$0xff] %vm502, %v2504
        %2507 = vst.msk [vmem:[#allocation3 + $0x8] sm:$0x7f] %vm2102, %v2505
        %s2508 = scalar_lea.vmem [#allocation2], 60
        %v2509 = vld [vmem:[%s2508] ss:$2 sm:$0xff]
        %s2510 = scalar_lea.vmem [#allocation2], 76
        %v2511 = vld [vmem:[%s2510] ss:$2 sm:$0x7f]
        %s2512 = scalar_lea.vmem [#allocation2], 90
        %v2513 = vld [vmem:[%s2512] ss:$2 sm:$0xff]
        %s2514 = scalar_lea.vmem [#allocation2], 106
        %v2515 = vld [vmem:[%s2514] ss:$2 sm:$0x7f]
        %v2516 = vmax.f32 %v2509, %v2513
        %v2517 = vmax.f32 %v2511, %v2515
        %2518 = vst.msk [vmem:[#allocation3 + $0xf] sm:$0xff] %vm502, %v2516
        %2519 = vst.msk [vmem:[#allocation3 + $0x17] sm:$0x7f] %vm2102, %v2517
        %s2520 = scalar_lea.vmem [#allocation2], 120
        %v2521 = vld [vmem:[%s2520] ss:$2 sm:$0xff]
        %s2522 = scalar_lea.vmem [#allocation2], 136
        %v2523 = vld [vmem:[%s2522] ss:$2 sm:$0x7f]
        %s2524 = scalar_lea.vmem [#allocation2], 150
        %v2525 = vld [vmem:[%s2524] ss:$2 sm:$0xff]
        %s2526 = scalar_lea.vmem [#allocation2], 166
        %v2527 = vld [vmem:[%s2526] ss:$2 sm:$0x7f]
        %v2528 = vmax.f32 %v2521, %v2525
        %v2529 = vmax.f32 %v2523, %v2527
        %2530 = vst.msk [vmem:[#allocation3 + $0x1e] sm:$0xff] %vm502, %v2528
        %2531 = vst.msk [vmem:[#allocation3 + $0x26] sm:$0x7f] %vm2102, %v2529
        %s2532 = scalar_lea.vmem [#allocation2], 180
        %v2533 = vld [vmem:[%s2532] ss:$2 sm:$0xff]
        %s2534 = scalar_lea.vmem [#allocation2], 196
        %v2535 = vld [vmem:[%s2534] ss:$2 sm:$0x7f]
        %s2536 = scalar_lea.vmem [#allocation2], 210
        %v2537 = vld [vmem:[%s2536] ss:$2 sm:$0xff]
        %s2538 = scalar_lea.vmem [#allocation2], 226
        %v2539 = vld [vmem:[%s2538] ss:$2 sm:$0x7f]
        %v2540 = vmax.f32 %v2533, %v2537
        %v2541 = vmax.f32 %v2535, %v2539
        %2542 = vst.msk [vmem:[#allocation3 + $0x2d] sm:$0xff] %vm502, %v2540
        %2543 = vst.msk [vmem:[#allocation3 + $0x35] sm:$0x7f] %vm2102, %v2541
        %s2544 = scalar_lea.vmem [#allocation2], 240
        %v2545 = vld [vmem:[%s2544] ss:$2 sm:$0xff]
        %s2546 = scalar_lea.vmem [#allocation2], 256
        %v2547 = vld [vmem:[%s2546] ss:$2 sm:$0x7f]
        %s2548 = scalar_lea.vmem [#allocation2], 270
        %v2549 = vld [vmem:[%s2548] ss:$2 sm:$0xff]
        %s2550 = scalar_lea.vmem [#allocation2], 286
        %v2551 = vld [vmem:[%s2550] ss:$2 sm:$0x7f]
        %v2552 = vmax.f32 %v2545, %v2549
        %v2553 = vmax.f32 %v2547, %v2551
        %2554 = vst.msk [vmem:[#allocation3 + $0x3c] sm:$0xff] %vm502, %v2552
        %2555 = vst.msk [vmem:[#allocation3 + $0x44] sm:$0x7f] %vm2102, %v2553
        %s2556 = scalar_lea.vmem [#allocation2], 300
        %v2557 = vld [vmem:[%s2556] ss:$2 sm:$0xff]
        %s2558 = scalar_lea.vmem [#allocation2], 316
        %v2559 = vld [vmem:[%s2558] ss:$2 sm:$0x7f]
        %s2560 = scalar_lea.vmem [#allocation2], 330
        %v2561 = vld [vmem:[%s2560] ss:$2 sm:$0xff]
        %s2562 = scalar_lea.vmem [#allocation2], 346
        %v2563 = vld [vmem:[%s2562] ss:$2 sm:$0x7f]
        %v2564 = vmax.f32 %v2557, %v2561
        %v2565 = vmax.f32 %v2559, %v2563
        %2566 = vst.msk [vmem:[#allocation3 + $0x4b] sm:$0xff] %vm502, %v2564
        %2567 = vst.msk [vmem:[#allocation3 + $0x53] sm:$0x7f] %vm2102, %v2565
        %s2568 = scalar_lea.vmem [#allocation2], 360
        %v2569 = vld [vmem:[%s2568] ss:$2 sm:$0xff]
        %s2570 = scalar_lea.vmem [#allocation2], 376
        %v2571 = vld [vmem:[%s2570] ss:$2 sm:$0x7f]
        %s2572 = scalar_lea.vmem [#allocation2], 390
        %v2573 = vld [vmem:[%s2572] ss:$2 sm:$0xff]
        %s2574 = scalar_lea.vmem [#allocation2], 406
        %v2575 = vld [vmem:[%s2574] ss:$2 sm:$0x7f]
        %v2576 = vmax.f32 %v2569, %v2573
        %v2577 = vmax.f32 %v2571, %v2575
        %2578 = vst.msk [vmem:[#allocation3 + $0x5a] sm:$0xff] %vm502, %v2576
        %2579 = vst.msk [vmem:[#allocation3 + $0x62] sm:$0x7f] %vm2102, %v2577
        %s2580 = scalar_lea.vmem [#allocation2], 420
        %v2581 = vld [vmem:[%s2580] ss:$2 sm:$0xff]
        %s2582 = scalar_lea.vmem [#allocation2], 436
        %v2583 = vld [vmem:[%s2582] ss:$2 sm:$0x7f]
        %s2584 = scalar_lea.vmem [#allocation2], 450
        %v2585 = vld [vmem:[%s2584] ss:$2 sm:$0xff]
        %s2586 = scalar_lea.vmem [#allocation2], 466
        %v2587 = vld [vmem:[%s2586] ss:$2 sm:$0x7f]
        %v2588 = vmax.f32 %v2581, %v2585
        %v2589 = vmax.f32 %v2583, %v2587
        %2590 = vst.msk [vmem:[#allocation3 + $0x69] sm:$0xff] %vm502, %v2588
        %2591 = vst.msk [vmem:[#allocation3 + $0x71] sm:$0x7f] %vm2102, %v2589
        %s2592 = scalar_lea.vmem [#allocation2], 480
        %v2593 = vld [vmem:[%s2592] ss:$2 sm:$0xff]
        %s2594 = scalar_lea.vmem [#allocation2], 496
        %v2595 = vld [vmem:[%s2594] ss:$2 sm:$0x7f]
        %s2596 = scalar_lea.vmem [#allocation2], 510
        %v2597 = vld [vmem:[%s2596] ss:$2 sm:$0xff]
        %s2598 = scalar_lea.vmem [#allocation2], 526
        %v2599 = vld [vmem:[%s2598] ss:$2 sm:$0x7f]
        %v2600 = vmax.f32 %v2593, %v2597
        %v2601 = vmax.f32 %v2595, %v2599
        %2602 = vst.msk [vmem:[#allocation3 + $0x78] sm:$0xff] %vm502, %v2600
        %2603 = vst.msk [vmem:[#allocation3 + $0x80] sm:$0x7f] %vm2102, %v2601
        %s2604 = scalar_lea.vmem [#allocation2], 540
        %v2605 = vld [vmem:[%s2604] ss:$2 sm:$0xff]
        %s2606 = scalar_lea.vmem [#allocation2], 556
        %v2607 = vld [vmem:[%s2606] ss:$2 sm:$0x7f]
        %s2608 = scalar_lea.vmem [#allocation2], 570
        %v2609 = vld [vmem:[%s2608] ss:$2 sm:$0xff]
        %s2610 = scalar_lea.vmem [#allocation2], 586
        %v2611 = vld [vmem:[%s2610] ss:$2 sm:$0x7f]
        %v2612 = vmax.f32 %v2605, %v2609
        %v2613 = vmax.f32 %v2607, %v2611
        %2614 = vst.msk [vmem:[#allocation3 + $0x87] sm:$0xff] %vm502, %v2612
        %2615 = vst.msk [vmem:[#allocation3 + $0x8f] sm:$0x7f] %vm2102, %v2613
        %s2616 = scalar_lea.vmem [#allocation2], 600
        %v2617 = vld [vmem:[%s2616] ss:$2 sm:$0xff]
        %s2618 = scalar_lea.vmem [#allocation2], 616
        %v2619 = vld [vmem:[%s2618] ss:$2 sm:$0x7f]
        %s2620 = scalar_lea.vmem [#allocation2], 630
        %v2621 = vld [vmem:[%s2620] ss:$2 sm:$0xff]
        %s2622 = scalar_lea.vmem [#allocation2], 646
        %v2623 = vld [vmem:[%s2622] ss:$2 sm:$0x7f]
        %v2624 = vmax.f32 %v2617, %v2621
        %v2625 = vmax.f32 %v2619, %v2623
        %2626 = vst.msk [vmem:[#allocation3 + $0x96] sm:$0xff] %vm502, %v2624
        %2627 = vst.msk [vmem:[#allocation3 + $0x9e] sm:$0x7f] %vm2102, %v2625
        %s2628 = scalar_lea.vmem [#allocation2], 660
        %v2629 = vld [vmem:[%s2628] ss:$2 sm:$0xff]
        %s2630 = scalar_lea.vmem [#allocation2], 676
        %v2631 = vld [vmem:[%s2630] ss:$2 sm:$0x7f]
        %s2632 = scalar_lea.vmem [#allocation2], 690
        %v2633 = vld [vmem:[%s2632] ss:$2 sm:$0xff]
        %s2634 = scalar_lea.vmem [#allocation2], 706
        %v2635 = vld [vmem:[%s2634] ss:$2 sm:$0x7f]
        %v2636 = vmax.f32 %v2629, %v2633
        %v2637 = vmax.f32 %v2631, %v2635
        %2638 = vst.msk [vmem:[#allocation3 + $0xa5] sm:$0xff] %vm502, %v2636
        %2639 = vst.msk [vmem:[#allocation3 + $0xad] sm:$0x7f] %vm2102, %v2637
        %s2640 = scalar_lea.vmem [#allocation2], 720
        %v2641 = vld [vmem:[%s2640] ss:$2 sm:$0xff]
        %s2642 = scalar_lea.vmem [#allocation2], 736
        %v2643 = vld [vmem:[%s2642] ss:$2 sm:$0x7f]
        %s2644 = scalar_lea.vmem [#allocation2], 750
        %v2645 = vld [vmem:[%s2644] ss:$2 sm:$0xff]
        %s2646 = scalar_lea.vmem [#allocation2], 766
        %v2647 = vld [vmem:[%s2646] ss:$2 sm:$0x7f]
        %v2648 = vmax.f32 %v2641, %v2645
        %v2649 = vmax.f32 %v2643, %v2647
        %2650 = vst.msk [vmem:[#allocation3 + $0xb4] sm:$0xff] %vm502, %v2648
        %2651 = vst.msk [vmem:[#allocation3 + $0xbc] sm:$0x7f] %vm2102, %v2649
        %s2652 = scalar_lea.vmem [#allocation2], 780
        %v2653 = vld [vmem:[%s2652] ss:$2 sm:$0xff]
        %s2654 = scalar_lea.vmem [#allocation2], 796
        %v2655 = vld [vmem:[%s2654] ss:$2 sm:$0x7f]
        %s2656 = scalar_lea.vmem [#allocation2], 810
        %v2657 = vld [vmem:[%s2656] ss:$2 sm:$0xff]
        %s2658 = scalar_lea.vmem [#allocation2], 826
        %v2659 = vld [vmem:[%s2658] ss:$2 sm:$0x7f]
        %v2660 = vmax.f32 %v2653, %v2657
        %v2661 = vmax.f32 %v2655, %v2659
        %2662 = vst.msk [vmem:[#allocation3 + $0xc3] sm:$0xff] %vm502, %v2660
        %2663 = vst.msk [vmem:[#allocation3 + $0xcb] sm:$0x7f] %vm2102, %v2661
        %s2664 = scalar_lea.vmem [#allocation2], 840
        %v2665 = vld [vmem:[%s2664] ss:$2 sm:$0xff]
        %s2666 = scalar_lea.vmem [#allocation2], 856
        %v2667 = vld [vmem:[%s2666] ss:$2 sm:$0x7f]
        %s2668 = scalar_lea.vmem [#allocation2], 870
        %v2669 = vld [vmem:[%s2668] ss:$2 sm:$0xff]
        %s2670 = scalar_lea.vmem [#allocation2], 886
        %v2671 = vld [vmem:[%s2670] ss:$2 sm:$0x7f]
        %v2672 = vmax.f32 %v2665, %v2669
        %v2673 = vmax.f32 %v2667, %v2671
        %2674 = vst.msk [vmem:[#allocation3 + $0xd2] sm:$0xff] %vm502, %v2672
        %2675 = vst.msk [vmem:[#allocation3 + $0xda] sm:$0x7f] %vm2102, %v2673
        %v2676 = vld [vmem:[#allocation3] sm:$0xff]
        %v2677 = vld [vmem:[#allocation3 + $0x8] sm:$0xff]
        %v2678 = vld [vmem:[#allocation3 + $0x10] sm:$0xff]
        %v2679 = vld [vmem:[#allocation3 + $0x18] sm:$0xff]
        %v2680 = vld [vmem:[#allocation3 + $0x20] sm:$0xff]
        %v2681 = vld [vmem:[#allocation3 + $0x28] sm:$0xff]
        %v2682 = vld [vmem:[#allocation3 + $0x30] sm:$0xff]
        %v2683 = vld [vmem:[#allocation3 + $0x38] sm:$0xff]
        %v2684 = vld [vmem:[#allocation3 + $0x40] sm:$0xff]
        %v2685 = vld [vmem:[#allocation3 + $0x48] sm:$0xff]
        %v2686 = vld [vmem:[#allocation3 + $0x50] sm:$0xff]
        %v2687 = vld [vmem:[#allocation3 + $0x58] sm:$0xff]
        %v2688 = vld [vmem:[#allocation3 + $0x60] sm:$0xff]
        %v2689 = vld [vmem:[#allocation3 + $0x68] sm:$0xff]
        %v2690 = vld [vmem:[#allocation3 + $0x70] sm:$0xff]
        %v2691 = vld [vmem:[#allocation3 + $0x78] sm:$0xff]
        %v2692 = vld [vmem:[#allocation3 + $0x80] sm:$0xff]
        %v2693 = vld [vmem:[#allocation3 + $0x88] sm:$0xff]
        %v2694 = vld [vmem:[#allocation3 + $0x90] sm:$0xff]
        %v2695 = vld [vmem:[#allocation3 + $0x98] sm:$0xff]
        %v2696 = vld [vmem:[#allocation3 + $0xa0] sm:$0xff]
        %v2697 = vld [vmem:[#allocation3 + $0xa8] sm:$0xff]
        %v2698 = vld [vmem:[#allocation3 + $0xb0] sm:$0xff]
        %v2699 = vld [vmem:[#allocation3 + $0xb8] sm:$0xff]
        %v2700 = vld [vmem:[#allocation3 + $0xc0] sm:$0x1]
        %2701 = vst.msk [vmem:[#allocation4] sm:$0xff] %vm502, %v2676
        %2702 = vst.msk [vmem:[#allocation4 + $0x10] sm:$0xff] %vm502, %v2677
        %2703 = vst.msk [vmem:[#allocation4 + $0x20] sm:$0xff] %vm502, %v2678
        %2704 = vst.msk [vmem:[#allocation4 + $0x30] sm:$0xff] %vm502, %v2679
        %2705 = vst.msk [vmem:[#allocation4 + $0x40] sm:$0xff] %vm502, %v2680
        %2706 = vst.msk [vmem:[#allocation4 + $0x50] sm:$0xff] %vm502, %v2681
        %2707 = vst.msk [vmem:[#allocation4 + $0x60] sm:$0xff] %vm502, %v2682
        %2708 = vst.msk [vmem:[#allocation4 + $0x70] sm:$0xff] %vm502, %v2683
        %2709 = vst.msk [vmem:[#allocation4 + $0x80] sm:$0xff] %vm502, %v2684
        %2710 = vst.msk [vmem:[#allocation4 + $0x90] sm:$0xff] %vm502, %v2685
        %2711 = vst.msk [vmem:[#allocation4 + $0xa0] sm:$0xff] %vm502, %v2686
        %2712 = vst.msk [vmem:[#allocation4 + $0xb0] sm:$0xff] %vm502, %v2687
        %2713 = vst.msk [vmem:[#allocation4 + $0xc0] sm:$0xff] %vm502, %v2688
        %2714 = vst.msk [vmem:[#allocation4 + $0xd0] sm:$0xff] %vm502, %v2689
        %2715 = vst.msk [vmem:[#allocation4 + $0xe0] sm:$0xff] %vm502, %v2690
        %2716 = vst.msk [vmem:[#allocation4 + $0xf0] sm:$0xff] %vm502, %v2691
        %2717 = vst.msk [vmem:[#allocation4 + $0x100] sm:$0xff] %vm502, %v2692
        %2718 = vst.msk [vmem:[#allocation4 + $0x110] sm:$0xff] %vm502, %v2693
        %2719 = vst.msk [vmem:[#allocation4 + $0x120] sm:$0xff] %vm502, %v2694
        %2720 = vst.msk [vmem:[#allocation4 + $0x130] sm:$0xff] %vm502, %v2695
        %2721 = vst.msk [vmem:[#allocation4 + $0x140] sm:$0xff] %vm502, %v2696
        %2722 = vst.msk [vmem:[#allocation4 + $0x150] sm:$0xff] %vm502, %v2697
        %2723 = vst.msk [vmem:[#allocation4 + $0x160] sm:$0xff] %vm502, %v2698
        %2724 = vst.msk [vmem:[#allocation4 + $0x170] sm:$0xff] %vm502, %v2699
        %vm2725 = vcmask 122880
        %2726 = vst.msk [vmem:[#allocation4 + $0x180] sm:$0x1] %vm2725, %v2700
        %v2727 = vld [vmem:[#allocation3 + $0x1] sm:$0xff]
        %v2728 = vld [vmem:[#allocation3 + $0x9] sm:$0xff]
        %v2729 = vld [vmem:[#allocation3 + $0x11] sm:$0xff]
        %v2730 = vld [vmem:[#allocation3 + $0x19] sm:$0xff]
        %v2731 = vld [vmem:[#allocation3 + $0x21] sm:$0xff]
        %v2732 = vld [vmem:[#allocation3 + $0x29] sm:$0xff]
        %v2733 = vld [vmem:[#allocation3 + $0x31] sm:$0xff]
        %v2734 = vld [vmem:[#allocation3 + $0x39] sm:$0xff]
        %v2735 = vld [vmem:[#allocation3 + $0x41] sm:$0xff]
        %v2736 = vld [vmem:[#allocation3 + $0x49] sm:$0xff]
        %v2737 = vld [vmem:[#allocation3 + $0x51] sm:$0xff]
        %v2738 = vld [vmem:[#allocation3 + $0x59] sm:$0xff]
        %v2739 = vld [vmem:[#allocation3 + $0x61] sm:$0xff]
        %v2740 = vld [vmem:[#allocation3 + $0x69] sm:$0xff]
        %v2741 = vld [vmem:[#allocation3 + $0x71] sm:$0xff]
        %v2742 = vld [vmem:[#allocation3 + $0x79] sm:$0xff]
        %v2743 = vld [vmem:[#allocation3 + $0x81] sm:$0xff]
        %v2744 = vld [vmem:[#allocation3 + $0x89] sm:$0xff]
        %v2745 = vld [vmem:[#allocation3 + $0x91] sm:$0xff]
        %v2746 = vld [vmem:[#allocation3 + $0x99] sm:$0xff]
        %v2747 = vld [vmem:[#allocation3 + $0xa1] sm:$0xff]
        %v2748 = vld [vmem:[#allocation3 + $0xa9] sm:$0xff]
        %v2749 = vld [vmem:[#allocation3 + $0xb1] sm:$0xff]
        %v2750 = vld [vmem:[#allocation3 + $0xb9] sm:$0xff]
        %v2751 = vld [vmem:[#allocation3 + $0xc1] sm:$0x1]
        %2777 = vrot.lane.b32.xlu0 %v2727, 16
        %v2778 = vpop.permute.xlu0 %2777
        %2779 = vrot.lane.b32.xlu0 %v2728, 16
        %v2780 = vpop.permute.xlu0 %2779
        %2781 = vrot.lane.b32.xlu0 %v2729, 16
        %v2782 = vpop.permute.xlu0 %2781
        %2783 = vrot.lane.b32.xlu0 %v2730, 16
        %v2784 = vpop.permute.xlu0 %2783
        %2785 = vrot.lane.b32.xlu0 %v2731, 16
        %v2786 = vpop.permute.xlu0 %2785
        %2787 = vrot.lane.b32.xlu0 %v2732, 16
        %v2788 = vpop.permute.xlu0 %2787
        %2789 = vrot.lane.b32.xlu0 %v2733, 16
        %v2790 = vpop.permute.xlu0 %2789
        %2791 = vrot.lane.b32.xlu0 %v2734, 16
        %v2792 = vpop.permute.xlu0 %2791
        %2793 = vrot.lane.b32.xlu0 %v2735, 16
        %v2794 = vpop.permute.xlu0 %2793
        %2795 = vrot.lane.b32.xlu0 %v2736, 16
        %v2796 = vpop.permute.xlu0 %2795
        %2797 = vrot.lane.b32.xlu0 %v2737, 16
        %v2798 = vpop.permute.xlu0 %2797
        %2799 = vrot.lane.b32.xlu0 %v2738, 16
        %v2800 = vpop.permute.xlu0 %2799
        %2801 = vrot.lane.b32.xlu0 %v2739, 16
        %v2802 = vpop.permute.xlu0 %2801
        %2803 = vrot.lane.b32.xlu0 %v2740, 16
        %v2804 = vpop.permute.xlu0 %2803
        %2805 = vrot.lane.b32.xlu0 %v2741, 16
        %v2806 = vpop.permute.xlu0 %2805
        %2807 = vrot.lane.b32.xlu0 %v2742, 16
        %v2808 = vpop.permute.xlu0 %2807
        %2809 = vrot.lane.b32.xlu0 %v2743, 16
        %v2810 = vpop.permute.xlu0 %2809
        %2811 = vrot.lane.b32.xlu0 %v2744, 16
        %v2812 = vpop.permute.xlu0 %2811
        %2813 = vrot.lane.b32.xlu0 %v2745, 16
        %v2814 = vpop.permute.xlu0 %2813
        %2815 = vrot.lane.b32.xlu0 %v2746, 16
        %v2816 = vpop.permute.xlu0 %2815
        %2817 = vrot.lane.b32.xlu0 %v2747, 16
        %v2818 = vpop.permute.xlu0 %2817
        %2819 = vrot.lane.b32.xlu0 %v2748, 16
        %v2820 = vpop.permute.xlu0 %2819
        %2821 = vrot.lane.b32.xlu0 %v2749, 16
        %v2822 = vpop.permute.xlu0 %2821
        %2823 = vrot.lane.b32.xlu0 %v2750, 16
        %v2824 = vpop.permute.xlu0 %2823
        %2825 = vrot.lane.b32.xlu0 %v2751, 16
        %v2826 = vpop.permute.xlu0 %2825
        %vm2852 = vcmask 261248
        %2853 = vst.msk [vmem:[#allocation4] sm:$0xff] %vm2852, %v2778
        %2854 = vst.msk [vmem:[#allocation4 + $0x10] sm:$0xff] %vm2852, %v2780
        %2855 = vst.msk [vmem:[#allocation4 + $0x20] sm:$0xff] %vm2852, %v2782
        %2856 = vst.msk [vmem:[#allocation4 + $0x30] sm:$0xff] %vm2852, %v2784
        %2857 = vst.msk [vmem:[#allocation4 + $0x40] sm:$0xff] %vm2852, %v2786
        %2858 = vst.msk [vmem:[#allocation4 + $0x50] sm:$0xff] %vm2852, %v2788
        %2859 = vst.msk [vmem:[#allocation4 + $0x60] sm:$0xff] %vm2852, %v2790
        %2860 = vst.msk [vmem:[#allocation4 + $0x70] sm:$0xff] %vm2852, %v2792
        %2861 = vst.msk [vmem:[#allocation4 + $0x80] sm:$0xff] %vm2852, %v2794
        %2862 = vst.msk [vmem:[#allocation4 + $0x90] sm:$0xff] %vm2852, %v2796
        %2863 = vst.msk [vmem:[#allocation4 + $0xa0] sm:$0xff] %vm2852, %v2798
        %2864 = vst.msk [vmem:[#allocation4 + $0xb0] sm:$0xff] %vm2852, %v2800
        %2865 = vst.msk [vmem:[#allocation4 + $0xc0] sm:$0xff] %vm2852, %v2802
        %2866 = vst.msk [vmem:[#allocation4 + $0xd0] sm:$0xff] %vm2852, %v2804
        %2867 = vst.msk [vmem:[#allocation4 + $0xe0] sm:$0xff] %vm2852, %v2806
        %2868 = vst.msk [vmem:[#allocation4 + $0xf0] sm:$0xff] %vm2852, %v2808
        %2869 = vst.msk [vmem:[#allocation4 + $0x100] sm:$0xff] %vm2852, %v2810
        %2870 = vst.msk [vmem:[#allocation4 + $0x110] sm:$0xff] %vm2852, %v2812
        %2871 = vst.msk [vmem:[#allocation4 + $0x120] sm:$0xff] %vm2852, %v2814
        %2872 = vst.msk [vmem:[#allocation4 + $0x130] sm:$0xff] %vm2852, %v2816
        %2873 = vst.msk [vmem:[#allocation4 + $0x140] sm:$0xff] %vm2852, %v2818
        %2874 = vst.msk [vmem:[#allocation4 + $0x150] sm:$0xff] %vm2852, %v2820
        %2875 = vst.msk [vmem:[#allocation4 + $0x160] sm:$0xff] %vm2852, %v2822
        %2876 = vst.msk [vmem:[#allocation4 + $0x170] sm:$0xff] %vm2852, %v2824
        %vm2877 = vcmask 254080
        %2878 = vst.msk [vmem:[#allocation4 + $0x180] sm:$0x1] %vm2877, %v2826
        %v2879 = vld [vmem:[#allocation3 + $0x2] sm:$0xff]
        %v2880 = vld [vmem:[#allocation3 + $0xa] sm:$0xff]
        %v2881 = vld [vmem:[#allocation3 + $0x12] sm:$0xff]
        %v2882 = vld [vmem:[#allocation3 + $0x1a] sm:$0xff]
        %v2883 = vld [vmem:[#allocation3 + $0x22] sm:$0xff]
        %v2884 = vld [vmem:[#allocation3 + $0x2a] sm:$0xff]
        %v2885 = vld [vmem:[#allocation3 + $0x32] sm:$0xff]
        %v2886 = vld [vmem:[#allocation3 + $0x3a] sm:$0xff]
        %v2887 = vld [vmem:[#allocation3 + $0x42] sm:$0xff]
        %v2888 = vld [vmem:[#allocation3 + $0x4a] sm:$0xff]
        %v2889 = vld [vmem:[#allocation3 + $0x52] sm:$0xff]
        %v2890 = vld [vmem:[#allocation3 + $0x5a] sm:$0xff]
        %v2891 = vld [vmem:[#allocation3 + $0x62] sm:$0xff]
        %v2892 = vld [vmem:[#allocation3 + $0x6a] sm:$0xff]
        %v2893 = vld [vmem:[#allocation3 + $0x72] sm:$0xff]
        %v2894 = vld [vmem:[#allocation3 + $0x7a] sm:$0xff]
        %v2895 = vld [vmem:[#allocation3 + $0x82] sm:$0xff]
        %v2896 = vld [vmem:[#allocation3 + $0x8a] sm:$0xff]
        %v2897 = vld [vmem:[#allocation3 + $0x92] sm:$0xff]
        %v2898 = vld [vmem:[#allocation3 + $0x9a] sm:$0xff]
        %v2899 = vld [vmem:[#allocation3 + $0xa2] sm:$0xff]
        %v2900 = vld [vmem:[#allocation3 + $0xaa] sm:$0xff]
        %v2901 = vld [vmem:[#allocation3 + $0xb2] sm:$0xff]
        %v2902 = vld [vmem:[#allocation3 + $0xba] sm:$0xff]
        %v2903 = vld [vmem:[#allocation3 + $0xc2] sm:$0x1]
        %2929 = vrot.lane.b32.xlu0 %v2879, 32
        %v2930 = vpop.permute.xlu0 %2929
        %2931 = vrot.lane.b32.xlu0 %v2880, 32
        %v2932 = vpop.permute.xlu0 %2931
        %2933 = vrot.lane.b32.xlu0 %v2881, 32
        %v2934 = vpop.permute.xlu0 %2933
        %2935 = vrot.lane.b32.xlu0 %v2882, 32
        %v2936 = vpop.permute.xlu0 %2935
        %2937 = vrot.lane.b32.xlu0 %v2883, 32
        %v2938 = vpop.permute.xlu0 %2937
        %2939 = vrot.lane.b32.xlu0 %v2884, 32
        %v2940 = vpop.permute.xlu0 %2939
        %2941 = vrot.lane.b32.xlu0 %v2885, 32
        %v2942 = vpop.permute.xlu0 %2941
        %2943 = vrot.lane.b32.xlu0 %v2886, 32
        %v2944 = vpop.permute.xlu0 %2943
        %2945 = vrot.lane.b32.xlu0 %v2887, 32
        %v2946 = vpop.permute.xlu0 %2945
        %2947 = vrot.lane.b32.xlu0 %v2888, 32
        %v2948 = vpop.permute.xlu0 %2947
        %2949 = vrot.lane.b32.xlu0 %v2889, 32
        %v2950 = vpop.permute.xlu0 %2949
        %2951 = vrot.lane.b32.xlu0 %v2890, 32
        %v2952 = vpop.permute.xlu0 %2951
        %2953 = vrot.lane.b32.xlu0 %v2891, 32
        %v2954 = vpop.permute.xlu0 %2953
        %2955 = vrot.lane.b32.xlu0 %v2892, 32
        %v2956 = vpop.permute.xlu0 %2955
        %2957 = vrot.lane.b32.xlu0 %v2893, 32
        %v2958 = vpop.permute.xlu0 %2957
        %2959 = vrot.lane.b32.xlu0 %v2894, 32
        %v2960 = vpop.permute.xlu0 %2959
        %2961 = vrot.lane.b32.xlu0 %v2895, 32
        %v2962 = vpop.permute.xlu0 %2961
        %2963 = vrot.lane.b32.xlu0 %v2896, 32
        %v2964 = vpop.permute.xlu0 %2963
        %2965 = vrot.lane.b32.xlu0 %v2897, 32
        %v2966 = vpop.permute.xlu0 %2965
        %2967 = vrot.lane.b32.xlu0 %v2898, 32
        %v2968 = vpop.permute.xlu0 %2967
        %2969 = vrot.lane.b32.xlu0 %v2899, 32
        %v2970 = vpop.permute.xlu0 %2969
        %2971 = vrot.lane.b32.xlu0 %v2900, 32
        %v2972 = vpop.permute.xlu0 %2971
        %2973 = vrot.lane.b32.xlu0 %v2901, 32
        %v2974 = vpop.permute.xlu0 %2973
        %2975 = vrot.lane.b32.xlu0 %v2902, 32
        %v2976 = vpop.permute.xlu0 %2975
        %2977 = vrot.lane.b32.xlu0 %v2903, 32
        %v2978 = vpop.permute.xlu0 %2977
        %vm3004 = vcmask 392448
        %3005 = vst.msk [vmem:[#allocation4] sm:$0xff] %vm3004, %v2930
        %3006 = vst.msk [vmem:[#allocation4 + $0x10] sm:$0xff] %vm3004, %v2932
        %3007 = vst.msk [vmem:[#allocation4 + $0x20] sm:$0xff] %vm3004, %v2934
        %3008 = vst.msk [vmem:[#allocation4 + $0x30] sm:$0xff] %vm3004, %v2936
        %3009 = vst.msk [vmem:[#allocation4 + $0x40] sm:$0xff] %vm3004, %v2938
        %3010 = vst.msk [vmem:[#allocation4 + $0x50] sm:$0xff] %vm3004, %v2940
        %3011 = vst.msk [vmem:[#allocation4 + $0x60] sm:$0xff] %vm3004, %v2942
        %3012 = vst.msk [vmem:[#allocation4 + $0x70] sm:$0xff] %vm3004, %v2944
        %3013 = vst.msk [vmem:[#allocation4 + $0x80] sm:$0xff] %vm3004, %v2946
        %3014 = vst.msk [vmem:[#allocation4 + $0x90] sm:$0xff] %vm3004, %v2948
        %3015 = vst.msk [vmem:[#allocation4 + $0xa0] sm:$0xff] %vm3004, %v2950
        %3016 = vst.msk [vmem:[#allocation4 + $0xb0] sm:$0xff] %vm3004, %v2952
        %3017 = vst.msk [vmem:[#allocation4 + $0xc0] sm:$0xff] %vm3004, %v2954
        %3018 = vst.msk [vmem:[#allocation4 + $0xd0] sm:$0xff] %vm3004, %v2956
        %3019 = vst.msk [vmem:[#allocation4 + $0xe0] sm:$0xff] %vm3004, %v2958
        %3020 = vst.msk [vmem:[#allocation4 + $0xf0] sm:$0xff] %vm3004, %v2960
        %3021 = vst.msk [vmem:[#allocation4 + $0x100] sm:$0xff] %vm3004, %v2962
        %3022 = vst.msk [vmem:[#allocation4 + $0x110] sm:$0xff] %vm3004, %v2964
        %3023 = vst.msk [vmem:[#allocation4 + $0x120] sm:$0xff] %vm3004, %v2966
        %3024 = vst.msk [vmem:[#allocation4 + $0x130] sm:$0xff] %vm3004, %v2968
        %3025 = vst.msk [vmem:[#allocation4 + $0x140] sm:$0xff] %vm3004, %v2970
        %3026 = vst.msk [vmem:[#allocation4 + $0x150] sm:$0xff] %vm3004, %v2972
        %3027 = vst.msk [vmem:[#allocation4 + $0x160] sm:$0xff] %vm3004, %v2974
        %3028 = vst.msk [vmem:[#allocation4 + $0x170] sm:$0xff] %vm3004, %v2976
        %vm3029 = vcmask 385280
        %3030 = vst.msk [vmem:[#allocation4 + $0x180] sm:$0x1] %vm3029, %v2978
        %v3031 = vld [vmem:[#allocation3 + $0xf] sm:$0xff]
        %v3032 = vld [vmem:[#allocation3 + $0x17] sm:$0xff]
        %v3033 = vld [vmem:[#allocation3 + $0x1f] sm:$0xff]
        %v3034 = vld [vmem:[#allocation3 + $0x27] sm:$0xff]
        %v3035 = vld [vmem:[#allocation3 + $0x2f] sm:$0xff]
        %v3036 = vld [vmem:[#allocation3 + $0x37] sm:$0xff]
        %v3037 = vld [vmem:[#allocation3 + $0x3f] sm:$0xff]
        %v3038 = vld [vmem:[#allocation3 + $0x47] sm:$0xff]
        %v3039 = vld [vmem:[#allocation3 + $0x4f] sm:$0xff]
        %v3040 = vld [vmem:[#allocation3 + $0x57] sm:$0xff]
        %v3041 = vld [vmem:[#allocation3 + $0x5f] sm:$0xff]
        %v3042 = vld [vmem:[#allocation3 + $0x67] sm:$0xff]
        %v3043 = vld [vmem:[#allocation3 + $0x6f] sm:$0xff]
        %v3044 = vld [vmem:[#allocation3 + $0x77] sm:$0xff]
        %v3045 = vld [vmem:[#allocation3 + $0x7f] sm:$0xff]
        %v3046 = vld [vmem:[#allocation3 + $0x87] sm:$0xff]
        %v3047 = vld [vmem:[#allocation3 + $0x8f] sm:$0xff]
        %v3048 = vld [vmem:[#allocation3 + $0x97] sm:$0xff]
        %v3049 = vld [vmem:[#allocation3 + $0x9f] sm:$0xff]
        %v3050 = vld [vmem:[#allocation3 + $0xa7] sm:$0xff]
        %v3051 = vld [vmem:[#allocation3 + $0xaf] sm:$0xff]
        %v3052 = vld [vmem:[#allocation3 + $0xb7] sm:$0xff]
        %v3053 = vld [vmem:[#allocation3 + $0xbf] sm:$0xff]
        %v3054 = vld [vmem:[#allocation3 + $0xc7] sm:$0xff]
        %v3055 = vld [vmem:[#allocation3 + $0xcf] sm:$0x1]
        %3081 = vrot.lane.b32.xlu0 %v3031, 48
        %v3082 = vpop.permute.xlu0 %3081
        %3083 = vrot.lane.b32.xlu0 %v3032, 48
        %v3084 = vpop.permute.xlu0 %3083
        %3085 = vrot.lane.b32.xlu0 %v3033, 48
        %v3086 = vpop.permute.xlu0 %3085
        %3087 = vrot.lane.b32.xlu0 %v3034, 48
        %v3088 = vpop.permute.xlu0 %3087
        %3089 = vrot.lane.b32.xlu0 %v3035, 48
        %v3090 = vpop.permute.xlu0 %3089
        %3091 = vrot.lane.b32.xlu0 %v3036, 48
        %v3092 = vpop.permute.xlu0 %3091
        %3093 = vrot.lane.b32.xlu0 %v3037, 48
        %v3094 = vpop.permute.xlu0 %3093
        %3095 = vrot.lane.b32.xlu0 %v3038, 48
        %v3096 = vpop.permute.xlu0 %3095
        %3097 = vrot.lane.b32.xlu0 %v3039, 48
        %v3098 = vpop.permute.xlu0 %3097
        %3099 = vrot.lane.b32.xlu0 %v3040, 48
        %v3100 = vpop.permute.xlu0 %3099
        %3101 = vrot.lane.b32.xlu0 %v3041, 48
        %v3102 = vpop.permute.xlu0 %3101
        %3103 = vrot.lane.b32.xlu0 %v3042, 48
        %v3104 = vpop.permute.xlu0 %3103
        %3105 = vrot.lane.b32.xlu0 %v3043, 48
        %v3106 = vpop.permute.xlu0 %3105
        %3107 = vrot.lane.b32.xlu0 %v3044, 48
        %v3108 = vpop.permute.xlu0 %3107
        %3109 = vrot.lane.b32.xlu0 %v3045, 48
        %v3110 = vpop.permute.xlu0 %3109
        %3111 = vrot.lane.b32.xlu0 %v3046, 48
        %v3112 = vpop.permute.xlu0 %3111
        %3113 = vrot.lane.b32.xlu0 %v3047, 48
        %v3114 = vpop.permute.xlu0 %3113
        %3115 = vrot.lane.b32.xlu0 %v3048, 48
        %v3116 = vpop.permute.xlu0 %3115
        %3117 = vrot.lane.b32.xlu0 %v3049, 48
        %v3118 = vpop.permute.xlu0 %3117
        %3119 = vrot.lane.b32.xlu0 %v3050, 48
        %v3120 = vpop.permute.xlu0 %3119
        %3121 = vrot.lane.b32.xlu0 %v3051, 48
        %v3122 = vpop.permute.xlu0 %3121
        %3123 = vrot.lane.b32.xlu0 %v3052, 48
        %v3124 = vpop.permute.xlu0 %3123
        %3125 = vrot.lane.b32.xlu0 %v3053, 48
        %v3126 = vpop.permute.xlu0 %3125
        %3127 = vrot.lane.b32.xlu0 %v3054, 48
        %v3128 = vpop.permute.xlu0 %3127
        %3129 = vrot.lane.b32.xlu0 %v3055, 48
        %v3130 = vpop.permute.xlu0 %3129
        %vm3156 = vcmask 523648
        %3157 = vst.msk [vmem:[#allocation4] sm:$0xff] %vm3156, %v3082
        %3158 = vst.msk [vmem:[#allocation4 + $0x10] sm:$0xff] %vm3156, %v3084
        %3159 = vst.msk [vmem:[#allocation4 + $0x20] sm:$0xff] %vm3156, %v3086
        %3160 = vst.msk [vmem:[#allocation4 + $0x30] sm:$0xff] %vm3156, %v3088
        %3161 = vst.msk [vmem:[#allocation4 + $0x40] sm:$0xff] %vm3156, %v3090
        %3162 = vst.msk [vmem:[#allocation4 + $0x50] sm:$0xff] %vm3156, %v3092
        %3163 = vst.msk [vmem:[#allocation4 + $0x60] sm:$0xff] %vm3156, %v3094
        %3164 = vst.msk [vmem:[#allocation4 + $0x70] sm:$0xff] %vm3156, %v3096
        %3165 = vst.msk [vmem:[#allocation4 + $0x80] sm:$0xff] %vm3156, %v3098
        %3166 = vst.msk [vmem:[#allocation4 + $0x90] sm:$0xff] %vm3156, %v3100
        %3167 = vst.msk [vmem:[#allocation4 + $0xa0] sm:$0xff] %vm3156, %v3102
        %3168 = vst.msk [vmem:[#allocation4 + $0xb0] sm:$0xff] %vm3156, %v3104
        %3169 = vst.msk [vmem:[#allocation4 + $0xc0] sm:$0xff] %vm3156, %v3106
        %3170 = vst.msk [vmem:[#allocation4 + $0xd0] sm:$0xff] %vm3156, %v3108
        %3171 = vst.msk [vmem:[#allocation4 + $0xe0] sm:$0xff] %vm3156, %v3110
        %3172 = vst.msk [vmem:[#allocation4 + $0xf0] sm:$0xff] %vm3156, %v3112
        %3173 = vst.msk [vmem:[#allocation4 + $0x100] sm:$0xff] %vm3156, %v3114
        %3174 = vst.msk [vmem:[#allocation4 + $0x110] sm:$0xff] %vm3156, %v3116
        %3175 = vst.msk [vmem:[#allocation4 + $0x120] sm:$0xff] %vm3156, %v3118
        %3176 = vst.msk [vmem:[#allocation4 + $0x130] sm:$0xff] %vm3156, %v3120
        %3177 = vst.msk [vmem:[#allocation4 + $0x140] sm:$0xff] %vm3156, %v3122
        %3178 = vst.msk [vmem:[#allocation4 + $0x150] sm:$0xff] %vm3156, %v3124
        %3179 = vst.msk [vmem:[#allocation4 + $0x160] sm:$0xff] %vm3156, %v3126
        %3180 = vst.msk [vmem:[#allocation4 + $0x170] sm:$0xff] %vm3156, %v3128
        %vm3181 = vcmask 516480
        %3182 = vst.msk [vmem:[#allocation4 + $0x180] sm:$0x1] %vm3181, %v3130
        %v3183 = vld [vmem:[#allocation3 + $0x10] sm:$0xff]
        %v3184 = vld [vmem:[#allocation3 + $0x18] sm:$0xff]
        %v3185 = vld [vmem:[#allocation3 + $0x20] sm:$0xff]
        %v3186 = vld [vmem:[#allocation3 + $0x28] sm:$0xff]
        %v3187 = vld [vmem:[#allocation3 + $0x30] sm:$0xff]
        %v3188 = vld [vmem:[#allocation3 + $0x38] sm:$0xff]
        %v3189 = vld [vmem:[#allocation3 + $0x40] sm:$0xff]
        %v3190 = vld [vmem:[#allocation3 + $0x48] sm:$0xff]
        %v3191 = vld [vmem:[#allocation3 + $0x50] sm:$0xff]
        %v3192 = vld [vmem:[#allocation3 + $0x58] sm:$0xff]
        %v3193 = vld [vmem:[#allocation3 + $0x60] sm:$0xff]
        %v3194 = vld [vmem:[#allocation3 + $0x68] sm:$0xff]
        %v3195 = vld [vmem:[#allocation3 + $0x70] sm:$0xff]
        %v3196 = vld [vmem:[#allocation3 + $0x78] sm:$0xff]
        %v3197 = vld [vmem:[#allocation3 + $0x80] sm:$0xff]
        %v3198 = vld [vmem:[#allocation3 + $0x88] sm:$0xff]
        %v3199 = vld [vmem:[#allocation3 + $0x90] sm:$0xff]
        %v3200 = vld [vmem:[#allocation3 + $0x98] sm:$0xff]
        %v3201 = vld [vmem:[#allocation3 + $0xa0] sm:$0xff]
        %v3202 = vld [vmem:[#allocation3 + $0xa8] sm:$0xff]
        %v3203 = vld [vmem:[#allocation3 + $0xb0] sm:$0xff]
        %v3204 = vld [vmem:[#allocation3 + $0xb8] sm:$0xff]
        %v3205 = vld [vmem:[#allocation3 + $0xc0] sm:$0xff]
        %v3206 = vld [vmem:[#allocation3 + $0xc8] sm:$0xff]
        %v3207 = vld [vmem:[#allocation3 + $0xd0] sm:$0x1]
        %3233 = vrot.lane.b32.xlu0 %v3183, 64
        %v3234 = vpop.permute.xlu0 %3233
        %3235 = vrot.lane.b32.xlu0 %v3184, 64
        %v3236 = vpop.permute.xlu0 %3235
        %3237 = vrot.lane.b32.xlu0 %v3185, 64
        %v3238 = vpop.permute.xlu0 %3237
        %3239 = vrot.lane.b32.xlu0 %v3186, 64
        %v3240 = vpop.permute.xlu0 %3239
        %3241 = vrot.lane.b32.xlu0 %v3187, 64
        %v3242 = vpop.permute.xlu0 %3241
        %3243 = vrot.lane.b32.xlu0 %v3188, 64
        %v3244 = vpop.permute.xlu0 %3243
        %3245 = vrot.lane.b32.xlu0 %v3189, 64
        %v3246 = vpop.permute.xlu0 %3245
        %3247 = vrot.lane.b32.xlu0 %v3190, 64
        %v3248 = vpop.permute.xlu0 %3247
        %3249 = vrot.lane.b32.xlu0 %v3191, 64
        %v3250 = vpop.permute.xlu0 %3249
        %3251 = vrot.lane.b32.xlu0 %v3192, 64
        %v3252 = vpop.permute.xlu0 %3251
        %3253 = vrot.lane.b32.xlu0 %v3193, 64
        %v3254 = vpop.permute.xlu0 %3253
        %3255 = vrot.lane.b32.xlu0 %v3194, 64
        %v3256 = vpop.permute.xlu0 %3255
        %3257 = vrot.lane.b32.xlu0 %v3195, 64
        %v3258 = vpop.permute.xlu0 %3257
        %3259 = vrot.lane.b32.xlu0 %v3196, 64
        %v3260 = vpop.permute.xlu0 %3259
        %3261 = vrot.lane.b32.xlu0 %v3197, 64
        %v3262 = vpop.permute.xlu0 %3261
        %3263 = vrot.lane.b32.xlu0 %v3198, 64
        %v3264 = vpop.permute.xlu0 %3263
        %3265 = vrot.lane.b32.xlu0 %v3199, 64
        %v3266 = vpop.permute.xlu0 %3265
        %3267 = vrot.lane.b32.xlu0 %v3200, 64
        %v3268 = vpop.permute.xlu0 %3267
        %3269 = vrot.lane.b32.xlu0 %v3201, 64
        %v3270 = vpop.permute.xlu0 %3269
        %3271 = vrot.lane.b32.xlu0 %v3202, 64
        %v3272 = vpop.permute.xlu0 %3271
        %3273 = vrot.lane.b32.xlu0 %v3203, 64
        %v3274 = vpop.permute.xlu0 %3273
        %3275 = vrot.lane.b32.xlu0 %v3204, 64
        %v3276 = vpop.permute.xlu0 %3275
        %3277 = vrot.lane.b32.xlu0 %v3205, 64
        %v3278 = vpop.permute.xlu0 %3277
        %3279 = vrot.lane.b32.xlu0 %v3206, 64
        %v3280 = vpop.permute.xlu0 %3279
        %3281 = vrot.lane.b32.xlu0 %v3207, 64
        %v3282 = vpop.permute.xlu0 %3281
        %vm3308 = vcmask 654848
        %3309 = vst.msk [vmem:[#allocation4] sm:$0xff] %vm3308, %v3234
        %3310 = vst.msk [vmem:[#allocation4 + $0x10] sm:$0xff] %vm3308, %v3236
        %3311 = vst.msk [vmem:[#allocation4 + $0x20] sm:$0xff] %vm3308, %v3238
        %3312 = vst.msk [vmem:[#allocation4 + $0x30] sm:$0xff] %vm3308, %v3240
        %3313 = vst.msk [vmem:[#allocation4 + $0x40] sm:$0xff] %vm3308, %v3242
        %3314 = vst.msk [vmem:[#allocation4 + $0x50] sm:$0xff] %vm3308, %v3244
        %3315 = vst.msk [vmem:[#allocation4 + $0x60] sm:$0xff] %vm3308, %v3246
        %3316 = vst.msk [vmem:[#allocation4 + $0x70] sm:$0xff] %vm3308, %v3248
        %3317 = vst.msk [vmem:[#allocation4 + $0x80] sm:$0xff] %vm3308, %v3250
        %3318 = vst.msk [vmem:[#allocation4 + $0x90] sm:$0xff] %vm3308, %v3252
        %3319 = vst.msk [vmem:[#allocation4 + $0xa0] sm:$0xff] %vm3308, %v3254
        %3320 = vst.msk [vmem:[#allocation4 + $0xb0] sm:$0xff] %vm3308, %v3256
        %3321 = vst.msk [vmem:[#allocation4 + $0xc0] sm:$0xff] %vm3308, %v3258
        %3322 = vst.msk [vmem:[#allocation4 + $0xd0] sm:$0xff] %vm3308, %v3260
        %3323 = vst.msk [vmem:[#allocation4 + $0xe0] sm:$0xff] %vm3308, %v3262
        %3324 = vst.msk [vmem:[#allocation4 + $0xf0] sm:$0xff] %vm3308, %v3264
        %3325 = vst.msk [vmem:[#allocation4 + $0x100] sm:$0xff] %vm3308, %v3266
        %3326 = vst.msk [vmem:[#allocation4 + $0x110] sm:$0xff] %vm3308, %v3268
        %3327 = vst.msk [vmem:[#allocation4 + $0x120] sm:$0xff] %vm3308, %v3270
        %3328 = vst.msk [vmem:[#allocation4 + $0x130] sm:$0xff] %vm3308, %v3272
        %3329 = vst.msk [vmem:[#allocation4 + $0x140] sm:$0xff] %vm3308, %v3274
        %3330 = vst.msk [vmem:[#allocation4 + $0x150] sm:$0xff] %vm3308, %v3276
        %3331 = vst.msk [vmem:[#allocation4 + $0x160] sm:$0xff] %vm3308, %v3278
        %3332 = vst.msk [vmem:[#allocation4 + $0x170] sm:$0xff] %vm3308, %v3280
        %vm3333 = vcmask 647680
        %3334 = vst.msk [vmem:[#allocation4 + $0x180] sm:$0x1] %vm3333, %v3282
        %v3335 = vld [vmem:[#allocation3 + $0x11] sm:$0xff]
        %v3336 = vld [vmem:[#allocation3 + $0x19] sm:$0xff]
        %v3337 = vld [vmem:[#allocation3 + $0x21] sm:$0xff]
        %v3338 = vld [vmem:[#allocation3 + $0x29] sm:$0xff]
        %v3339 = vld [vmem:[#allocation3 + $0x31] sm:$0xff]
        %v3340 = vld [vmem:[#allocation3 + $0x39] sm:$0xff]
        %v3341 = vld [vmem:[#allocation3 + $0x41] sm:$0xff]
        %v3342 = vld [vmem:[#allocation3 + $0x49] sm:$0xff]
        %v3343 = vld [vmem:[#allocation3 + $0x51] sm:$0xff]
        %v3344 = vld [vmem:[#allocation3 + $0x59] sm:$0xff]
        %v3345 = vld [vmem:[#allocation3 + $0x61] sm:$0xff]
        %v3346 = vld [vmem:[#allocation3 + $0x69] sm:$0xff]
        %v3347 = vld [vmem:[#allocation3 + $0x71] sm:$0xff]
        %v3348 = vld [vmem:[#allocation3 + $0x79] sm:$0xff]
        %v3349 = vld [vmem:[#allocation3 + $0x81] sm:$0xff]
        %v3350 = vld [vmem:[#allocation3 + $0x89] sm:$0xff]
        %v3351 = vld [vmem:[#allocation3 + $0x91] sm:$0xff]
        %v3352 = vld [vmem:[#allocation3 + $0x99] sm:$0xff]
        %v3353 = vld [vmem:[#allocation3 + $0xa1] sm:$0xff]
        %v3354 = vld [vmem:[#allocation3 + $0xa9] sm:$0xff]
        %v3355 = vld [vmem:[#allocation3 + $0xb1] sm:$0xff]
        %v3356 = vld [vmem:[#allocation3 + $0xb9] sm:$0xff]
        %v3357 = vld [vmem:[#allocation3 + $0xc1] sm:$0xff]
        %v3358 = vld [vmem:[#allocation3 + $0xc9] sm:$0xff]
        %v3359 = vld [vmem:[#allocation3 + $0xd1] sm:$0x1]
        %3385 = vrot.lane.b32.xlu0 %v3335, 80
        %v3386 = vpop.permute.xlu0 %3385
        %3387 = vrot.lane.b32.xlu0 %v3336, 80
        %v3388 = vpop.permute.xlu0 %3387
        %3389 = vrot.lane.b32.xlu0 %v3337, 80
        %v3390 = vpop.permute.xlu0 %3389
        %3391 = vrot.lane.b32.xlu0 %v3338, 80
        %v3392 = vpop.permute.xlu0 %3391
        %3393 = vrot.lane.b32.xlu0 %v3339, 80
        %v3394 = vpop.permute.xlu0 %3393
        %3395 = vrot.lane.b32.xlu0 %v3340, 80
        %v3396 = vpop.permute.xlu0 %3395
        %3397 = vrot.lane.b32.xlu0 %v3341, 80
        %v3398 = vpop.permute.xlu0 %3397
        %3399 = vrot.lane.b32.xlu0 %v3342, 80
        %v3400 = vpop.permute.xlu0 %3399
        %3401 = vrot.lane.b32.xlu0 %v3343, 80
        %v3402 = vpop.permute.xlu0 %3401
        %3403 = vrot.lane.b32.xlu0 %v3344, 80
        %v3404 = vpop.permute.xlu0 %3403
        %3405 = vrot.lane.b32.xlu0 %v3345, 80
        %v3406 = vpop.permute.xlu0 %3405
        %3407 = vrot.lane.b32.xlu0 %v3346, 80
        %v3408 = vpop.permute.xlu0 %3407
        %3409 = vrot.lane.b32.xlu0 %v3347, 80
        %v3410 = vpop.permute.xlu0 %3409
        %3411 = vrot.lane.b32.xlu0 %v3348, 80
        %v3412 = vpop.permute.xlu0 %3411
        %3413 = vrot.lane.b32.xlu0 %v3349, 80
        %v3414 = vpop.permute.xlu0 %3413
        %3415 = vrot.lane.b32.xlu0 %v3350, 80
        %v3416 = vpop.permute.xlu0 %3415
        %3417 = vrot.lane.b32.xlu0 %v3351, 80
        %v3418 = vpop.permute.xlu0 %3417
        %3419 = vrot.lane.b32.xlu0 %v3352, 80
        %v3420 = vpop.permute.xlu0 %3419
        %3421 = vrot.lane.b32.xlu0 %v3353, 80
        %v3422 = vpop.permute.xlu0 %3421
        %3423 = vrot.lane.b32.xlu0 %v3354, 80
        %v3424 = vpop.permute.xlu0 %3423
        %3425 = vrot.lane.b32.xlu0 %v3355, 80
        %v3426 = vpop.permute.xlu0 %3425
        %3427 = vrot.lane.b32.xlu0 %v3356, 80
        %v3428 = vpop.permute.xlu0 %3427
        %3429 = vrot.lane.b32.xlu0 %v3357, 80
        %v3430 = vpop.permute.xlu0 %3429
        %3431 = vrot.lane.b32.xlu0 %v3358, 80
        %v3432 = vpop.permute.xlu0 %3431
        %3433 = vrot.lane.b32.xlu0 %v3359, 80
        %v3434 = vpop.permute.xlu0 %3433
        %vm3460 = vcmask 786048
        %3461 = vst.msk [vmem:[#allocation4] sm:$0xff] %vm3460, %v3386
        %3462 = vst.msk [vmem:[#allocation4 + $0x10] sm:$0xff] %vm3460, %v3388
        %3463 = vst.msk [vmem:[#allocation4 + $0x20] sm:$0xff] %vm3460, %v3390
        %3464 = vst.msk [vmem:[#allocation4 + $0x30] sm:$0xff] %vm3460, %v3392
        %3465 = vst.msk [vmem:[#allocation4 + $0x40] sm:$0xff] %vm3460, %v3394
        %3466 = vst.msk [vmem:[#allocation4 + $0x50] sm:$0xff] %vm3460, %v3396
        %3467 = vst.msk [vmem:[#allocation4 + $0x60] sm:$0xff] %vm3460, %v3398
        %3468 = vst.msk [vmem:[#allocation4 + $0x70] sm:$0xff] %vm3460, %v3400
        %3469 = vst.msk [vmem:[#allocation4 + $0x80] sm:$0xff] %vm3460, %v3402
        %3470 = vst.msk [vmem:[#allocation4 + $0x90] sm:$0xff] %vm3460, %v3404
        %3471 = vst.msk [vmem:[#allocation4 + $0xa0] sm:$0xff] %vm3460, %v3406
        %3472 = vst.msk [vmem:[#allocation4 + $0xb0] sm:$0xff] %vm3460, %v3408
        %3473 = vst.msk [vmem:[#allocation4 + $0xc0] sm:$0xff] %vm3460, %v3410
        %3474 = vst.msk [vmem:[#allocation4 + $0xd0] sm:$0xff] %vm3460, %v3412
        %3475 = vst.msk [vmem:[#allocation4 + $0xe0] sm:$0xff] %vm3460, %v3414
        %3476 = vst.msk [vmem:[#allocation4 + $0xf0] sm:$0xff] %vm3460, %v3416
        %3477 = vst.msk [vmem:[#allocation4 + $0x100] sm:$0xff] %vm3460, %v3418
        %3478 = vst.msk [vmem:[#allocation4 + $0x110] sm:$0xff] %vm3460, %v3420
        %3479 = vst.msk [vmem:[#allocation4 + $0x120] sm:$0xff] %vm3460, %v3422
        %3480 = vst.msk [vmem:[#allocation4 + $0x130] sm:$0xff] %vm3460, %v3424
        %3481 = vst.msk [vmem:[#allocation4 + $0x140] sm:$0xff] %vm3460, %v3426
        %3482 = vst.msk [vmem:[#allocation4 + $0x150] sm:$0xff] %vm3460, %v3428
        %3483 = vst.msk [vmem:[#allocation4 + $0x160] sm:$0xff] %vm3460, %v3430
        %3484 = vst.msk [vmem:[#allocation4 + $0x170] sm:$0xff] %vm3460, %v3432
        %vm3485 = vcmask 778880
        %3486 = vst.msk [vmem:[#allocation4 + $0x180] sm:$0x1] %vm3485, %v3434
        %v3487 = vld [vmem:[#allocation3 + $0x1e] sm:$0xff]
        %v3488 = vld [vmem:[#allocation3 + $0x26] sm:$0xff]
        %v3489 = vld [vmem:[#allocation3 + $0x2e] sm:$0xff]
        %v3490 = vld [vmem:[#allocation3 + $0x36] sm:$0xff]
        %v3491 = vld [vmem:[#allocation3 + $0x3e] sm:$0xff]
        %v3492 = vld [vmem:[#allocation3 + $0x46] sm:$0xff]
        %v3493 = vld [vmem:[#allocation3 + $0x4e] sm:$0xff]
        %v3494 = vld [vmem:[#allocation3 + $0x56] sm:$0xff]
        %v3495 = vld [vmem:[#allocation3 + $0x5e] sm:$0xff]
        %v3496 = vld [vmem:[#allocation3 + $0x66] sm:$0xff]
        %v3497 = vld [vmem:[#allocation3 + $0x6e] sm:$0xff]
        %v3498 = vld [vmem:[#allocation3 + $0x76] sm:$0xff]
        %v3499 = vld [vmem:[#allocation3 + $0x7e] sm:$0xff]
        %v3500 = vld [vmem:[#allocation3 + $0x86] sm:$0xff]
        %v3501 = vld [vmem:[#allocation3 + $0x8e] sm:$0xff]
        %v3502 = vld [vmem:[#allocation3 + $0x96] sm:$0xff]
        %v3503 = vld [vmem:[#allocation3 + $0x9e] sm:$0xff]
        %v3504 = vld [vmem:[#allocation3 + $0xa6] sm:$0xff]
        %v3505 = vld [vmem:[#allocation3 + $0xae] sm:$0xff]
        %v3506 = vld [vmem:[#allocation3 + $0xb6] sm:$0xff]
        %v3507 = vld [vmem:[#allocation3 + $0xbe] sm:$0xff]
        %v3508 = vld [vmem:[#allocation3 + $0xc6] sm:$0xff]
        %v3509 = vld [vmem:[#allocation3 + $0xce] sm:$0xff]
        %v3510 = vld [vmem:[#allocation3 + $0xd6] sm:$0xff]
        %v3511 = vld [vmem:[#allocation3 + $0xde] sm:$0x1]
        %3537 = vrot.lane.b32.xlu0 %v3487, 96
        %v3538 = vpop.permute.xlu0 %3537
        %3539 = vrot.lane.b32.xlu0 %v3488, 96
        %v3540 = vpop.permute.xlu0 %3539
        %3541 = vrot.lane.b32.xlu0 %v3489, 96
        %v3542 = vpop.permute.xlu0 %3541
        %3543 = vrot.lane.b32.xlu0 %v3490, 96
        %v3544 = vpop.permute.xlu0 %3543
        %3545 = vrot.lane.b32.xlu0 %v3491, 96
        %v3546 = vpop.permute.xlu0 %3545
        %3547 = vrot.lane.b32.xlu0 %v3492, 96
        %v3548 = vpop.permute.xlu0 %3547
        %3549 = vrot.lane.b32.xlu0 %v3493, 96
        %v3550 = vpop.permute.xlu0 %3549
        %3551 = vrot.lane.b32.xlu0 %v3494, 96
        %v3552 = vpop.permute.xlu0 %3551
        %3553 = vrot.lane.b32.xlu0 %v3495, 96
        %v3554 = vpop.permute.xlu0 %3553
        %3555 = vrot.lane.b32.xlu0 %v3496, 96
        %v3556 = vpop.permute.xlu0 %3555
        %3557 = vrot.lane.b32.xlu0 %v3497, 96
        %v3558 = vpop.permute.xlu0 %3557
        %3559 = vrot.lane.b32.xlu0 %v3498, 96
        %v3560 = vpop.permute.xlu0 %3559
        %3561 = vrot.lane.b32.xlu0 %v3499, 96
        %v3562 = vpop.permute.xlu0 %3561
        %3563 = vrot.lane.b32.xlu0 %v3500, 96
        %v3564 = vpop.permute.xlu0 %3563
        %3565 = vrot.lane.b32.xlu0 %v3501, 96
        %v3566 = vpop.permute.xlu0 %3565
        %3567 = vrot.lane.b32.xlu0 %v3502, 96
        %v3568 = vpop.permute.xlu0 %3567
        %3569 = vrot.lane.b32.xlu0 %v3503, 96
        %v3570 = vpop.permute.xlu0 %3569
        %3571 = vrot.lane.b32.xlu0 %v3504, 96
        %v3572 = vpop.permute.xlu0 %3571
        %3573 = vrot.lane.b32.xlu0 %v3505, 96
        %v3574 = vpop.permute.xlu0 %3573
        %3575 = vrot.lane.b32.xlu0 %v3506, 96
        %v3576 = vpop.permute.xlu0 %3575
        %3577 = vrot.lane.b32.xlu0 %v3507, 96
        %v3578 = vpop.permute.xlu0 %3577
        %3579 = vrot.lane.b32.xlu0 %v3508, 96
        %v3580 = vpop.permute.xlu0 %3579
        %3581 = vrot.lane.b32.xlu0 %v3509, 96
        %v3582 = vpop.permute.xlu0 %3581
        %3583 = vrot.lane.b32.xlu0 %v3510, 96
        %v3584 = vpop.permute.xlu0 %3583
        %3585 = vrot.lane.b32.xlu0 %v3511, 96
        %v3586 = vpop.permute.xlu0 %3585
        %vm3612 = vcmask 917248
        %3613 = vst.msk [vmem:[#allocation4] sm:$0xff] %vm3612, %v3538
        %3614 = vst.msk [vmem:[#allocation4 + $0x10] sm:$0xff] %vm3612, %v3540
        %3615 = vst.msk [vmem:[#allocation4 + $0x20] sm:$0xff] %vm3612, %v3542
        %3616 = vst.msk [vmem:[#allocation4 + $0x30] sm:$0xff] %vm3612, %v3544
        %3617 = vst.msk [vmem:[#allocation4 + $0x40] sm:$0xff] %vm3612, %v3546
        %3618 = vst.msk [vmem:[#allocation4 + $0x50] sm:$0xff] %vm3612, %v3548
        %3619 = vst.msk [vmem:[#allocation4 + $0x60] sm:$0xff] %vm3612, %v3550
        %3620 = vst.msk [vmem:[#allocation4 + $0x70] sm:$0xff] %vm3612, %v3552
        %3621 = vst.msk [vmem:[#allocation4 + $0x80] sm:$0xff] %vm3612, %v3554
        %3622 = vst.msk [vmem:[#allocation4 + $0x90] sm:$0xff] %vm3612, %v3556
        %3623 = vst.msk [vmem:[#allocation4 + $0xa0] sm:$0xff] %vm3612, %v3558
        %3624 = vst.msk [vmem:[#allocation4 + $0xb0] sm:$0xff] %vm3612, %v3560
        %3625 = vst.msk [vmem:[#allocation4 + $0xc0] sm:$0xff] %vm3612, %v3562
        %3626 = vst.msk [vmem:[#allocation4 + $0xd0] sm:$0xff] %vm3612, %v3564
        %3627 = vst.msk [vmem:[#allocation4 + $0xe0] sm:$0xff] %vm3612, %v3566
        %3628 = vst.msk [vmem:[#allocation4 + $0xf0] sm:$0xff] %vm3612, %v3568
        %3629 = vst.msk [vmem:[#allocation4 + $0x100] sm:$0xff] %vm3612, %v3570
        %3630 = vst.msk [vmem:[#allocation4 + $0x110] sm:$0xff] %vm3612, %v3572
        %3631 = vst.msk [vmem:[#allocation4 + $0x120] sm:$0xff] %vm3612, %v3574
        %3632 = vst.msk [vmem:[#allocation4 + $0x130] sm:$0xff] %vm3612, %v3576
        %3633 = vst.msk [vmem:[#allocation4 + $0x140] sm:$0xff] %vm3612, %v3578
        %3634 = vst.msk [vmem:[#allocation4 + $0x150] sm:$0xff] %vm3612, %v3580
        %3635 = vst.msk [vmem:[#allocation4 + $0x160] sm:$0xff] %vm3612, %v3582
        %3636 = vst.msk [vmem:[#allocation4 + $0x170] sm:$0xff] %vm3612, %v3584
        %vm3637 = vcmask 910080
        %3638 = vst.msk [vmem:[#allocation4 + $0x180] sm:$0x1] %vm3637, %v3586
        %v3639 = vld [vmem:[#allocation3 + $0x1f] sm:$0xff]
        %v3640 = vld [vmem:[#allocation3 + $0x27] sm:$0xff]
        %v3641 = vld [vmem:[#allocation3 + $0x2f] sm:$0xff]
        %v3642 = vld [vmem:[#allocation3 + $0x37] sm:$0xff]
        %v3643 = vld [vmem:[#allocation3 + $0x3f] sm:$0xff]
        %v3644 = vld [vmem:[#allocation3 + $0x47] sm:$0xff]
        %v3645 = vld [vmem:[#allocation3 + $0x4f] sm:$0xff]
        %v3646 = vld [vmem:[#allocation3 + $0x57] sm:$0xff]
        %v3647 = vld [vmem:[#allocation3 + $0x5f] sm:$0xff]
        %v3648 = vld [vmem:[#allocation3 + $0x67] sm:$0xff]
        %v3649 = vld [vmem:[#allocation3 + $0x6f] sm:$0xff]
        %v3650 = vld [vmem:[#allocation3 + $0x77] sm:$0xff]
        %v3651 = vld [vmem:[#allocation3 + $0x7f] sm:$0xff]
        %v3652 = vld [vmem:[#allocation3 + $0x87] sm:$0xff]
        %v3653 = vld [vmem:[#allocation3 + $0x8f] sm:$0xff]
        %v3654 = vld [vmem:[#allocation3 + $0x97] sm:$0xff]
        %v3655 = vld [vmem:[#allocation3 + $0x9f] sm:$0xff]
        %v3656 = vld [vmem:[#allocation3 + $0xa7] sm:$0xff]
        %v3657 = vld [vmem:[#allocation3 + $0xaf] sm:$0xff]
        %v3658 = vld [vmem:[#allocation3 + $0xb7] sm:$0xff]
        %v3659 = vld [vmem:[#allocation3 + $0xbf] sm:$0xff]
        %v3660 = vld [vmem:[#allocation3 + $0xc7] sm:$0xff]
        %v3661 = vld [vmem:[#allocation3 + $0xcf] sm:$0xff]
        %v3662 = vld [vmem:[#allocation3 + $0xd7] sm:$0xff]
        %v3663 = vld [vmem:[#allocation3 + $0xdf] sm:$0x1]
        %3689 = vrot.lane.b32.xlu0 %v3639, 112
        %v3690 = vpop.permute.xlu0 %3689
        %3691 = vrot.lane.b32.xlu0 %v3640, 112
        %v3692 = vpop.permute.xlu0 %3691
        %3693 = vrot.lane.b32.xlu0 %v3641, 112
        %v3694 = vpop.permute.xlu0 %3693
        %3695 = vrot.lane.b32.xlu0 %v3642, 112
        %v3696 = vpop.permute.xlu0 %3695
        %3697 = vrot.lane.b32.xlu0 %v3643, 112
        %v3698 = vpop.permute.xlu0 %3697
        %3699 = vrot.lane.b32.xlu0 %v3644, 112
        %v3700 = vpop.permute.xlu0 %3699
        %3701 = vrot.lane.b32.xlu0 %v3645, 112
        %v3702 = vpop.permute.xlu0 %3701
        %3703 = vrot.lane.b32.xlu0 %v3646, 112
        %v3704 = vpop.permute.xlu0 %3703
        %3705 = vrot.lane.b32.xlu0 %v3647, 112
        %v3706 = vpop.permute.xlu0 %3705
        %3707 = vrot.lane.b32.xlu0 %v3648, 112
        %v3708 = vpop.permute.xlu0 %3707
        %3709 = vrot.lane.b32.xlu0 %v3649, 112
        %v3710 = vpop.permute.xlu0 %3709
        %3711 = vrot.lane.b32.xlu0 %v3650, 112
        %v3712 = vpop.permute.xlu0 %3711
        %3713 = vrot.lane.b32.xlu0 %v3651, 112
        %v3714 = vpop.permute.xlu0 %3713
        %3715 = vrot.lane.b32.xlu0 %v3652, 112
        %v3716 = vpop.permute.xlu0 %3715
        %3717 = vrot.lane.b32.xlu0 %v3653, 112
        %v3718 = vpop.permute.xlu0 %3717
        %3719 = vrot.lane.b32.xlu0 %v3654, 112
        %v3720 = vpop.permute.xlu0 %3719
        %3721 = vrot.lane.b32.xlu0 %v3655, 112
        %v3722 = vpop.permute.xlu0 %3721
        %3723 = vrot.lane.b32.xlu0 %v3656, 112
        %v3724 = vpop.permute.xlu0 %3723
        %3725 = vrot.lane.b32.xlu0 %v3657, 112
        %v3726 = vpop.permute.xlu0 %3725
        %3727 = vrot.lane.b32.xlu0 %v3658, 112
        %v3728 = vpop.permute.xlu0 %3727
        %3729 = vrot.lane.b32.xlu0 %v3659, 112
        %v3730 = vpop.permute.xlu0 %3729
        %3731 = vrot.lane.b32.xlu0 %v3660, 112
        %v3732 = vpop.permute.xlu0 %3731
        %3733 = vrot.lane.b32.xlu0 %v3661, 112
        %v3734 = vpop.permute.xlu0 %3733
        %3735 = vrot.lane.b32.xlu0 %v3662, 112
        %v3736 = vpop.permute.xlu0 %3735
        %3737 = vrot.lane.b32.xlu0 %v3663, 112
        %v3738 = vpop.permute.xlu0 %3737
        %vm3764 = vcmask 1048448
        %3765 = vst.msk [vmem:[#allocation4] sm:$0xff] %vm3764, %v3690
        %3766 = vst.msk [vmem:[#allocation4 + $0x10] sm:$0xff] %vm3764, %v3692
        %3767 = vst.msk [vmem:[#allocation4 + $0x20] sm:$0xff] %vm3764, %v3694
        %3768 = vst.msk [vmem:[#allocation4 + $0x30] sm:$0xff] %vm3764, %v3696
        %3769 = vst.msk [vmem:[#allocation4 + $0x40] sm:$0xff] %vm3764, %v3698
        %3770 = vst.msk [vmem:[#allocation4 + $0x50] sm:$0xff] %vm3764, %v3700
        %3771 = vst.msk [vmem:[#allocation4 + $0x60] sm:$0xff] %vm3764, %v3702
        %3772 = vst.msk [vmem:[#allocation4 + $0x70] sm:$0xff] %vm3764, %v3704
        %3773 = vst.msk [vmem:[#allocation4 + $0x80] sm:$0xff] %vm3764, %v3706
        %3774 = vst.msk [vmem:[#allocation4 + $0x90] sm:$0xff] %vm3764, %v3708
        %3775 = vst.msk [vmem:[#allocation4 + $0xa0] sm:$0xff] %vm3764, %v3710
        %3776 = vst.msk [vmem:[#allocation4 + $0xb0] sm:$0xff] %vm3764, %v3712
        %3777 = vst.msk [vmem:[#allocation4 + $0xc0] sm:$0xff] %vm3764, %v3714
        %3778 = vst.msk [vmem:[#allocation4 + $0xd0] sm:$0xff] %vm3764, %v3716
        %3779 = vst.msk [vmem:[#allocation4 + $0xe0] sm:$0xff] %vm3764, %v3718
        %3780 = vst.msk [vmem:[#allocation4 + $0xf0] sm:$0xff] %vm3764, %v3720
        %3781 = vst.msk [vmem:[#allocation4 + $0x100] sm:$0xff] %vm3764, %v3722
        %3782 = vst.msk [vmem:[#allocation4 + $0x110] sm:$0xff] %vm3764, %v3724
        %3783 = vst.msk [vmem:[#allocation4 + $0x120] sm:$0xff] %vm3764, %v3726
        %3784 = vst.msk [vmem:[#allocation4 + $0x130] sm:$0xff] %vm3764, %v3728
        %3785 = vst.msk [vmem:[#allocation4 + $0x140] sm:$0xff] %vm3764, %v3730
        %3786 = vst.msk [vmem:[#allocation4 + $0x150] sm:$0xff] %vm3764, %v3732
        %3787 = vst.msk [vmem:[#allocation4 + $0x160] sm:$0xff] %vm3764, %v3734
        %3788 = vst.msk [vmem:[#allocation4 + $0x170] sm:$0xff] %vm3764, %v3736
        %vm3789 = vcmask 1041280
        %3790 = vst.msk [vmem:[#allocation4 + $0x180] sm:$0x1] %vm3789, %v3738
        %v3791 = vld [vmem:[#allocation3 + $0x20] sm:$0xff]
        %v3792 = vld [vmem:[#allocation3 + $0x28] sm:$0xff]
        %v3793 = vld [vmem:[#allocation3 + $0x30] sm:$0xff]
        %v3794 = vld [vmem:[#allocation3 + $0x38] sm:$0xff]
        %v3795 = vld [vmem:[#allocation3 + $0x40] sm:$0xff]
        %v3796 = vld [vmem:[#allocation3 + $0x48] sm:$0xff]
        %v3797 = vld [vmem:[#allocation3 + $0x50] sm:$0xff]
        %v3798 = vld [vmem:[#allocation3 + $0x58] sm:$0xff]
        %v3799 = vld [vmem:[#allocation3 + $0x60] sm:$0xff]
        %v3800 = vld [vmem:[#allocation3 + $0x68] sm:$0xff]
        %v3801 = vld [vmem:[#allocation3 + $0x70] sm:$0xff]
        %v3802 = vld [vmem:[#allocation3 + $0x78] sm:$0xff]
        %v3803 = vld [vmem:[#allocation3 + $0x80] sm:$0xff]
        %v3804 = vld [vmem:[#allocation3 + $0x88] sm:$0xff]
        %v3805 = vld [vmem:[#allocation3 + $0x90] sm:$0xff]
        %v3806 = vld [vmem:[#allocation3 + $0x98] sm:$0xff]
        %v3807 = vld [vmem:[#allocation3 + $0xa0] sm:$0xff]
        %v3808 = vld [vmem:[#allocation3 + $0xa8] sm:$0xff]
        %v3809 = vld [vmem:[#allocation3 + $0xb0] sm:$0xff]
        %v3810 = vld [vmem:[#allocation3 + $0xb8] sm:$0xff]
        %v3811 = vld [vmem:[#allocation3 + $0xc0] sm:$0xff]
        %v3812 = vld [vmem:[#allocation3 + $0xc8] sm:$0xff]
        %v3813 = vld [vmem:[#allocation3 + $0xd0] sm:$0xff]
        %v3814 = vld [vmem:[#allocation3 + $0xd8] sm:$0xff]
        %v3815 = vld [vmem:[#allocation3 + $0xe0] sm:$0x1]
        %3816 = vst.msk [vmem:[#allocation4 + $0x8] sm:$0xff] %vm502, %v3791
        %3817 = vst.msk [vmem:[#allocation4 + $0x18] sm:$0xff] %vm502, %v3792
        %3818 = vst.msk [vmem:[#allocation4 + $0x28] sm:$0xff] %vm502, %v3793
        %3819 = vst.msk [vmem:[#allocation4 + $0x38] sm:$0xff] %vm502, %v3794
        %3820 = vst.msk [vmem:[#allocation4 + $0x48] sm:$0xff] %vm502, %v3795
        %3821 = vst.msk [vmem:[#allocation4 + $0x58] sm:$0xff] %vm502, %v3796
        %3822 = vst.msk [vmem:[#allocation4 + $0x68] sm:$0xff] %vm502, %v3797
        %3823 = vst.msk [vmem:[#allocation4 + $0x78] sm:$0xff] %vm502, %v3798
        %3824 = vst.msk [vmem:[#allocation4 + $0x88] sm:$0xff] %vm502, %v3799
        %3825 = vst.msk [vmem:[#allocation4 + $0x98] sm:$0xff] %vm502, %v3800
        %3826 = vst.msk [vmem:[#allocation4 + $0xa8] sm:$0xff] %vm502, %v3801
        %3827 = vst.msk [vmem:[#allocation4 + $0xb8] sm:$0xff] %vm502, %v3802
        %3828 = vst.msk [vmem:[#allocation4 + $0xc8] sm:$0xff] %vm502, %v3803
        %3829 = vst.msk [vmem:[#allocation4 + $0xd8] sm:$0xff] %vm502, %v3804
        %3830 = vst.msk [vmem:[#allocation4 + $0xe8] sm:$0xff] %vm502, %v3805
        %3831 = vst.msk [vmem:[#allocation4 + $0xf8] sm:$0xff] %vm502, %v3806
        %3832 = vst.msk [vmem:[#allocation4 + $0x108] sm:$0xff] %vm502, %v3807
        %3833 = vst.msk [vmem:[#allocation4 + $0x118] sm:$0xff] %vm502, %v3808
        %3834 = vst.msk [vmem:[#allocation4 + $0x128] sm:$0xff] %vm502, %v3809
        %3835 = vst.msk [vmem:[#allocation4 + $0x138] sm:$0xff] %vm502, %v3810
        %3836 = vst.msk [vmem:[#allocation4 + $0x148] sm:$0xff] %vm502, %v3811
        %3837 = vst.msk [vmem:[#allocation4 + $0x158] sm:$0xff] %vm502, %v3812
        %3838 = vst.msk [vmem:[#allocation4 + $0x168] sm:$0xff] %vm502, %v3813
        %3839 = vst.msk [vmem:[#allocation4 + $0x178] sm:$0xff] %vm502, %v3814
        %3840 = vst.msk [vmem:[#allocation4 + $0x188] sm:$0x1] %vm2725, %v3815
        %v3841 = vld [vmem:[#allocation4] sm:$0xff]
        %v3842 = vld [vmem:[#allocation4 + $0x8] sm:$0xff]
        %v3843 = vld [vmem:[#allocation4 + $0x10] sm:$0xff]
        %v3844 = vld [vmem:[#allocation4 + $0x18] sm:$0xff]
        %v3845 = vld [vmem:[#allocation4 + $0x20] sm:$0xff]
        %v3846 = vld [vmem:[#allocation4 + $0x28] sm:$0xff]
        %v3847 = vld [vmem:[#allocation4 + $0x30] sm:$0xff]
        %v3848 = vld [vmem:[#allocation4 + $0x38] sm:$0xff]
        %v3849 = vld [vmem:[#allocation4 + $0x40] sm:$0xff]
        %v3850 = vld [vmem:[#allocation4 + $0x48] sm:$0xff]
        %v3851 = vld [vmem:[#allocation4 + $0x50] sm:$0xff]
        %v3852 = vld [vmem:[#allocation4 + $0x58] sm:$0xff]
        %v3853 = vld [vmem:[#allocation4 + $0x60] sm:$0xff]
        %v3854 = vld [vmem:[#allocation4 + $0x68] sm:$0xff]
        %v3855 = vld [vmem:[#allocation4 + $0x70] sm:$0xff]
        %v3856 = vld [vmem:[#allocation4 + $0x78] sm:$0xff]
        %v3857 = vld [vmem:[#allocation4 + $0x80] sm:$0xff]
        %v3858 = vld [vmem:[#allocation4 + $0x88] sm:$0xff]
        %v3859 = vld [vmem:[#allocation4 + $0x90] sm:$0xff]
        %v3860 = vld [vmem:[#allocation4 + $0x98] sm:$0xff]
        %v3861 = vld [vmem:[#allocation4 + $0xa0] sm:$0xff]
        %v3862 = vld [vmem:[#allocation4 + $0xa8] sm:$0xff]
        %v3863 = vld [vmem:[#allocation4 + $0xb0] sm:$0xff]
        %v3864 = vld [vmem:[#allocation4 + $0xb8] sm:$0xff]
        %v3865 = vld [vmem:[#allocation4 + $0xc0] sm:$0xff]
        %v3866 = vld [vmem:[#allocation4 + $0xc8] sm:$0xff]
        %v3867 = vld [vmem:[#allocation4 + $0xd0] sm:$0xff]
        %v3868 = vld [vmem:[#allocation4 + $0xd8] sm:$0xff]
        %v3869 = vld [vmem:[#allocation4 + $0xe0] sm:$0xff]
        %v3870 = vld [vmem:[#allocation4 + $0xe8] sm:$0xff]
        %v3871 = vld [vmem:[#allocation4 + $0xf0] sm:$0xff]
        %v3872 = vld [vmem:[#allocation4 + $0xf8] sm:$0xff]
        %v3873 = vld [vmem:[#allocation4 + $0x100] sm:$0xff]
        %v3874 = vld [vmem:[#allocation4 + $0x108] sm:$0xff]
        %v3875 = vld [vmem:[#allocation4 + $0x110] sm:$0xff]
        %v3876 = vld [vmem:[#allocation4 + $0x118] sm:$0xff]
        %v3877 = vld [vmem:[#allocation4 + $0x120] sm:$0xff]
        %v3878 = vld [vmem:[#allocation4 + $0x128] sm:$0xff]
        %v3879 = vld [vmem:[#allocation4 + $0x130] sm:$0xff]
        %v3880 = vld [vmem:[#allocation4 + $0x138] sm:$0xff]
        %v3881 = vld [vmem:[#allocation4 + $0x140] sm:$0xff]
        %v3882 = vld [vmem:[#allocation4 + $0x148] sm:$0xff]
        %v3883 = vld [vmem:[#allocation4 + $0x150] sm:$0xff]
        %v3884 = vld [vmem:[#allocation4 + $0x158] sm:$0xff]
        %v3885 = vld [vmem:[#allocation4 + $0x160] sm:$0xff]
        %v3886 = vld [vmem:[#allocation4 + $0x168] sm:$0xff]
        %v3887 = vld [vmem:[#allocation4 + $0x170] sm:$0xff]
        %v3888 = vld [vmem:[#allocation4 + $0x178] sm:$0xff]
        %v3889 = vld [vmem:[#allocation4 + $0x180] sm:$0x1]
        %v3890 = vld [vmem:[#allocation4 + $0x188] sm:$0x1]
        %v3891 = vld [vmem:[%s3] sm:$0xff]
        %v3892 = vld [vmem:[%s3 + $0x8] sm:$0xff]
        %v3893 = vld [vmem:[%s3 + $0x10] sm:$0xff]
        %v3894 = vld [vmem:[%s3 + $0x18] sm:$0xff]
        %v3895 = vld [vmem:[%s3 + $0x20] sm:$0xff]
        %v3896 = vld [vmem:[%s3 + $0x28] sm:$0xff]
        %v3897 = vld [vmem:[%s3 + $0x30] sm:$0xff]
        %v3898 = vld [vmem:[%s3 + $0x38] sm:$0xff]
        %v3899 = vld [vmem:[%s3 + $0x40] sm:$0xff]
        %v3900 = vld [vmem:[%s3 + $0x48] sm:$0xff]
        %v3901 = vld [vmem:[%s3 + $0x50] sm:$0xff]
        %v3902 = vld [vmem:[%s3 + $0x58] sm:$0xff]
        %v3903 = vld [vmem:[%s3 + $0x60] sm:$0xff]
        %v3904 = vld [vmem:[%s3 + $0x68] sm:$0xff]
        %v3905 = vld [vmem:[%s3 + $0x70] sm:$0xff]
        %v3906 = vld [vmem:[%s3 + $0x78] sm:$0xff]
        %v3907 = vld [vmem:[%s3 + $0x80] sm:$0xff]
        %v3908 = vld [vmem:[%s3 + $0x88] sm:$0xff]
        %v3909 = vld [vmem:[%s4] sm:$0x1]
        %v3911 = vlaneseq
        %v3912 = vshrl.u32 %v3911, 7
        %v3913 = vsub.s32 0, %v3912
        %v3914 = vrot.slane %v3909, %v3913
        %v3917 = vsel %vm502, %v3842, 0
        %v3920 = vsel %vm502, %v3844, 0
        %v3923 = vsel %vm502, %v3846, 0
        %v3926 = vsel %vm502, %v3848, 0
        %v3929 = vsel %vm502, %v3850, 0
        %v3932 = vsel %vm502, %v3852, 0
        %v3935 = vsel %vm502, %v3854, 0
        %v3938 = vsel %vm502, %v3856, 0
        %v3941 = vsel %vm502, %v3858, 0
        %v3944 = vsel %vm502, %v3860, 0
        %v3947 = vsel %vm502, %v3862, 0
        %v3950 = vsel %vm502, %v3864, 0
        %v3953 = vsel %vm502, %v3866, 0
        %v3956 = vsel %vm502, %v3868, 0
        %v3959 = vsel %vm502, %v3870, 0
        %v3962 = vsel %vm502, %v3872, 0
        %v3965 = vsel %vm502, %v3874, 0
        %v3968 = vsel %vm502, %v3876, 0
        %v3971 = vsel %vm502, %v3878, 0
        %v3974 = vsel %vm502, %v3880, 0
        %v3977 = vsel %vm502, %v3882, 0
        %v3980 = vsel %vm502, %v3884, 0
        %v3983 = vsel %vm502, %v3886, 0
        %v3986 = vsel %vm502, %v3888, 0
        %v3989 = vsel %vm502, %v3890, 0
        %3991 = vmatprep.subr.mxu0 0.0
        %3992 = vmatpush1.msra.mxu0 %v3906
        %3993 = vmatprep.subr.mxu0 0.0
        %3994 = vmatpush1.msra.mxu0 %v3905
        %3995 = vmatprep.subr.mxu0 0.0
        %3996 = vmatpush1.msra.mxu0 %v3904
        %3997 = vmatprep.subr.mxu0 0.0
        %3998 = vmatpush1.msra.mxu0 %v3903
        %3999 = vmatprep.subr.mxu0 0.0
        %4000 = vmatpush1.msra.mxu0 %v3902
        %4001 = vmatprep.subr.mxu0 0.0
        %4002 = vmatpush1.msra.mxu0 %v3901
        %4003 = vmatprep.subr.mxu0 0.0
        %4004 = vmatpush1.msra.mxu0 %v3900
        %4005 = vmatprep.subr.mxu0 0.0
        %4006 = vmatpush1.msra.mxu0 %v3899
        %4007 = vmatprep.subr.mxu0 0.0
        %4008 = vmatpush1.msra.mxu0 %v3898
        %4009 = vmatprep.subr.mxu0 0.0
        %4010 = vmatpush1.msra.mxu0 %v3897
        %4011 = vmatprep.subr.mxu0 0.0
        %4012 = vmatpush1.msra.mxu0 %v3896
        %4013 = vmatprep.subr.mxu0 0.0
        %4014 = vmatpush1.msra.mxu0 %v3895
        %4015 = vmatprep.subr.mxu0 0.0
        %4016 = vmatpush1.msra.mxu0 %v3894
        %4017 = vmatprep.subr.mxu0 0.0
        %4018 = vmatpush1.msra.mxu0 %v3893
        %4019 = vmatprep.subr.mxu0 0.0
        %4020 = vmatpush1.msra.mxu0 %v3892
        %4021 = vmatprep.subr.mxu0 0.0
        %4022 = vmatpush1.msra.mxu0 %v3891
        %4023 = vmatprep.subr.mxu0 0.0
        %4024 = vmatpush2.msra.mxu0 0.0
        %4025 = vmatprep.subr.mxu0 0.0
        %4026 = vmatpush2.msra.mxu0 0.0
        %4027 = vmatprep.subr.mxu0 0.0
        %4028 = vmatpush2.msra.mxu0 0.0
        %4029 = vmatprep.subr.mxu0 0.0
        %4030 = vmatpush2.msra.mxu0 0.0
        %4031 = vmatprep.subr.mxu0 0.0
        %4032 = vmatpush2.msra.mxu0 0.0
        %4033 = vmatprep.subr.mxu0 0.0
        %4034 = vmatpush2.msra.mxu0 0.0
        %4035 = vmatprep.subr.mxu0 0.0
        %4036 = vmatpush2.msra.mxu0 0.0
        %4037 = vmatprep.subr.mxu0 0.0
        %4038 = vmatpush2.msra.mxu0 0.0
        %4039 = vmatprep.subr.mxu0 0.0
        %4040 = vmatpush2.msra.mxu0 0.0
        %4041 = vmatprep.subr.mxu0 0.0
        %4042 = vmatpush2.msra.mxu0 0.0
        %4043 = vmatprep.subr.mxu0 0.0
        %4044 = vmatpush2.msra.mxu0 0.0
        %4045 = vmatprep.subr.mxu0 0.0
        %4046 = vmatpush2.msra.mxu0 0.0
        %4047 = vmatprep.subr.mxu0 0.0
        %4048 = vmatpush2.msra.mxu0 0.0
        %4049 = vmatprep.subr.mxu0 0.0
        %4050 = vmatpush2.msra.mxu0 0.0
        %4051 = vmatprep.subr.mxu0 0.0
        %4052 = vmatpush2.msra.mxu0 %v3908
        %4053 = vmatprep.subr.mxu0 0.0
        %4054 = vmatpush2.msra.mxu0 %v3907
        %4055 = vmatprep.mubr.f32.mxu0 %v3917
        %4056 = vmatmul.mubr.f32.gmra.mxu0 %v3841
        %v4057 = vpop.f32.mrf.mxu0
        %v4058 = vadd.f32 %v3914, %v4057
        %v4059 = vpop.f32.mrf.mxu0
        %4060 = vmatprep.mubr.f32.mxu0 %v3920
        %4061 = vmatmul.mubr.f32.gmra.mxu0 %v3843
        %v4062 = vpop.f32.mrf.mxu0
        %v4063 = vadd.f32 %v3914, %v4062
        %v4064 = vpop.f32.mrf.mxu0
        %4065 = vmatprep.mubr.f32.mxu0 %v3923
        %4066 = vmatmul.mubr.f32.gmra.mxu0 %v3845
        %v4067 = vpop.f32.mrf.mxu0
        %v4068 = vadd.f32 %v3914, %v4067
        %v4069 = vpop.f32.mrf.mxu0
        %4070 = vmatprep.mubr.f32.mxu0 %v3926
        %4071 = vmatmul.mubr.f32.gmra.mxu0 %v3847
        %v4072 = vpop.f32.mrf.mxu0
        %v4073 = vadd.f32 %v3914, %v4072
        %v4074 = vpop.f32.mrf.mxu0
        %4075 = vmatprep.mubr.f32.mxu0 %v3929
        %4076 = vmatmul.mubr.f32.gmra.mxu0 %v3849
        %v4077 = vpop.f32.mrf.mxu0
        %v4078 = vadd.f32 %v3914, %v4077
        %v4079 = vpop.f32.mrf.mxu0
        %4080 = vmatprep.mubr.f32.mxu0 %v3932
        %4081 = vmatmul.mubr.f32.gmra.mxu0 %v3851
        %v4082 = vpop.f32.mrf.mxu0
        %v4083 = vadd.f32 %v3914, %v4082
        %v4084 = vpop.f32.mrf.mxu0
        %4085 = vmatprep.mubr.f32.mxu0 %v3935
        %4086 = vmatmul.mubr.f32.gmra.mxu0 %v3853
        %v4087 = vpop.f32.mrf.mxu0
        %v4088 = vadd.f32 %v3914, %v4087
        %v4089 = vpop.f32.mrf.mxu0
        %4090 = vmatprep.mubr.f32.mxu0 %v3938
        %4091 = vmatmul.mubr.f32.gmra.mxu0 %v3855
        %v4092 = vpop.f32.mrf.mxu0
        %v4093 = vadd.f32 %v3914, %v4092
        %v4094 = vpop.f32.mrf.mxu0
        %4095 = vmatprep.mubr.f32.mxu0 %v3941
        %4096 = vmatmul.mubr.f32.gmra.mxu0 %v3857
        %v4097 = vpop.f32.mrf.mxu0
        %v4098 = vadd.f32 %v3914, %v4097
        %v4099 = vpop.f32.mrf.mxu0
        %4100 = vmatprep.mubr.f32.mxu0 %v3944
        %4101 = vmatmul.mubr.f32.gmra.mxu0 %v3859
        %v4102 = vpop.f32.mrf.mxu0
        %v4103 = vadd.f32 %v3914, %v4102
        %v4104 = vpop.f32.mrf.mxu0
        %4105 = vmatprep.mubr.f32.mxu0 %v3947
        %4106 = vmatmul.mubr.f32.gmra.mxu0 %v3861
        %v4107 = vpop.f32.mrf.mxu0
        %v4108 = vadd.f32 %v3914, %v4107
        %v4109 = vpop.f32.mrf.mxu0
        %4110 = vmatprep.mubr.f32.mxu0 %v3950
        %4111 = vmatmul.mubr.f32.gmra.mxu0 %v3863
        %v4112 = vpop.f32.mrf.mxu0
        %v4113 = vadd.f32 %v3914, %v4112
        %v4114 = vpop.f32.mrf.mxu0
        %4115 = vmatprep.mubr.f32.mxu0 %v3953
        %4116 = vmatmul.mubr.f32.gmra.mxu0 %v3865
        %v4117 = vpop.f32.mrf.mxu0
        %v4118 = vadd.f32 %v3914, %v4117
        %v4119 = vpop.f32.mrf.mxu0
        %4120 = vmatprep.mubr.f32.mxu0 %v3956
        %4121 = vmatmul.mubr.f32.gmra.mxu0 %v3867
        %v4122 = vpop.f32.mrf.mxu0
        %v4123 = vadd.f32 %v3914, %v4122
        %v4124 = vpop.f32.mrf.mxu0
        %4125 = vmatprep.mubr.f32.mxu0 %v3959
        %4126 = vmatmul.mubr.f32.gmra.mxu0 %v3869
        %v4127 = vpop.f32.mrf.mxu0
        %v4128 = vadd.f32 %v3914, %v4127
        %v4129 = vpop.f32.mrf.mxu0
        %4130 = vmatprep.mubr.f32.mxu0 %v3962
        %4131 = vmatmul.mubr.f32.gmra.mxu0 %v3871
        %v4132 = vpop.f32.mrf.mxu0
        %v4133 = vadd.f32 %v3914, %v4132
        %v4134 = vpop.f32.mrf.mxu0
        %4135 = vmatprep.mubr.f32.mxu0 %v3965
        %4136 = vmatmul.mubr.f32.gmra.mxu0 %v3873
        %v4137 = vpop.f32.mrf.mxu0
        %v4138 = vadd.f32 %v3914, %v4137
        %v4139 = vpop.f32.mrf.mxu0
        %4140 = vmatprep.mubr.f32.mxu0 %v3968
        %4141 = vmatmul.mubr.f32.gmra.mxu0 %v3875
        %v4142 = vpop.f32.mrf.mxu0
        %v4143 = vadd.f32 %v3914, %v4142
        %v4144 = vpop.f32.mrf.mxu0
        %4145 = vmatprep.mubr.f32.mxu0 %v3971
        %4146 = vmatmul.mubr.f32.gmra.mxu0 %v3877
        %v4147 = vpop.f32.mrf.mxu0
        %v4148 = vadd.f32 %v3914, %v4147
        %v4149 = vpop.f32.mrf.mxu0
        %4150 = vmatprep.mubr.f32.mxu0 %v3974
        %4151 = vmatmul.mubr.f32.gmra.mxu0 %v3879
        %v4152 = vpop.f32.mrf.mxu0
        %v4153 = vadd.f32 %v3914, %v4152
        %v4154 = vpop.f32.mrf.mxu0
        %4155 = vmatprep.mubr.f32.mxu0 %v3977
        %4156 = vmatmul.mubr.f32.gmra.mxu0 %v3881
        %v4157 = vpop.f32.mrf.mxu0
        %v4158 = vadd.f32 %v3914, %v4157
        %v4159 = vpop.f32.mrf.mxu0
        %4160 = vmatprep.mubr.f32.mxu0 %v3980
        %4161 = vmatmul.mubr.f32.gmra.mxu0 %v3883
        %v4162 = vpop.f32.mrf.mxu0
        %v4163 = vadd.f32 %v3914, %v4162
        %v4164 = vpop.f32.mrf.mxu0
        %4165 = vmatprep.mubr.f32.mxu0 %v3983
        %4166 = vmatmul.mubr.f32.gmra.mxu0 %v3885
        %v4167 = vpop.f32.mrf.mxu0
        %v4168 = vadd.f32 %v3914, %v4167
        %v4169 = vpop.f32.mrf.mxu0
        %4170 = vmatprep.mubr.f32.mxu0 %v3986
        %4171 = vmatmul.mubr.f32.gmra.mxu0 %v3887
        %v4172 = vpop.f32.mrf.mxu0
        %v4173 = vadd.f32 %v3914, %v4172
        %v4174 = vpop.f32.mrf.mxu0
        %4175 = vmatprep.mubr.f32.mxu0 %v3989
        %4176 = vmatmul.mubr.f32.gmra.mxu0 %v3889
        %v4177 = vpop.f32.mrf.mxu0
        %v4178 = vadd.f32 %v3914, %v4177
        %v4179 = vpop.f32.mrf.mxu0
        %4180 = vdwg.mxu0
        %vm4181 = vcmask 261120
        %4182 = vst.msk [vmem:[#allocation5] sm:$0xff] %vm4181, %v4058
        %4183 = vst.msk [vmem:[#allocation5 + $0x8] sm:$0xff] %vm4181, %v4063
        %4184 = vst.msk [vmem:[#allocation5 + $0x10] sm:$0xff] %vm4181, %v4068
        %4185 = vst.msk [vmem:[#allocation5 + $0x18] sm:$0xff] %vm4181, %v4073
        %4186 = vst.msk [vmem:[#allocation5 + $0x20] sm:$0xff] %vm4181, %v4078
        %4187 = vst.msk [vmem:[#allocation5 + $0x28] sm:$0xff] %vm4181, %v4083
        %4188 = vst.msk [vmem:[#allocation5 + $0x30] sm:$0xff] %vm4181, %v4088
        %4189 = vst.msk [vmem:[#allocation5 + $0x38] sm:$0xff] %vm4181, %v4093
        %4190 = vst.msk [vmem:[#allocation5 + $0x40] sm:$0xff] %vm4181, %v4098
        %4191 = vst.msk [vmem:[#allocation5 + $0x48] sm:$0xff] %vm4181, %v4103
        %4192 = vst.msk [vmem:[#allocation5 + $0x50] sm:$0xff] %vm4181, %v4108
        %4193 = vst.msk [vmem:[#allocation5 + $0x58] sm:$0xff] %vm4181, %v4113
        %4194 = vst.msk [vmem:[#allocation5 + $0x60] sm:$0xff] %vm4181, %v4118
        %4195 = vst.msk [vmem:[#allocation5 + $0x68] sm:$0xff] %vm4181, %v4123
        %4196 = vst.msk [vmem:[#allocation5 + $0x70] sm:$0xff] %vm4181, %v4128
        %4197 = vst.msk [vmem:[#allocation5 + $0x78] sm:$0xff] %vm4181, %v4133
        %4198 = vst.msk [vmem:[#allocation5 + $0x80] sm:$0xff] %vm4181, %v4138
        %4199 = vst.msk [vmem:[#allocation5 + $0x88] sm:$0xff] %vm4181, %v4143
        %4200 = vst.msk [vmem:[#allocation5 + $0x90] sm:$0xff] %vm4181, %v4148
        %4201 = vst.msk [vmem:[#allocation5 + $0x98] sm:$0xff] %vm4181, %v4153
        %4202 = vst.msk [vmem:[#allocation5 + $0xa0] sm:$0xff] %vm4181, %v4158
        %4203 = vst.msk [vmem:[#allocation5 + $0xa8] sm:$0xff] %vm4181, %v4163
        %4204 = vst.msk [vmem:[#allocation5 + $0xb0] sm:$0xff] %vm4181, %v4168
        %4205 = vst.msk [vmem:[#allocation5 + $0xb8] sm:$0xff] %vm4181, %v4173
        %vm4206 = vcmask 253952
        %4207 = vst.msk [vmem:[#allocation5 + $0xc0] sm:$0x1] %vm4206, %v4178
        %v4208 = vld [vmem:[#allocation5] sm:$0xff]
        %v4209 = vld [vmem:[#allocation5 + $0x8] sm:$0xff]
        %v4210 = vld [vmem:[#allocation5 + $0x10] sm:$0xff]
        %v4211 = vld [vmem:[#allocation5 + $0x18] sm:$0xff]
        %v4212 = vld [vmem:[#allocation5 + $0x20] sm:$0xff]
        %v4213 = vld [vmem:[#allocation5 + $0x28] sm:$0xff]
        %v4214 = vld [vmem:[#allocation5 + $0x30] sm:$0xff]
        %v4215 = vld [vmem:[#allocation5 + $0x38] sm:$0xff]
        %v4216 = vld [vmem:[#allocation5 + $0x40] sm:$0xff]
        %v4217 = vld [vmem:[#allocation5 + $0x48] sm:$0xff]
        %v4218 = vld [vmem:[#allocation5 + $0x50] sm:$0xff]
        %v4219 = vld [vmem:[#allocation5 + $0x58] sm:$0xff]
        %v4220 = vld [vmem:[#allocation5 + $0x60] sm:$0xff]
        %v4221 = vld [vmem:[#allocation5 + $0x68] sm:$0xff]
        %v4222 = vld [vmem:[#allocation5 + $0x70] sm:$0x7f]
        %v4223 = vld [vmem:[#allocation5 + $0x1] sm:$0xff]
        %v4224 = vld [vmem:[#allocation5 + $0x9] sm:$0xff]
        %v4225 = vld [vmem:[#allocation5 + $0x11] sm:$0xff]
        %v4226 = vld [vmem:[#allocation5 + $0x19] sm:$0xff]
        %v4227 = vld [vmem:[#allocation5 + $0x21] sm:$0xff]
        %v4228 = vld [vmem:[#allocation5 + $0x29] sm:$0xff]
        %v4229 = vld [vmem:[#allocation5 + $0x31] sm:$0xff]
        %v4230 = vld [vmem:[#allocation5 + $0x39] sm:$0xff]
        %v4231 = vld [vmem:[#allocation5 + $0x41] sm:$0xff]
        %v4232 = vld [vmem:[#allocation5 + $0x49] sm:$0xff]
        %v4233 = vld [vmem:[#allocation5 + $0x51] sm:$0xff]
        %v4234 = vld [vmem:[#allocation5 + $0x59] sm:$0xff]
        %v4235 = vld [vmem:[#allocation5 + $0x61] sm:$0xff]
        %v4236 = vld [vmem:[#allocation5 + $0x69] sm:$0xff]
        %v4237 = vld [vmem:[#allocation5 + $0x71] sm:$0x7f]
        %v4238 = vmax.f32 %v4208, %v4223
        %v4239 = vmax.f32 %v4209, %v4224
        %v4240 = vmax.f32 %v4210, %v4225
        %v4241 = vmax.f32 %v4211, %v4226
        %v4242 = vmax.f32 %v4212, %v4227
        %v4243 = vmax.f32 %v4213, %v4228
        %v4244 = vmax.f32 %v4214, %v4229
        %v4245 = vmax.f32 %v4215, %v4230
        %v4246 = vmax.f32 %v4216, %v4231
        %v4247 = vmax.f32 %v4217, %v4232
        %v4248 = vmax.f32 %v4218, %v4233
        %v4249 = vmax.f32 %v4219, %v4234
        %v4250 = vmax.f32 %v4220, %v4235
        %v4251 = vmax.f32 %v4221, %v4236
        %v4252 = vmax.f32 %v4222, %v4237
        %4253 = vst.msk [vmem:[#allocation5] sm:$0xff] %vm4181, %v4238
        %4254 = vst.msk [vmem:[#allocation5 + $0x8] sm:$0xff] %vm4181, %v4239
        %4255 = vst.msk [vmem:[#allocation5 + $0x10] sm:$0xff] %vm4181, %v4240
        %4256 = vst.msk [vmem:[#allocation5 + $0x18] sm:$0xff] %vm4181, %v4241
        %4257 = vst.msk [vmem:[#allocation5 + $0x20] sm:$0xff] %vm4181, %v4242
        %4258 = vst.msk [vmem:[#allocation5 + $0x28] sm:$0xff] %vm4181, %v4243
        %4259 = vst.msk [vmem:[#allocation5 + $0x30] sm:$0xff] %vm4181, %v4244
        %4260 = vst.msk [vmem:[#allocation5 + $0x38] sm:$0xff] %vm4181, %v4245
        %4261 = vst.msk [vmem:[#allocation5 + $0x40] sm:$0xff] %vm4181, %v4246
        %4262 = vst.msk [vmem:[#allocation5 + $0x48] sm:$0xff] %vm4181, %v4247
        %4263 = vst.msk [vmem:[#allocation5 + $0x50] sm:$0xff] %vm4181, %v4248
        %4264 = vst.msk [vmem:[#allocation5 + $0x58] sm:$0xff] %vm4181, %v4249
        %4265 = vst.msk [vmem:[#allocation5 + $0x60] sm:$0xff] %vm4181, %v4250
        %4266 = vst.msk [vmem:[#allocation5 + $0x68] sm:$0xff] %vm4181, %v4251
        %vm4267 = vcmask 260096
        %4268 = vst.msk [vmem:[#allocation5 + $0x70] sm:$0x7f] %vm4267, %v4252
        %v4269 = vld [vmem:[#allocation5 + $0x78] sm:$0xff]
        %v4270 = vld [vmem:[#allocation5 + $0x80] sm:$0xff]
        %v4271 = vld [vmem:[#allocation5 + $0x88] sm:$0xff]
        %v4272 = vld [vmem:[#allocation5 + $0x90] sm:$0xff]
        %v4273 = vld [vmem:[#allocation5 + $0x98] sm:$0xff]
        %v4274 = vld [vmem:[#allocation5 + $0xa0] sm:$0xff]
        %v4275 = vld [vmem:[#allocation5 + $0xa8] sm:$0xff]
        %v4276 = vld [vmem:[#allocation5 + $0xb0] sm:$0xff]
        %v4277 = vld [vmem:[#allocation5 + $0xb8] sm:$0xff]
        %v4278 = vld [vmem:[#allocation5 + $0x79] sm:$0xff]
        %v4279 = vld [vmem:[#allocation5 + $0x81] sm:$0xff]
        %v4280 = vld [vmem:[#allocation5 + $0x89] sm:$0xff]
        %v4281 = vld [vmem:[#allocation5 + $0x91] sm:$0xff]
        %v4282 = vld [vmem:[#allocation5 + $0x99] sm:$0xff]
        %v4283 = vld [vmem:[#allocation5 + $0xa1] sm:$0xff]
        %v4284 = vld [vmem:[#allocation5 + $0xa9] sm:$0xff]
        %v4285 = vld [vmem:[#allocation5 + $0xb1] sm:$0xff]
        %v4286 = vld [vmem:[#allocation5 + $0xb9] sm:$0xff]
        %v4287 = vmax.f32 %v4269, %v4278
        %v4288 = vmax.f32 %v4270, %v4279
        %v4289 = vmax.f32 %v4271, %v4280
        %v4290 = vmax.f32 %v4272, %v4281
        %v4291 = vmax.f32 %v4273, %v4282
        %v4292 = vmax.f32 %v4274, %v4283
        %v4293 = vmax.f32 %v4275, %v4284
        %v4294 = vmax.f32 %v4276, %v4285
        %v4295 = vmax.f32 %v4277, %v4286
        %4296 = vst.msk [vmem:[#allocation5 + $0x78] sm:$0xff] %vm4181, %v4287
        %4297 = vst.msk [vmem:[#allocation5 + $0x80] sm:$0xff] %vm4181, %v4288
        %4298 = vst.msk [vmem:[#allocation5 + $0x88] sm:$0xff] %vm4181, %v4289
        %4299 = vst.msk [vmem:[#allocation5 + $0x90] sm:$0xff] %vm4181, %v4290
        %4300 = vst.msk [vmem:[#allocation5 + $0x98] sm:$0xff] %vm4181, %v4291
        %4301 = vst.msk [vmem:[#allocation5 + $0xa0] sm:$0xff] %vm4181, %v4292
        %4302 = vst.msk [vmem:[#allocation5 + $0xa8] sm:$0xff] %vm4181, %v4293
        %4303 = vst.msk [vmem:[#allocation5 + $0xb0] sm:$0xff] %vm4181, %v4294
        %4304 = vst.msk [vmem:[#allocation5 + $0xb8] sm:$0xff] %vm4181, %v4295
        %v4305 = vld [vmem:[#allocation5] ss:$2 sm:$0x3f]
        %s4306 = scalar_lea.vmem [#allocation5], 15
        %v4307 = vld [vmem:[%s4306] ss:$2 sm:$0x3f]
        %v4308 = vmax.f32 %v4305, %v4307
        %vm4309 = vcmask 259072
        %4310 = vst.msk [vmem:[#allocation6] sm:$0x3f] %vm4309, %v4308
        %s4311 = scalar_lea.vmem [#allocation5], 30
        %v4312 = vld [vmem:[%s4311] ss:$2 sm:$0x3f]
        %s4313 = scalar_lea.vmem [#allocation5], 45
        %v4314 = vld [vmem:[%s4313] ss:$2 sm:$0x3f]
        %v4315 = vmax.f32 %v4312, %v4314
        %4316 = vst.msk [vmem:[#allocation6 + $0x6] sm:$0x3f] %vm4309, %v4315
        %s4317 = scalar_lea.vmem [#allocation5], 60
        %v4318 = vld [vmem:[%s4317] ss:$2 sm:$0x3f]
        %s4319 = scalar_lea.vmem [#allocation5], 75
        %v4320 = vld [vmem:[%s4319] ss:$2 sm:$0x3f]
        %v4321 = vmax.f32 %v4318, %v4320
        %4322 = vst.msk [vmem:[#allocation6 + $0xc] sm:$0x3f] %vm4309, %v4321
        %s4323 = scalar_lea.vmem [#allocation5], 90
        %v4324 = vld [vmem:[%s4323] ss:$2 sm:$0x3f]
        %s4325 = scalar_lea.vmem [#allocation5], 105
        %v4326 = vld [vmem:[%s4325] ss:$2 sm:$0x3f]
        %v4327 = vmax.f32 %v4324, %v4326
        %4328 = vst.msk [vmem:[#allocation6 + $0x12] sm:$0x3f] %vm4309, %v4327
        %s4329 = scalar_lea.vmem [#allocation5], 120
        %v4330 = vld [vmem:[%s4329] ss:$2 sm:$0x3f]
        %s4331 = scalar_lea.vmem [#allocation5], 135
        %v4332 = vld [vmem:[%s4331] ss:$2 sm:$0x3f]
        %v4333 = vmax.f32 %v4330, %v4332
        %4334 = vst.msk [vmem:[#allocation6 + $0x18] sm:$0x3f] %vm4309, %v4333
        %s4335 = scalar_lea.vmem [#allocation5], 150
        %v4336 = vld [vmem:[%s4335] ss:$2 sm:$0x3f]
        %s4337 = scalar_lea.vmem [#allocation5], 165
        %v4338 = vld [vmem:[%s4337] ss:$2 sm:$0x3f]
        %v4339 = vmax.f32 %v4336, %v4338
        %4340 = vst.msk [vmem:[#allocation6 + $0x1e] sm:$0x3f] %vm4309, %v4339
        %v4341 = vld [vmem:[#allocation6] sm:$0xff]
        %v4342 = vld [vmem:[#allocation6 + $0x8] sm:$0xff]
        %v4343 = vld [vmem:[#allocation6 + $0x10] sm:$0x3f]
        %4344 = vst.msk [vmem:[#allocation7] sm:$0xff] %vm4181, %v4341
        %4345 = vst.msk [vmem:[#allocation7 + $0x18] sm:$0xff] %vm4181, %v4342
        %4346 = vst.msk [vmem:[#allocation7 + $0x30] sm:$0x3f] %vm4309, %v4343
        %v4347 = vld [vmem:[#allocation6 + $0x1] sm:$0xff]
        %v4348 = vld [vmem:[#allocation6 + $0x9] sm:$0xff]
        %v4349 = vld [vmem:[#allocation6 + $0x11] sm:$0x3f]
        %4353 = vrot.lane.b32.xlu0 %v4347, 32
        %v4354 = vpop.permute.xlu0 %4353
        %4355 = vrot.lane.b32.xlu0 %v4348, 32
        %v4356 = vpop.permute.xlu0 %4355
        %4357 = vrot.lane.b32.xlu0 %v4349, 32
        %v4358 = vpop.permute.xlu0 %4357
        %vm4362 = vcmask 523520
        %4363 = vst.msk [vmem:[#allocation7] sm:$0xff] %vm4362, %v4354
        %4364 = vst.msk [vmem:[#allocation7 + $0x18] sm:$0xff] %vm4362, %v4356
        %vm4365 = vcmask 521472
        %4366 = vst.msk [vmem:[#allocation7 + $0x30] sm:$0x3f] %vm4365, %v4358
        %v4367 = vld [vmem:[#allocation6 + $0x2] sm:$0xff]
        %v4368 = vld [vmem:[#allocation6 + $0xa] sm:$0xff]
        %v4369 = vld [vmem:[#allocation6 + $0x12] sm:$0x3f]
        %4373 = vrot.lane.b32.xlu0 %v4367, 64
        %v4374 = vpop.permute.xlu0 %4373
        %4375 = vrot.lane.b32.xlu0 %v4368, 64
        %v4376 = vpop.permute.xlu0 %4375
        %4377 = vrot.lane.b32.xlu0 %v4369, 64
        %v4378 = vpop.permute.xlu0 %4377
        %vm4382 = vcmask 785920
        %4383 = vst.msk [vmem:[#allocation7] sm:$0xff] %vm4382, %v4374
        %4384 = vst.msk [vmem:[#allocation7 + $0x18] sm:$0xff] %vm4382, %v4376
        %vm4385 = vcmask 783872
        %4386 = vst.msk [vmem:[#allocation7 + $0x30] sm:$0x3f] %vm4385, %v4378
        %v4387 = vld [vmem:[#allocation6 + $0x6] sm:$0xff]
        %v4388 = vld [vmem:[#allocation6 + $0xe] sm:$0xff]
        %v4389 = vld [vmem:[#allocation6 + $0x16] sm:$0x3f]
        %4393 = vrot.lane.b32.xlu0 %v4387, 96
        %v4394 = vpop.permute.xlu0 %4393
        %4395 = vrot.lane.b32.xlu0 %v4388, 96
        %v4396 = vpop.permute.xlu0 %4395
        %4397 = vrot.lane.b32.xlu0 %v4389, 96
        %v4398 = vpop.permute.xlu0 %4397
        %vm4402 = vcmask 1048320
        %4403 = vst.msk [vmem:[#allocation7] sm:$0xff] %vm4402, %v4394
        %4404 = vst.msk [vmem:[#allocation7 + $0x18] sm:$0xff] %vm4402, %v4396
        %vm4405 = vcmask 1046272
        %4406 = vst.msk [vmem:[#allocation7 + $0x30] sm:$0x3f] %vm4405, %v4398
        %v4407 = vld [vmem:[#allocation6 + $0x7] sm:$0xff]
        %v4408 = vld [vmem:[#allocation6 + $0xf] sm:$0xff]
        %v4409 = vld [vmem:[#allocation6 + $0x17] sm:$0x3f]
        %4410 = vst.msk [vmem:[#allocation7 + $0x8] sm:$0xff] %vm4181, %v4407
        %4411 = vst.msk [vmem:[#allocation7 + $0x20] sm:$0xff] %vm4181, %v4408
        %4412 = vst.msk [vmem:[#allocation7 + $0x38] sm:$0x3f] %vm4309, %v4409
        %v4413 = vld [vmem:[#allocation6 + $0x8] sm:$0xff]
        %v4414 = vld [vmem:[#allocation6 + $0x10] sm:$0xff]
        %v4415 = vld [vmem:[#allocation6 + $0x18] sm:$0x3f]
        %4419 = vrot.lane.b32.xlu0 %v4413, 32
        %v4420 = vpop.permute.xlu0 %4419
        %4421 = vrot.lane.b32.xlu0 %v4414, 32
        %v4422 = vpop.permute.xlu0 %4421
        %4423 = vrot.lane.b32.xlu0 %v4415, 32
        %v4424 = vpop.permute.xlu0 %4423
        %4428 = vst.msk [vmem:[#allocation7 + $0x8] sm:$0xff] %vm4362, %v4420
        %4429 = vst.msk [vmem:[#allocation7 + $0x20] sm:$0xff] %vm4362, %v4422
        %4430 = vst.msk [vmem:[#allocation7 + $0x38] sm:$0x3f] %vm4365, %v4424
        %v4431 = vld [vmem:[#allocation6 + $0xc] sm:$0xff]
        %v4432 = vld [vmem:[#allocation6 + $0x14] sm:$0xff]
        %v4433 = vld [vmem:[#allocation6 + $0x1c] sm:$0x3f]
        %4437 = vrot.lane.b32.xlu0 %v4431, 64
        %v4438 = vpop.permute.xlu0 %4437
        %4439 = vrot.lane.b32.xlu0 %v4432, 64
        %v4440 = vpop.permute.xlu0 %4439
        %4441 = vrot.lane.b32.xlu0 %v4433, 64
        %v4442 = vpop.permute.xlu0 %4441
        %4446 = vst.msk [vmem:[#allocation7 + $0x8] sm:$0xff] %vm4382, %v4438
        %4447 = vst.msk [vmem:[#allocation7 + $0x20] sm:$0xff] %vm4382, %v4440
        %4448 = vst.msk [vmem:[#allocation7 + $0x38] sm:$0x3f] %vm4385, %v4442
        %v4449 = vld [vmem:[#allocation6 + $0xd] sm:$0xff]
        %v4450 = vld [vmem:[#allocation6 + $0x15] sm:$0xff]
        %v4451 = vld [vmem:[#allocation6 + $0x1d] sm:$0x3f]
        %4455 = vrot.lane.b32.xlu0 %v4449, 96
        %v4456 = vpop.permute.xlu0 %4455
        %4457 = vrot.lane.b32.xlu0 %v4450, 96
        %v4458 = vpop.permute.xlu0 %4457
        %4459 = vrot.lane.b32.xlu0 %v4451, 96
        %v4460 = vpop.permute.xlu0 %4459
        %4464 = vst.msk [vmem:[#allocation7 + $0x8] sm:$0xff] %vm4402, %v4456
        %4465 = vst.msk [vmem:[#allocation7 + $0x20] sm:$0xff] %vm4402, %v4458
        %4466 = vst.msk [vmem:[#allocation7 + $0x38] sm:$0x3f] %vm4405, %v4460
        %v4467 = vld [vmem:[#allocation6 + $0xe] sm:$0xff]
        %v4468 = vld [vmem:[#allocation6 + $0x16] sm:$0xff]
        %v4469 = vld [vmem:[#allocation6 + $0x1e] sm:$0x3f]
        %4470 = vst.msk [vmem:[#allocation7 + $0x10] sm:$0xff] %vm4181, %v4467
        %4471 = vst.msk [vmem:[#allocation7 + $0x28] sm:$0xff] %vm4181, %v4468
        %4472 = vst.msk [vmem:[#allocation7 + $0x40] sm:$0x3f] %vm4309, %v4469
        %v4473 = vld [vmem:[#allocation7] sm:$0xff]
        %v4474 = vld [vmem:[#allocation7 + $0x8] sm:$0xff]
        %v4475 = vld [vmem:[#allocation7 + $0x10] sm:$0xff]
        %v4476 = vld [vmem:[#allocation7 + $0x18] sm:$0xff]
        %v4477 = vld [vmem:[#allocation7 + $0x20] sm:$0xff]
        %v4478 = vld [vmem:[#allocation7 + $0x28] sm:$0xff]
        %v4479 = vld [vmem:[#allocation7 + $0x30] sm:$0x3f]
        %v4480 = vld [vmem:[#allocation7 + $0x38] sm:$0x3f]
        %v4481 = vld [vmem:[#allocation7 + $0x40] sm:$0x3f]
        %v4482 = vld [vmem:[%s5] sm:$0xff]
        %v4483 = vld [vmem:[%s5 + $0x8] sm:$0xff]
        %v4484 = vld [vmem:[%s5 + $0x10] sm:$0xff]
        %v4485 = vld [vmem:[%s5 + $0x18] sm:$0xff]
        %v4486 = vld [vmem:[%s5 + $0x20] sm:$0xff]
        %v4487 = vld [vmem:[%s5 + $0x28] sm:$0xff]
        %v4488 = vld [vmem:[%s5 + $0x30] sm:$0xff]
        %v4489 = vld [vmem:[%s5 + $0x38] sm:$0xff]
        %v4490 = vld [vmem:[%s5 + $0x40] sm:$0xff]
        %v4491 = vld [vmem:[%s5 + $0x48] sm:$0xff]
        %v4492 = vld [vmem:[%s5 + $0x50] sm:$0xff]
        %v4493 = vld [vmem:[%s5 + $0x58] sm:$0xff]
        %v4494 = vld [vmem:[%s5 + $0x60] sm:$0xff]
        %v4495 = vld [vmem:[%s5 + $0x68] sm:$0xff]
        %v4496 = vld [vmem:[%s5 + $0x70] sm:$0xff]
        %v4497 = vld [vmem:[%s5 + $0x78] sm:$0xff]
        %v4498 = vld [vmem:[%s5 + $0x80] sm:$0xff]
        %v4499 = vld [vmem:[%s5 + $0x88] sm:$0xff]
        %v4500 = vld [vmem:[%s5 + $0x90] sm:$0xff]
        %v4501 = vld [vmem:[%s5 + $0x98] sm:$0xff]
        %v4502 = vld [vmem:[%s5 + $0xa0] sm:$0xff]
        %v4503 = vld [vmem:[%s5 + $0xa8] sm:$0xff]
        %v4504 = vld [vmem:[%s5 + $0xb0] sm:$0xff]
        %v4505 = vld [vmem:[%s5 + $0xb8] sm:$0xff]
        %v4506 = vld [vmem:[%s5 + $0xc0] sm:$0xff]
        %v4507 = vld [vmem:[%s5 + $0xc8] sm:$0xff]
        %v4508 = vld [vmem:[%s5 + $0xd0] sm:$0xff]
        %v4509 = vld [vmem:[%s5 + $0xd8] sm:$0xff]
        %v4510 = vld [vmem:[%s5 + $0xe0] sm:$0xff]
        %v4511 = vld [vmem:[%s5 + $0xe8] sm:$0xff]
        %v4512 = vld [vmem:[%s5 + $0xf0] sm:$0xff]
        %v4513 = vld [vmem:[%s5 + $0xf8] sm:$0xff]
        %v4514 = vld [vmem:[%s5 + $0x100] sm:$0xff]
        %v4515 = vld [vmem:[%s5 + $0x108] sm:$0xff]
        %v4516 = vld [vmem:[%s5 + $0x110] sm:$0xff]
        %v4517 = vld [vmem:[%s5 + $0x118] sm:$0xff]
        %v4518 = vld [vmem:[%s6] sm:$0x1]
        %v4520 = vlaneseq
        %v4521 = vshrl.u32 %v4520, 7
        %v4522 = vsub.s32 0, %v4521
        %v4523 = vrot.slane %v4518, %v4522
        %v4526 = vsel %vm4181, %v4475, 0
        %v4529 = vsel %vm4181, %v4478, 0
        %v4532 = vsel %vm4181, %v4481, 0
        %4534 = vmatprep.subr.mxu0 0.0
        %4535 = vmatpush1.msra.mxu0 %v4497
        %4536 = vmatprep.subr.mxu0 0.0
        %4537 = vmatpush1.msra.mxu0 %v4496
        %4538 = vmatprep.subr.mxu0 0.0
        %4539 = vmatpush1.msra.mxu0 %v4495
        %4540 = vmatprep.subr.mxu0 0.0
        %4541 = vmatpush1.msra.mxu0 %v4494
        %4542 = vmatprep.subr.mxu0 0.0
        %4543 = vmatpush1.msra.mxu0 %v4493
        %4544 = vmatprep.subr.mxu0 0.0
        %4545 = vmatpush1.msra.mxu0 %v4492
        %4546 = vmatprep.subr.mxu0 0.0
        %4547 = vmatpush1.msra.mxu0 %v4491
        %4548 = vmatprep.subr.mxu0 0.0
        %4549 = vmatpush1.msra.mxu0 %v4490
        %4550 = vmatprep.subr.mxu0 0.0
        %4551 = vmatpush1.msra.mxu0 %v4489
        %4552 = vmatprep.subr.mxu0 0.0
        %4553 = vmatpush1.msra.mxu0 %v4488
        %4554 = vmatprep.subr.mxu0 0.0
        %4555 = vmatpush1.msra.mxu0 %v4487
        %4556 = vmatprep.subr.mxu0 0.0
        %4557 = vmatpush1.msra.mxu0 %v4486
        %4558 = vmatprep.subr.mxu0 0.0
        %4559 = vmatpush1.msra.mxu0 %v4485
        %4560 = vmatprep.subr.mxu0 0.0
        %4561 = vmatpush1.msra.mxu0 %v4484
        %4562 = vmatprep.subr.mxu0 0.0
        %4563 = vmatpush1.msra.mxu0 %v4483
        %4564 = vmatprep.subr.mxu0 0.0
        %4565 = vmatpush1.msra.mxu0 %v4482
        %4566 = vmatprep.subr.mxu0 0.0
        %4567 = vmatpush2.msra.mxu0 %v4513
        %4568 = vmatprep.subr.mxu0 0.0
        %4569 = vmatpush2.msra.mxu0 %v4512
        %4570 = vmatprep.subr.mxu0 0.0
        %4571 = vmatpush2.msra.mxu0 %v4511
        %4572 = vmatprep.subr.mxu0 0.0
        %4573 = vmatpush2.msra.mxu0 %v4510
        %4574 = vmatprep.subr.mxu0 0.0
        %4575 = vmatpush2.msra.mxu0 %v4509
        %4576 = vmatprep.subr.mxu0 0.0
        %4577 = vmatpush2.msra.mxu0 %v4508
        %4578 = vmatprep.subr.mxu0 0.0
        %4579 = vmatpush2.msra.mxu0 %v4507
        %4580 = vmatprep.subr.mxu0 0.0
        %4581 = vmatpush2.msra.mxu0 %v4506
        %4582 = vmatprep.subr.mxu0 0.0
        %4583 = vmatpush2.msra.mxu0 %v4505
        %4584 = vmatprep.subr.mxu0 0.0
        %4585 = vmatpush2.msra.mxu0 %v4504
        %4586 = vmatprep.subr.mxu0 0.0
        %4587 = vmatpush2.msra.mxu0 %v4503
        %4588 = vmatprep.subr.mxu0 0.0
        %4589 = vmatpush2.msra.mxu0 %v4502
        %4590 = vmatprep.subr.mxu0 0.0
        %4591 = vmatpush2.msra.mxu0 %v4501
        %4592 = vmatprep.subr.mxu0 0.0
        %4593 = vmatpush2.msra.mxu0 %v4500
        %4594 = vmatprep.subr.mxu0 0.0
        %4595 = vmatpush2.msra.mxu0 %v4499
        %4596 = vmatprep.subr.mxu0 0.0
        %4597 = vmatpush2.msra.mxu0 %v4498
        %4598 = vmatprep.mubr.f32.mxu0 %v4474
        %4599 = vmatmul.mubr.f32.gmra.mxu0 %v4473
        %v4600 = vpop.f32.mrf.mxu0
        %v4601 = vadd.f32 %v4523, %v4600
        %v4602 = vpop.f32.mrf.mxu0
        %4603 = vmatprep.mubr.f32.mxu0 %v4477
        %4604 = vmatmul.mubr.f32.gmra.mxu0 %v4476
        %v4605 = vpop.f32.mrf.mxu0
        %v4606 = vadd.f32 %v4523, %v4605
        %v4607 = vpop.f32.mrf.mxu0
        %4608 = vmatprep.mubr.f32.mxu0 %v4480
        %4609 = vmatmul.mubr.f32.gmra.mxu0 %v4479
        %v4610 = vpop.f32.mrf.mxu0
        %v4611 = vadd.f32 %v4523, %v4610
        %v4612 = vpop.f32.mrf.mxu0
        %4613 = vdwg.mxu0
        %4614 = vmatprep.subr.mxu0 0.0
        %4615 = vmatpush1.msra.mxu0 0.0
        %4616 = vmatprep.subr.mxu0 0.0
        %4617 = vmatpush1.msra.mxu0 0.0
        %4618 = vmatprep.subr.mxu0 0.0
        %4619 = vmatpush1.msra.mxu0 0.0
        %4620 = vmatprep.subr.mxu0 0.0
        %4621 = vmatpush1.msra.mxu0 0.0
        %4622 = vmatprep.subr.mxu0 0.0
        %4623 = vmatpush1.msra.mxu0 0.0
        %4624 = vmatprep.subr.mxu0 0.0
        %4625 = vmatpush1.msra.mxu0 0.0
        %4626 = vmatprep.subr.mxu0 0.0
        %4627 = vmatpush1.msra.mxu0 0.0
        %4628 = vmatprep.subr.mxu0 0.0
        %4629 = vmatpush1.msra.mxu0 0.0
        %4630 = vmatprep.subr.mxu0 0.0
        %4631 = vmatpush1.msra.mxu0 0.0
        %4632 = vmatprep.subr.mxu0 0.0
        %4633 = vmatpush1.msra.mxu0 0.0
        %4634 = vmatprep.subr.mxu0 0.0
        %4635 = vmatpush1.msra.mxu0 0.0
        %4636 = vmatprep.subr.mxu0 0.0
        %4637 = vmatpush1.msra.mxu0 0.0
        %4638 = vmatprep.subr.mxu0 0.0
        %4639 = vmatpush1.msra.mxu0 %v4517
        %4640 = vmatprep.subr.mxu0 0.0
        %4641 = vmatpush1.msra.mxu0 %v4516
        %4642 = vmatprep.subr.mxu0 0.0
        %4643 = vmatpush1.msra.mxu0 %v4515
        %4644 = vmatprep.subr.mxu0 0.0
        %4645 = vmatpush1.msra.mxu0 %v4514
        %4646 = vmatprep.subr.mxu0 0.0
        %4647 = vmatpush2.msra.mxu0 0.0
        %4648 = vmatprep.subr.mxu0 0.0
        %4649 = vmatpush2.msra.mxu0 0.0
        %4650 = vmatprep.subr.mxu0 0.0
        %4651 = vmatpush2.msra.mxu0 0.0
        %4652 = vmatprep.subr.mxu0 0.0
        %4653 = vmatpush2.msra.mxu0 0.0
        %4654 = vmatprep.subr.mxu0 0.0
        %4655 = vmatpush2.msra.mxu0 0.0
        %4656 = vmatprep.subr.mxu0 0.0
        %4657 = vmatpush2.msra.mxu0 0.0
        %4658 = vmatprep.subr.mxu0 0.0
        %4659 = vmatpush2.msra.mxu0 0.0
        %4660 = vmatprep.subr.mxu0 0.0
        %4661 = vmatpush2.msra.mxu0 0.0
        %4662 = vmatprep.subr.mxu0 0.0
        %4663 = vmatpush2.msra.mxu0 0.0
        %4664 = vmatprep.subr.mxu0 0.0
        %4665 = vmatpush2.msra.mxu0 0.0
        %4666 = vmatprep.subr.mxu0 0.0
        %4667 = vmatpush2.msra.mxu0 0.0
        %4668 = vmatprep.subr.mxu0 0.0
        %4669 = vmatpush2.msra.mxu0 0.0
        %4670 = vmatprep.subr.mxu0 0.0
        %4671 = vmatpush2.msra.mxu0 0.0
        %4672 = vmatprep.subr.mxu0 0.0
        %4673 = vmatpush2.msra.mxu0 0.0
        %4674 = vmatprep.subr.mxu0 0.0
        %4675 = vmatpush2.msra.mxu0 0.0
        %4676 = vmatprep.subr.mxu0 0.0
        %4677 = vmatpush2.msra.mxu0 0.0
        %4678 = vmatprep.mubr.f32.mxu0 0.0
        %4679 = vmatmul.mubr.f32.gmra.mxu0 %v4526
        %v4680 = vpop.f32.mrf.mxu0
        %v4681 = vadd.f32 %v4601, %v4680
        %v4682 = vpop.f32.mrf.mxu0
        %4683 = vmatprep.mubr.f32.mxu0 0.0
        %4684 = vmatmul.mubr.f32.gmra.mxu0 %v4529
        %v4685 = vpop.f32.mrf.mxu0
        %v4686 = vadd.f32 %v4606, %v4685
        %v4687 = vpop.f32.mrf.mxu0
        %4688 = vmatprep.mubr.f32.mxu0 0.0
        %4689 = vmatmul.mubr.f32.gmra.mxu0 %v4532
        %v4690 = vpop.f32.mrf.mxu0
        %v4691 = vadd.f32 %v4611, %v4690
        %v4692 = vpop.f32.mrf.mxu0
        %4693 = vdwg.mxu0
        %vm4694 = vcmask 523264
        %4695 = vst.msk [vmem:[#allocation8] sm:$0xff] %vm4694, %v4681
        %4696 = vst.msk [vmem:[#allocation8 + $0x8] sm:$0xff] %vm4694, %v4686
        %vm4697 = vcmask 521216
        %4698 = vst.msk [vmem:[#allocation8 + $0x10] sm:$0x3f] %vm4697, %v4691
        %v4699 = vld [vmem:[#allocation8] sm:$0xff]
        %v4700 = vld [vmem:[#allocation8 + $0x8] sm:$0xff]
        %v4701 = vld [vmem:[#allocation8 + $0x10] sm:$0x1f]
        %v4702 = vld [vmem:[#allocation8 + $0x1] sm:$0xff]
        %v4703 = vld [vmem:[#allocation8 + $0x9] sm:$0xff]
        %v4704 = vld [vmem:[#allocation8 + $0x11] sm:$0x1f]
        %v4705 = vmax.f32 %v4699, %v4702
        %v4706 = vmax.f32 %v4700, %v4703
        %v4707 = vmax.f32 %v4701, %v4704
        %4708 = vst.msk [vmem:[#allocation8] sm:$0xff] %vm4694, %v4705
        %4709 = vst.msk [vmem:[#allocation8 + $0x8] sm:$0xff] %vm4694, %v4706
        %vm4710 = vcmask 520192
        %4711 = vst.msk [vmem:[#allocation8 + $0x10] sm:$0x1f] %vm4710, %v4707
        %v4712 = vld [vmem:[#allocation8] ss:$2 sm:$0x3]
        %s4713 = scalar_lea.vmem [#allocation8], 6
        %v4714 = vld [vmem:[%s4713] ss:$2 sm:$0x3]
        %v4715 = vmax.f32 %v4712, %v4714
        %vm4716 = vcmask 517120
        %4717 = vst.msk [vmem:[%s271] sm:$0x3] %vm4716, %v4715
        %s4718 = scalar_lea.vmem [#allocation8], 12
        %v4719 = vld [vmem:[%s4718] ss:$2 sm:$0x3]
        %s4720 = scalar_lea.vmem [#allocation8], 18
        %v4721 = vld [vmem:[%s4720] ss:$2 sm:$0x3]
        %v4722 = vmax.f32 %v4719, %v4721
        %4723 = vst.msk [vmem:[%s271 + $0x2] sm:$0x3] %vm4716, %v4722
        %s4724 = sand.u32 %s181, 1
        %s4725 = scalar_lea.sflag [#allocation10], %s4724
        %s4726 = sand.u32 %s181, 1
        %s4727 = smul.addr %s4726, 4
        %s4728 = scalar_lea.vmem [#allocation9], %s4727
        // Predicated region
        $region49: #{rover_cnn_forward.1} parent=47 // pred_check
          %p4729 = pneg %p191
        $region50: #{rover_cnn_forward.1} parent=47 // pred_check_branch
          %4731 = sbr.rel (%p4729) target = $region52
        $region51: #{rover_cnn_forward.1} parent=47 // pred_region
          %s4733 = ssub.s32 64, 64
          %4734 = vsyncadd %s4725, %s4733
          %s4735 = smul.addr %s21, 64
          %s4736 = scalar_lea.hbm %s7, %s4735
          %s4738 = sshll.u32 %s4728, 4
          %s4739 = int_to_ptr.vmem [resolvable:$true] %s4738
          %4741 = dma.vmem_to_hbm [thread:$0]  %s4739, 64, %s4736, %s4725
        $region52: #{rover_cnn_forward.1} parent=47 // pred_fallthru
          _
      $region48: #{rover_cnn_forward.1} parent=5 // pred_fallthru
        _
      %p4742 = scmp.le.s32.totalorder 2, %s16
      // Predicated region
      $region53: #{rover_cnn_forward.1} parent=5 // pred_check
        %p4743 = pneg %p4742
      $region54: #{rover_cnn_forward.1} parent=5 // pred_check_branch
        %4745 = sbr.rel (%p4743) target = $region56
      $region55: #{rover_cnn_forward.1} parent=5 // pred_region
        %s4746 = ssub.s32 %s16, 2
        // Predicated region
        $region57: #{rover_cnn_forward.1} parent=55 // pred_check
          %p4747 = pneg %p197
        $region58: #{rover_cnn_forward.1} parent=55 // pred_check_branch
          %4749 = sbr.rel (%p4747) target = $region60
        $region59: #{rover_cnn_forward.1} parent=55 // pred_region
          %s4750 = sand.u32 %s182, 1
          %s4751 = scalar_lea.sflag [#allocation10], %s4750
          %s4752 = sand.u32 %s182, 1
          %s4753 = smul.addr %s4752, 4
          %s4754 = scalar_lea.vmem [#allocation9], %s4753
          %4755 = dma.done %s4751, 64
        $region60: #{rover_cnn_forward.1} parent=55 // pred_fallthru
          _
      $region56: #{rover_cnn_forward.1} parent=5 // pred_fallthru
        _
    $region6: #{rover_cnn_forward.1} parent=1 // loop_footer
      %s20 = sadd.s32 1, %s16
    $region7: #{rover_cnn_forward.1} parent=1 // loop_footer_branch
      %15 = sbr.rel target = $region3
    $region8: #{rover_cnn_forward.1} parent=1 // loop_exit
      _
    %4756 = vsyncpa [#allocation10], 1
    %s4757 = scalar_lea.sflag [#allocation10], 1
    %4758 = vsyncpa %s4757, 1

</llo_original>
